<compile_context>
chip_gen: v7x
topology: tpu7x:2x2x1
jax: 0.10.0
libtpu: 0.0.40
codegen_flags: <defaults>
</compile_context>

<pallas_src>
import jax
import jax.numpy as jnp
from jax.experimental import pallas as pl
from jax.experimental.pallas import tpu as pltpu

OUT_PAD = 128  # lane-dense padded width of the fc3 output


def dnn_kernel(x_ref,
               wihr_ref, wihz_ref, wihn_ref, bihr_ref, bihz_ref, bihn_ref,
               whhr_ref, whhz_ref, whhn_ref, bhhr_ref, bhhz_ref, bhhn_ref,
               w1_ref, b1_ref, w2_ref, b2_ref, w3_ref, b3_ref,
               out_ref):
    """GRU recurrence + 3-layer MLP head for one batch block."""
    T, B, E = x_ref.shape
    H = whhr_ref.shape[0]

    # ---- Hoisted input projection: one matmul per gate over all timesteps.
    #      (T, B, E) -> (T*B, E) is a leading-dim collapse (layout no-op).
    x_flat = x_ref[...].reshape(T * B, E)
    gx_r = jnp.dot(x_flat, wihr_ref[...],
                   preferred_element_type=jnp.float32) + bihr_ref[...]
    gx_z = jnp.dot(x_flat, wihz_ref[...],
                   preferred_element_type=jnp.float32) + bihz_ref[...]
    gx_n = jnp.dot(x_flat, wihn_ref[...],
                   preferred_element_type=jnp.float32) + bihn_ref[...]

    whh_r = whhr_ref[...]
    whh_z = whhz_ref[...]
    whh_n = whhn_ref[...]
    bhh_r = bhhr_ref[...]
    bhh_z = bhhz_ref[...]
    bhh_n = bhhn_ref[...]

    # ---- Serial recurrence, fully unrolled (T static, small).  Gate slices of
    #      gx_* use static, sublane-aligned row offsets (B is a multiple of 8).
    h = jnp.zeros((B, H), jnp.float32)
    for t in range(T):
        lo = t * B
        gh_r = jnp.dot(h, whh_r, preferred_element_type=jnp.float32) + bhh_r
        gh_z = jnp.dot(h, whh_z, preferred_element_type=jnp.float32) + bhh_z
        gh_n = jnp.dot(h, whh_n, preferred_element_type=jnp.float32) + bhh_n
        r = jax.nn.sigmoid(gx_r[lo:lo + B, :] + gh_r)
        z = jax.nn.sigmoid(gx_z[lo:lo + B, :] + gh_z)
        n = jnp.tanh(gx_n[lo:lo + B, :] + r * gh_n)
        h = (1.0 - z) * n + z * h

    # ---- MLP head; dropout layers are identity in eval mode.
    h1 = jnp.dot(h, w1_ref[...], preferred_element_type=jnp.float32) + b1_ref[...]
    h2 = jnp.dot(h1, w2_ref[...], preferred_element_type=jnp.float32) + b2_ref[...]
    # fc3 weights / bias are lane-padded to OUT_PAD -> lane-dense store.
    out_ref[...] = jnp.dot(h2, w3_ref[...],
                           preferred_element_type=jnp.float32) + b3_ref[...]


WEIGHT_ORDER = ("wih_r", "wih_z", "wih_n", "bih_r", "bih_z", "bih_n",
                "whh_r", "whh_z", "whh_n", "bhh_r", "bhh_z", "bhh_n",
                "w1", "b1", "w2", "b2", "w3", "b3")


def dnn_net_forward(x, kparams, *, batch_block=8):
    """x: (T, B, E) float32. Returns (1, B, 2), matching the PyTorch module."""
    T, B, E = x.shape
    B_pad = pl.cdiv(B, batch_block) * batch_block
    if B_pad != B:
        x = jnp.pad(x, ((0, 0), (0, B_pad - B), (0, 0)))
    n_blocks = B_pad // batch_block

    weights = [kparams[k] for k in WEIGHT_ORDER]      # all 2D arrays

    in_specs = (
        [pl.BlockSpec((T, batch_block, E), lambda b: (0, b, 0))]
        + [pl.BlockSpec(w.shape, lambda b: (0, 0)) for w in weights]
    )
    out_specs = pl.BlockSpec((batch_block, OUT_PAD), lambda b: (b, 0))

    out = pl.pallas_call(
        dnn_kernel,
        grid=(n_blocks,),
        in_specs=in_specs,
        out_specs=out_specs,
        out_shape=jax.ShapeDtypeStruct((B_pad, OUT_PAD), jnp.float32),
        compiler_params=pltpu.CompilerParams(
            dimension_semantics=("parallel",)),   # batch blocks -> 2 TCs on v7x
    )(x, *weights)

    return out[:B, :2].reshape(1, B, 2)


# ---------------------------------------------------------------------------
# Parameter construction (PyTorch layout) and conversion to kernel layout.
# ---------------------------------------------------------------------------

def init_torch_params(key, emb_size, thought_size):
    """Synthetic params in PyTorch layout (nn.GRU + nn.Linear conventions)."""
    H, E = thought_size, emb_size
    ks = jax.random.split(key, 10)

    def rnd(k, shape, scale=0.1):
        return (scale * jax.random.normal(k, shape)).astype(jnp.float32)

    return {
        "w_ih": rnd(ks[0], (3 * H, E)),   # nn.GRU weight_ih_l0, gates [r,z,n]
        "w_hh": rnd(ks[1], (3 * H, H)),   # nn.GRU weight_hh_l0
        "b_ih": rnd(ks[2], (3 * H,)),
        "b_hh": rnd(ks[3], (3 * H,)),
        "w1": rnd(ks[4], (128, H)),       # nn.Linear(thought_size, 128)
        "b1": rnd(ks[5], (128,)),
        "w2": rnd(ks[6], (64, 128)),      # nn.Linear(128, 64)
        "b2": rnd(ks[7], (64,)),
        "w3": rnd(ks[8], (2, 64)),        # nn.Linear(64, 2)
        "b3": rnd(ks[9], (2,)),
    }


def prepare_kernel_params(p):
    """Split GRU weights per-gate, transpose to (in, out), pad fc3 to 128."""
    H = p["w_hh"].shape[1]

    def gate_w(w, i):                     # (3H, X) -> (X, H) for gate i
        return jnp.transpose(w[i * H:(i + 1) * H, :])

    def gate_b(b, i):
        return b[i * H:(i + 1) * H].reshape(1, H)

    w3_t = jnp.transpose(p["w3"])                                 # (64, 2)
    w3_t = jnp.pad(w3_t, ((0, 0), (0, OUT_PAD - w3_t.shape[1])))  # (64, 128)
    b3 = jnp.pad(p["b3"], (0, OUT_PAD - p["b3"].shape[0])).reshape(1, OUT_PAD)

    return {
        "wih_r": gate_w(p["w_ih"], 0), "wih_z": gate_w(p["w_ih"], 1),
        "wih_n": gate_w(p["w_ih"], 2),
        "bih_r": gate_b(p["b_ih"], 0), "bih_z": gate_b(p["b_ih"], 1),
        "bih_n": gate_b(p["b_ih"], 2),
        "whh_r": gate_w(p["w_hh"], 0), "whh_z": gate_w(p["w_hh"], 1),
        "whh_n": gate_w(p["w_hh"], 2),
        "bhh_r": gate_b(p["b_hh"], 0), "bhh_z": gate_b(p["b_hh"], 1),
        "bhh_n": gate_b(p["b_hh"], 2),
        "w1": jnp.transpose(p["w1"]), "b1": p["b1"].reshape(1, -1),
        "w2": jnp.transpose(p["w2"]), "b2": p["b2"].reshape(1, -1),
        "w3": w3_t, "b3": b3,
    }


def reference_forward(x, p):
    """Pure-JAX reference with PyTorch nn.GRU / nn.Linear semantics."""
    T, B, E = x.shape
    H = p["w_hh"].shape[1]
    w_ih_t, w_hh_t = p["w_ih"].T, p["w_hh"].T
    h = jnp.zeros((B, H), jnp.float32)
    for t in range(T):
        gx = x[t] @ w_ih_t + p["b_ih"]
        gh = h @ w_hh_t + p["b_hh"]
        r = jax.nn.sigmoid(gx[:, :H] + gh[:, :H])
        z = jax.nn.sigmoid(gx[:, H:2 * H] + gh[:, H:2 * H])
        n = jnp.tanh(gx[:, 2 * H:] + r * gh[:, 2 * H:])
        h = (1.0 - z) * n + z * h
    h1 = h @ p["w1"].T + p["b1"]
    h2 = h1 @ p["w2"].T + p["b2"]
    out = h2 @ p["w3"].T + p["b3"]
    return out.reshape(1, B, 2)


if __name__ == "__main__":
    T, B, E, THOUGHT = 8, 2, 16, 32   # seq=8, batch=2, emb=16, thought_size=32

    key = jax.random.PRNGKey(0)
    kx, kp = jax.random.split(key)
    x = jax.random.normal(kx, (T, B, E), dtype=jnp.float32)

    torch_params = init_torch_params(kp, E, THOUGHT)
    kernel_params = prepare_kernel_params(torch_params)

    out = dnn_net_forward(x, kernel_params)
    jax.block_until_ready(out)

    ref = reference_forward(x, torch_params)
    assert out.shape == (1, B, 2)
    assert jnp.allclose(out, ref, atol=1e-4, rtol=1e-4)

    print("KERNEL_OK")
</pallas_src>

<mosaic_0001>
module attributes {stable_mosaic.version = 11 : i64} {
  func.func @dnn_kernel(%arg0: i32, %arg1: memref<8x8x16xf32, #tpu.memory_space<vmem>>, %arg2: memref<16x32xf32, #tpu.memory_space<vmem>>, %arg3: memref<16x32xf32, #tpu.memory_space<vmem>>, %arg4: memref<16x32xf32, #tpu.memory_space<vmem>>, %arg5: memref<1x32xf32, #tpu.memory_space<vmem>>, %arg6: memref<1x32xf32, #tpu.memory_space<vmem>>, %arg7: memref<1x32xf32, #tpu.memory_space<vmem>>, %arg8: memref<32x32xf32, #tpu.memory_space<vmem>>, %arg9: memref<32x32xf32, #tpu.memory_space<vmem>>, %arg10: memref<32x32xf32, #tpu.memory_space<vmem>>, %arg11: memref<1x32xf32, #tpu.memory_space<vmem>>, %arg12: memref<1x32xf32, #tpu.memory_space<vmem>>, %arg13: memref<1x32xf32, #tpu.memory_space<vmem>>, %arg14: memref<32x128xf32, #tpu.memory_space<vmem>>, %arg15: memref<1x128xf32, #tpu.memory_space<vmem>>, %arg16: memref<128x64xf32, #tpu.memory_space<vmem>>, %arg17: memref<1x64xf32, #tpu.memory_space<vmem>>, %arg18: memref<64x128xf32, #tpu.memory_space<vmem>>, %arg19: memref<1x128xf32, #tpu.memory_space<vmem>>, %arg20: memref<8x128xf32, #tpu.memory_space<vmem>>) attributes {dimension_semantics = [#tpu.dimension_semantics<parallel>], iteration_bounds = array<i64: 1>, scalar_prefetch = 0 : i64, scratch_operands = 0 : i64, tpu.core_type = #tpu.core_type<tc>, window_params = [{transform_indices = @transform_0, window_bounds = array<i64: 8, 8, 16>}, {pipeline_mode = #tpu.pipeline_mode<synchronous>, transform_indices = @transform_1, window_bounds = array<i64: 16, 32>}, {pipeline_mode = #tpu.pipeline_mode<synchronous>, transform_indices = @transform_2, window_bounds = array<i64: 16, 32>}, {pipeline_mode = #tpu.pipeline_mode<synchronous>, transform_indices = @transform_3, window_bounds = array<i64: 16, 32>}, {pipeline_mode = #tpu.pipeline_mode<synchronous>, transform_indices = @transform_4, window_bounds = array<i64: 1, 32>}, {pipeline_mode = #tpu.pipeline_mode<synchronous>, transform_indices = @transform_5, window_bounds = array<i64: 1, 32>}, {pipeline_mode = #tpu.pipeline_mode<synchronous>, transform_indices = @transform_6, window_bounds = array<i64: 1, 32>}, {pipeline_mode = #tpu.pipeline_mode<synchronous>, transform_indices = @transform_7, window_bounds = array<i64: 32, 32>}, {pipeline_mode = #tpu.pipeline_mode<synchronous>, transform_indices = @transform_8, window_bounds = array<i64: 32, 32>}, {pipeline_mode = #tpu.pipeline_mode<synchronous>, transform_indices = @transform_9, window_bounds = array<i64: 32, 32>}, {pipeline_mode = #tpu.pipeline_mode<synchronous>, transform_indices = @transform_10, window_bounds = array<i64: 1, 32>}, {pipeline_mode = #tpu.pipeline_mode<synchronous>, transform_indices = @transform_11, window_bounds = array<i64: 1, 32>}, {pipeline_mode = #tpu.pipeline_mode<synchronous>, transform_indices = @transform_12, window_bounds = array<i64: 1, 32>}, {pipeline_mode = #tpu.pipeline_mode<synchronous>, transform_indices = @transform_13, window_bounds = array<i64: 32, 128>}, {pipeline_mode = #tpu.pipeline_mode<synchronous>, transform_indices = @transform_14, window_bounds = array<i64: 1, 128>}, {pipeline_mode = #tpu.pipeline_mode<synchronous>, transform_indices = @transform_15, window_bounds = array<i64: 128, 64>}, {pipeline_mode = #tpu.pipeline_mode<synchronous>, transform_indices = @transform_16, window_bounds = array<i64: 1, 64>}, {pipeline_mode = #tpu.pipeline_mode<synchronous>, transform_indices = @transform_17, window_bounds = array<i64: 64, 128>}, {pipeline_mode = #tpu.pipeline_mode<synchronous>, transform_indices = @transform_18, window_bounds = array<i64: 1, 128>}, {transform_indices = @transform_19, window_bounds = array<i64: 8, 128>}]} {
    %c0 = arith.constant 0 : index
    %c0_0 = arith.constant 0 : index
    %c0_1 = arith.constant 0 : index
    %0 = vector.load %arg1[%c0, %c0_0, %c0_1] : memref<8x8x16xf32, #tpu.memory_space<vmem>>, vector<8x8x16xf32>
    %1 = vector.shape_cast %0 : vector<8x8x16xf32> to vector<64x16xf32>
    %c0_2 = arith.constant 0 : index
    %c0_3 = arith.constant 0 : index
    %2 = vector.load %arg2[%c0_2, %c0_3] : memref<16x32xf32, #tpu.memory_space<vmem>>, vector<16x32xf32>
    %cst = arith.constant dense<0.000000e+00> : vector<64x32xf32>
    %3 = tpu.matmul %1, %2, %cst {dimension_numbers = #tpu.dot_dimension_numbers<[1], [0], [0], [1], [0, 0, 1, 1], [], []>} : vector<64x16xf32>, vector<16x32xf32>, vector<64x32xf32> -> vector<64x32xf32>
    %c0_4 = arith.constant 0 : index
    %c0_5 = arith.constant 0 : index
    %4 = vector.load %arg5[%c0_4, %c0_5] : memref<1x32xf32, #tpu.memory_space<vmem>>, vector<1x32xf32>
    %5 = vector.broadcast %4 : vector<1x32xf32> to vector<64x32xf32>
    %6 = arith.addf %3, %5 : vector<64x32xf32>
    %c0_6 = arith.constant 0 : index
    %c0_7 = arith.constant 0 : index
    %7 = vector.load %arg3[%c0_6, %c0_7] : memref<16x32xf32, #tpu.memory_space<vmem>>, vector<16x32xf32>
    %cst_8 = arith.constant dense<0.000000e+00> : vector<64x32xf32>
    %8 = tpu.matmul %1, %7, %cst_8 {dimension_numbers = #tpu.dot_dimension_numbers<[1], [0], [0], [1], [0, 0, 1, 1], [], []>} : vector<64x16xf32>, vector<16x32xf32>, vector<64x32xf32> -> vector<64x32xf32>
    %c0_9 = arith.constant 0 : index
    %c0_10 = arith.constant 0 : index
    %9 = vector.load %arg6[%c0_9, %c0_10] : memref<1x32xf32, #tpu.memory_space<vmem>>, vector<1x32xf32>
    %10 = vector.broadcast %9 : vector<1x32xf32> to vector<64x32xf32>
    %11 = arith.addf %8, %10 : vector<64x32xf32>
    %c0_11 = arith.constant 0 : index
    %c0_12 = arith.constant 0 : index
    %12 = vector.load %arg4[%c0_11, %c0_12] : memref<16x32xf32, #tpu.memory_space<vmem>>, vector<16x32xf32>
    %cst_13 = arith.constant dense<0.000000e+00> : vector<64x32xf32>
    %13 = tpu.matmul %1, %12, %cst_13 {dimension_numbers = #tpu.dot_dimension_numbers<[1], [0], [0], [1], [0, 0, 1, 1], [], []>} : vector<64x16xf32>, vector<16x32xf32>, vector<64x32xf32> -> vector<64x32xf32>
    %c0_14 = arith.constant 0 : index
    %c0_15 = arith.constant 0 : index
    %14 = vector.load %arg7[%c0_14, %c0_15] : memref<1x32xf32, #tpu.memory_space<vmem>>, vector<1x32xf32>
    %15 = vector.broadcast %14 : vector<1x32xf32> to vector<64x32xf32>
    %16 = arith.addf %13, %15 : vector<64x32xf32>
    %c0_16 = arith.constant 0 : index
    %c0_17 = arith.constant 0 : index
    %17 = vector.load %arg8[%c0_16, %c0_17] : memref<32x32xf32, #tpu.memory_space<vmem>>, vector<32x32xf32>
    %c0_18 = arith.constant 0 : index
    %c0_19 = arith.constant 0 : index
    %18 = vector.load %arg9[%c0_18, %c0_19] : memref<32x32xf32, #tpu.memory_space<vmem>>, vector<32x32xf32>
    %c0_20 = arith.constant 0 : index
    %c0_21 = arith.constant 0 : index
    %19 = vector.load %arg10[%c0_20, %c0_21] : memref<32x32xf32, #tpu.memory_space<vmem>>, vector<32x32xf32>
    %c0_22 = arith.constant 0 : index
    %c0_23 = arith.constant 0 : index
    %20 = vector.load %arg11[%c0_22, %c0_23] : memref<1x32xf32, #tpu.memory_space<vmem>>, vector<1x32xf32>
    %c0_24 = arith.constant 0 : index
    %c0_25 = arith.constant 0 : index
    %21 = vector.load %arg12[%c0_24, %c0_25] : memref<1x32xf32, #tpu.memory_space<vmem>>, vector<1x32xf32>
    %c0_26 = arith.constant 0 : index
    %c0_27 = arith.constant 0 : index
    %22 = vector.load %arg13[%c0_26, %c0_27] : memref<1x32xf32, #tpu.memory_space<vmem>>, vector<1x32xf32>
    %cst_28 = arith.constant 0.000000e+00 : f32
    %23 = vector.broadcast %cst_28 : f32 to vector<8x32xf32>
    %cst_29 = arith.constant dense<0.000000e+00> : vector<8x32xf32>
    %24 = tpu.matmul %23, %17, %cst_29 {dimension_numbers = #tpu.dot_dimension_numbers<[1], [0], [0], [1], [0, 0, 1, 1], [], []>} : vector<8x32xf32>, vector<32x32xf32>, vector<8x32xf32> -> vector<8x32xf32>
    %25 = vector.broadcast %20 : vector<1x32xf32> to vector<8x32xf32>
    %26 = arith.addf %24, %25 : vector<8x32xf32>
    %cst_30 = arith.constant dense<0.000000e+00> : vector<8x32xf32>
    %27 = tpu.matmul %23, %18, %cst_30 {dimension_numbers = #tpu.dot_dimension_numbers<[1], [0], [0], [1], [0, 0, 1, 1], [], []>} : vector<8x32xf32>, vector<32x32xf32>, vector<8x32xf32> -> vector<8x32xf32>
    %28 = vector.broadcast %21 : vector<1x32xf32> to vector<8x32xf32>
    %29 = arith.addf %27, %28 : vector<8x32xf32>
    %cst_31 = arith.constant dense<0.000000e+00> : vector<8x32xf32>
    %30 = tpu.matmul %23, %19, %cst_31 {dimension_numbers = #tpu.dot_dimension_numbers<[1], [0], [0], [1], [0, 0, 1, 1], [], []>} : vector<8x32xf32>, vector<32x32xf32>, vector<8x32xf32> -> vector<8x32xf32>
    %31 = vector.broadcast %22 : vector<1x32xf32> to vector<8x32xf32>
    %32 = arith.addf %30, %31 : vector<8x32xf32>
    %33 = vector.extract_strided_slice %6 {offsets = [0, 0], sizes = [8, 32], strides = [1, 1]} : vector<64x32xf32> to vector<8x32xf32>
    %34 = arith.addf %33, %26 : vector<8x32xf32>
    %35 = arith.negf %34 : vector<8x32xf32>
    %36 = math.exp %35 : vector<8x32xf32>
    %cst_32 = arith.constant 1.000000e+00 : f32
    %37 = vector.broadcast %cst_32 : f32 to vector<8x32xf32>
    %38 = arith.addf %37, %36 : vector<8x32xf32>
    %39 = arith.divf %37, %38 : vector<8x32xf32>
    %40 = vector.extract_strided_slice %11 {offsets = [0, 0], sizes = [8, 32], strides = [1, 1]} : vector<64x32xf32> to vector<8x32xf32>
    %41 = arith.addf %40, %29 : vector<8x32xf32>
    %42 = arith.negf %41 : vector<8x32xf32>
    %43 = math.exp %42 : vector<8x32xf32>
    %cst_33 = arith.constant 1.000000e+00 : f32
    %44 = vector.broadcast %cst_33 : f32 to vector<8x32xf32>
    %45 = arith.addf %44, %43 : vector<8x32xf32>
    %46 = arith.divf %44, %45 : vector<8x32xf32>
    %47 = vector.extract_strided_slice %16 {offsets = [0, 0], sizes = [8, 32], strides = [1, 1]} : vector<64x32xf32> to vector<8x32xf32>
    %48 = arith.mulf %39, %32 : vector<8x32xf32>
    %49 = arith.addf %47, %48 : vector<8x32xf32>
    %50 = math.tanh %49 : vector<8x32xf32>
    %cst_34 = arith.constant 1.000000e+00 : f32
    %51 = vector.broadcast %cst_34 : f32 to vector<8x32xf32>
    %52 = arith.subf %51, %46 : vector<8x32xf32>
    %53 = arith.mulf %52, %50 : vector<8x32xf32>
    %54 = arith.mulf %46, %23 : vector<8x32xf32>
    %55 = arith.addf %53, %54 : vector<8x32xf32>
    %cst_35 = arith.constant dense<0.000000e+00> : vector<8x32xf32>
    %56 = tpu.matmul %55, %17, %cst_35 {dimension_numbers = #tpu.dot_dimension_numbers<[1], [0], [0], [1], [0, 0, 1, 1], [], []>} : vector<8x32xf32>, vector<32x32xf32>, vector<8x32xf32> -> vector<8x32xf32>
    %57 = vector.broadcast %20 : vector<1x32xf32> to vector<8x32xf32>
    %58 = arith.addf %56, %57 : vector<8x32xf32>
    %cst_36 = arith.constant dense<0.000000e+00> : vector<8x32xf32>
    %59 = tpu.matmul %55, %18, %cst_36 {dimension_numbers = #tpu.dot_dimension_numbers<[1], [0], [0], [1], [0, 0, 1, 1], [], []>} : vector<8x32xf32>, vector<32x32xf32>, vector<8x32xf32> -> vector<8x32xf32>
    %60 = vector.broadcast %21 : vector<1x32xf32> to vector<8x32xf32>
    %61 = arith.addf %59, %60 : vector<8x32xf32>
    %cst_37 = arith.constant dense<0.000000e+00> : vector<8x32xf32>
    %62 = tpu.matmul %55, %19, %cst_37 {dimension_numbers = #tpu.dot_dimension_numbers<[1], [0], [0], [1], [0, 0, 1, 1], [], []>} : vector<8x32xf32>, vector<32x32xf32>, vector<8x32xf32> -> vector<8x32xf32>
    %63 = vector.broadcast %22 : vector<1x32xf32> to vector<8x32xf32>
    %64 = arith.addf %62, %63 : vector<8x32xf32>
    %65 = vector.extract_strided_slice %6 {offsets = [8, 0], sizes = [8, 32], strides = [1, 1]} : vector<64x32xf32> to vector<8x32xf32>
    %66 = arith.addf %65, %58 : vector<8x32xf32>
    %67 = arith.negf %66 : vector<8x32xf32>
    %68 = math.exp %67 : vector<8x32xf32>
    %cst_38 = arith.constant 1.000000e+00 : f32
    %69 = vector.broadcast %cst_38 : f32 to vector<8x32xf32>
    %70 = arith.addf %69, %68 : vector<8x32xf32>
    %71 = arith.divf %69, %70 : vector<8x32xf32>
    %72 = vector.extract_strided_slice %11 {offsets = [8, 0], sizes = [8, 32], strides = [1, 1]} : vector<64x32xf32> to vector<8x32xf32>
    %73 = arith.addf %72, %61 : vector<8x32xf32>
    %74 = arith.negf %73 : vector<8x32xf32>
    %75 = math.exp %74 : vector<8x32xf32>
    %cst_39 = arith.constant 1.000000e+00 : f32
    %76 = vector.broadcast %cst_39 : f32 to vector<8x32xf32>
    %77 = arith.addf %76, %75 : vector<8x32xf32>
    %78 = arith.divf %76, %77 : vector<8x32xf32>
    %79 = vector.extract_strided_slice %16 {offsets = [8, 0], sizes = [8, 32], strides = [1, 1]} : vector<64x32xf32> to vector<8x32xf32>
    %80 = arith.mulf %71, %64 : vector<8x32xf32>
    %81 = arith.addf %79, %80 : vector<8x32xf32>
    %82 = math.tanh %81 : vector<8x32xf32>
    %cst_40 = arith.constant 1.000000e+00 : f32
    %83 = vector.broadcast %cst_40 : f32 to vector<8x32xf32>
    %84 = arith.subf %83, %78 : vector<8x32xf32>
    %85 = arith.mulf %84, %82 : vector<8x32xf32>
    %86 = arith.mulf %78, %55 : vector<8x32xf32>
    %87 = arith.addf %85, %86 : vector<8x32xf32>
    %cst_41 = arith.constant dense<0.000000e+00> : vector<8x32xf32>
    %88 = tpu.matmul %87, %17, %cst_41 {dimension_numbers = #tpu.dot_dimension_numbers<[1], [0], [0], [1], [0, 0, 1, 1], [], []>} : vector<8x32xf32>, vector<32x32xf32>, vector<8x32xf32> -> vector<8x32xf32>
    %89 = vector.broadcast %20 : vector<1x32xf32> to vector<8x32xf32>
    %90 = arith.addf %88, %89 : vector<8x32xf32>
    %cst_42 = arith.constant dense<0.000000e+00> : vector<8x32xf32>
    %91 = tpu.matmul %87, %18, %cst_42 {dimension_numbers = #tpu.dot_dimension_numbers<[1], [0], [0], [1], [0, 0, 1, 1], [], []>} : vector<8x32xf32>, vector<32x32xf32>, vector<8x32xf32> -> vector<8x32xf32>
    %92 = vector.broadcast %21 : vector<1x32xf32> to vector<8x32xf32>
    %93 = arith.addf %91, %92 : vector<8x32xf32>
    %cst_43 = arith.constant dense<0.000000e+00> : vector<8x32xf32>
    %94 = tpu.matmul %87, %19, %cst_43 {dimension_numbers = #tpu.dot_dimension_numbers<[1], [0], [0], [1], [0, 0, 1, 1], [], []>} : vector<8x32xf32>, vector<32x32xf32>, vector<8x32xf32> -> vector<8x32xf32>
    %95 = vector.broadcast %22 : vector<1x32xf32> to vector<8x32xf32>
    %96 = arith.addf %94, %95 : vector<8x32xf32>
    %97 = vector.extract_strided_slice %6 {offsets = [16, 0], sizes = [8, 32], strides = [1, 1]} : vector<64x32xf32> to vector<8x32xf32>
    %98 = arith.addf %97, %90 : vector<8x32xf32>
    %99 = arith.negf %98 : vector<8x32xf32>
    %100 = math.exp %99 : vector<8x32xf32>
    %cst_44 = arith.constant 1.000000e+00 : f32
    %101 = vector.broadcast %cst_44 : f32 to vector<8x32xf32>
    %102 = arith.addf %101, %100 : vector<8x32xf32>
    %103 = arith.divf %101, %102 : vector<8x32xf32>
    %104 = vector.extract_strided_slice %11 {offsets = [16, 0], sizes = [8, 32], strides = [1, 1]} : vector<64x32xf32> to vector<8x32xf32>
    %105 = arith.addf %104, %93 : vector<8x32xf32>
    %106 = arith.negf %105 : vector<8x32xf32>
    %107 = math.exp %106 : vector<8x32xf32>
    %cst_45 = arith.constant 1.000000e+00 : f32
    %108 = vector.broadcast %cst_45 : f32 to vector<8x32xf32>
    %109 = arith.addf %108, %107 : vector<8x32xf32>
    %110 = arith.divf %108, %109 : vector<8x32xf32>
    %111 = vector.extract_strided_slice %16 {offsets = [16, 0], sizes = [8, 32], strides = [1, 1]} : vector<64x32xf32> to vector<8x32xf32>
    %112 = arith.mulf %103, %96 : vector<8x32xf32>
    %113 = arith.addf %111, %112 : vector<8x32xf32>
    %114 = math.tanh %113 : vector<8x32xf32>
    %cst_46 = arith.constant 1.000000e+00 : f32
    %115 = vector.broadcast %cst_46 : f32 to vector<8x32xf32>
    %116 = arith.subf %115, %110 : vector<8x32xf32>
    %117 = arith.mulf %116, %114 : vector<8x32xf32>
    %118 = arith.mulf %110, %87 : vector<8x32xf32>
    %119 = arith.addf %117, %118 : vector<8x32xf32>
    %cst_47 = arith.constant dense<0.000000e+00> : vector<8x32xf32>
    %120 = tpu.matmul %119, %17, %cst_47 {dimension_numbers = #tpu.dot_dimension_numbers<[1], [0], [0], [1], [0, 0, 1, 1], [], []>} : vector<8x32xf32>, vector<32x32xf32>, vector<8x32xf32> -> vector<8x32xf32>
    %121 = vector.broadcast %20 : vector<1x32xf32> to vector<8x32xf32>
    %122 = arith.addf %120, %121 : vector<8x32xf32>
    %cst_48 = arith.constant dense<0.000000e+00> : vector<8x32xf32>
    %123 = tpu.matmul %119, %18, %cst_48 {dimension_numbers = #tpu.dot_dimension_numbers<[1], [0], [0], [1], [0, 0, 1, 1], [], []>} : vector<8x32xf32>, vector<32x32xf32>, vector<8x32xf32> -> vector<8x32xf32>
    %124 = vector.broadcast %21 : vector<1x32xf32> to vector<8x32xf32>
    %125 = arith.addf %123, %124 : vector<8x32xf32>
    %cst_49 = arith.constant dense<0.000000e+00> : vector<8x32xf32>
    %126 = tpu.matmul %119, %19, %cst_49 {dimension_numbers = #tpu.dot_dimension_numbers<[1], [0], [0], [1], [0, 0, 1, 1], [], []>} : vector<8x32xf32>, vector<32x32xf32>, vector<8x32xf32> -> vector<8x32xf32>
    %127 = vector.broadcast %22 : vector<1x32xf32> to vector<8x32xf32>
    %128 = arith.addf %126, %127 : vector<8x32xf32>
    %129 = vector.extract_strided_slice %6 {offsets = [24, 0], sizes = [8, 32], strides = [1, 1]} : vector<64x32xf32> to vector<8x32xf32>
    %130 = arith.addf %129, %122 : vector<8x32xf32>
    %131 = arith.negf %130 : vector<8x32xf32>
    %132 = math.exp %131 : vector<8x32xf32>
    %cst_50 = arith.constant 1.000000e+00 : f32
    %133 = vector.broadcast %cst_50 : f32 to vector<8x32xf32>
    %134 = arith.addf %133, %132 : vector<8x32xf32>
    %135 = arith.divf %133, %134 : vector<8x32xf32>
    %136 = vector.extract_strided_slice %11 {offsets = [24, 0], sizes = [8, 32], strides = [1, 1]} : vector<64x32xf32> to vector<8x32xf32>
    %137 = arith.addf %136, %125 : vector<8x32xf32>
    %138 = arith.negf %137 : vector<8x32xf32>
    %139 = math.exp %138 : vector<8x32xf32>
    %cst_51 = arith.constant 1.000000e+00 : f32
    %140 = vector.broadcast %cst_51 : f32 to vector<8x32xf32>
    %141 = arith.addf %140, %139 : vector<8x32xf32>
    %142 = arith.divf %140, %141 : vector<8x32xf32>
    %143 = vector.extract_strided_slice %16 {offsets = [24, 0], sizes = [8, 32], strides = [1, 1]} : vector<64x32xf32> to vector<8x32xf32>
    %144 = arith.mulf %135, %128 : vector<8x32xf32>
    %145 = arith.addf %143, %144 : vector<8x32xf32>
    %146 = math.tanh %145 : vector<8x32xf32>
    %cst_52 = arith.constant 1.000000e+00 : f32
    %147 = vector.broadcast %cst_52 : f32 to vector<8x32xf32>
    %148 = arith.subf %147, %142 : vector<8x32xf32>
    %149 = arith.mulf %148, %146 : vector<8x32xf32>
    %150 = arith.mulf %142, %119 : vector<8x32xf32>
    %151 = arith.addf %149, %150 : vector<8x32xf32>
    %cst_53 = arith.constant dense<0.000000e+00> : vector<8x32xf32>
    %152 = tpu.matmul %151, %17, %cst_53 {dimension_numbers = #tpu.dot_dimension_numbers<[1], [0], [0], [1], [0, 0, 1, 1], [], []>} : vector<8x32xf32>, vector<32x32xf32>, vector<8x32xf32> -> vector<8x32xf32>
    %153 = vector.broadcast %20 : vector<1x32xf32> to vector<8x32xf32>
    %154 = arith.addf %152, %153 : vector<8x32xf32>
    %cst_54 = arith.constant dense<0.000000e+00> : vector<8x32xf32>
    %155 = tpu.matmul %151, %18, %cst_54 {dimension_numbers = #tpu.dot_dimension_numbers<[1], [0], [0], [1], [0, 0, 1, 1], [], []>} : vector<8x32xf32>, vector<32x32xf32>, vector<8x32xf32> -> vector<8x32xf32>
    %156 = vector.broadcast %21 : vector<1x32xf32> to vector<8x32xf32>
    %157 = arith.addf %155, %156 : vector<8x32xf32>
    %cst_55 = arith.constant dense<0.000000e+00> : vector<8x32xf32>
    %158 = tpu.matmul %151, %19, %cst_55 {dimension_numbers = #tpu.dot_dimension_numbers<[1], [0], [0], [1], [0, 0, 1, 1], [], []>} : vector<8x32xf32>, vector<32x32xf32>, vector<8x32xf32> -> vector<8x32xf32>
    %159 = vector.broadcast %22 : vector<1x32xf32> to vector<8x32xf32>
    %160 = arith.addf %158, %159 : vector<8x32xf32>
    %161 = vector.extract_strided_slice %6 {offsets = [32, 0], sizes = [8, 32], strides = [1, 1]} : vector<64x32xf32> to vector<8x32xf32>
    %162 = arith.addf %161, %154 : vector<8x32xf32>
    %163 = arith.negf %162 : vector<8x32xf32>
    %164 = math.exp %163 : vector<8x32xf32>
    %cst_56 = arith.constant 1.000000e+00 : f32
    %165 = vector.broadcast %cst_56 : f32 to vector<8x32xf32>
    %166 = arith.addf %165, %164 : vector<8x32xf32>
    %167 = arith.divf %165, %166 : vector<8x32xf32>
    %168 = vector.extract_strided_slice %11 {offsets = [32, 0], sizes = [8, 32], strides = [1, 1]} : vector<64x32xf32> to vector<8x32xf32>
    %169 = arith.addf %168, %157 : vector<8x32xf32>
    %170 = arith.negf %169 : vector<8x32xf32>
    %171 = math.exp %170 : vector<8x32xf32>
    %cst_57 = arith.constant 1.000000e+00 : f32
    %172 = vector.broadcast %cst_57 : f32 to vector<8x32xf32>
    %173 = arith.addf %172, %171 : vector<8x32xf32>
    %174 = arith.divf %172, %173 : vector<8x32xf32>
    %175 = vector.extract_strided_slice %16 {offsets = [32, 0], sizes = [8, 32], strides = [1, 1]} : vector<64x32xf32> to vector<8x32xf32>
    %176 = arith.mulf %167, %160 : vector<8x32xf32>
    %177 = arith.addf %175, %176 : vector<8x32xf32>
    %178 = math.tanh %177 : vector<8x32xf32>
    %cst_58 = arith.constant 1.000000e+00 : f32
    %179 = vector.broadcast %cst_58 : f32 to vector<8x32xf32>
    %180 = arith.subf %179, %174 : vector<8x32xf32>
    %181 = arith.mulf %180, %178 : vector<8x32xf32>
    %182 = arith.mulf %174, %151 : vector<8x32xf32>
    %183 = arith.addf %181, %182 : vector<8x32xf32>
    %cst_59 = arith.constant dense<0.000000e+00> : vector<8x32xf32>
    %184 = tpu.matmul %183, %17, %cst_59 {dimension_numbers = #tpu.dot_dimension_numbers<[1], [0], [0], [1], [0, 0, 1, 1], [], []>} : vector<8x32xf32>, vector<32x32xf32>, vector<8x32xf32> -> vector<8x32xf32>
    %185 = vector.broadcast %20 : vector<1x32xf32> to vector<8x32xf32>
    %186 = arith.addf %184, %185 : vector<8x32xf32>
    %cst_60 = arith.constant dense<0.000000e+00> : vector<8x32xf32>
    %187 = tpu.matmul %183, %18, %cst_60 {dimension_numbers = #tpu.dot_dimension_numbers<[1], [0], [0], [1], [0, 0, 1, 1], [], []>} : vector<8x32xf32>, vector<32x32xf32>, vector<8x32xf32> -> vector<8x32xf32>
    %188 = vector.broadcast %21 : vector<1x32xf32> to vector<8x32xf32>
    %189 = arith.addf %187, %188 : vector<8x32xf32>
    %cst_61 = arith.constant dense<0.000000e+00> : vector<8x32xf32>
    %190 = tpu.matmul %183, %19, %cst_61 {dimension_numbers = #tpu.dot_dimension_numbers<[1], [0], [0], [1], [0, 0, 1, 1], [], []>} : vector<8x32xf32>, vector<32x32xf32>, vector<8x32xf32> -> vector<8x32xf32>
    %191 = vector.broadcast %22 : vector<1x32xf32> to vector<8x32xf32>
    %192 = arith.addf %190, %191 : vector<8x32xf32>
    %193 = vector.extract_strided_slice %6 {offsets = [40, 0], sizes = [8, 32], strides = [1, 1]} : vector<64x32xf32> to vector<8x32xf32>
    %194 = arith.addf %193, %186 : vector<8x32xf32>
    %195 = arith.negf %194 : vector<8x32xf32>
    %196 = math.exp %195 : vector<8x32xf32>
    %cst_62 = arith.constant 1.000000e+00 : f32
    %197 = vector.broadcast %cst_62 : f32 to vector<8x32xf32>
    %198 = arith.addf %197, %196 : vector<8x32xf32>
    %199 = arith.divf %197, %198 : vector<8x32xf32>
    %200 = vector.extract_strided_slice %11 {offsets = [40, 0], sizes = [8, 32], strides = [1, 1]} : vector<64x32xf32> to vector<8x32xf32>
    %201 = arith.addf %200, %189 : vector<8x32xf32>
    %202 = arith.negf %201 : vector<8x32xf32>
    %203 = math.exp %202 : vector<8x32xf32>
    %cst_63 = arith.constant 1.000000e+00 : f32
    %204 = vector.broadcast %cst_63 : f32 to vector<8x32xf32>
    %205 = arith.addf %204, %203 : vector<8x32xf32>
    %206 = arith.divf %204, %205 : vector<8x32xf32>
    %207 = vector.extract_strided_slice %16 {offsets = [40, 0], sizes = [8, 32], strides = [1, 1]} : vector<64x32xf32> to vector<8x32xf32>
    %208 = arith.mulf %199, %192 : vector<8x32xf32>
    %209 = arith.addf %207, %208 : vector<8x32xf32>
    %210 = math.tanh %209 : vector<8x32xf32>
    %cst_64 = arith.constant 1.000000e+00 : f32
    %211 = vector.broadcast %cst_64 : f32 to vector<8x32xf32>
    %212 = arith.subf %211, %206 : vector<8x32xf32>
    %213 = arith.mulf %212, %210 : vector<8x32xf32>
    %214 = arith.mulf %206, %183 : vector<8x32xf32>
    %215 = arith.addf %213, %214 : vector<8x32xf32>
    %cst_65 = arith.constant dense<0.000000e+00> : vector<8x32xf32>
    %216 = tpu.matmul %215, %17, %cst_65 {dimension_numbers = #tpu.dot_dimension_numbers<[1], [0], [0], [1], [0, 0, 1, 1], [], []>} : vector<8x32xf32>, vector<32x32xf32>, vector<8x32xf32> -> vector<8x32xf32>
    %217 = vector.broadcast %20 : vector<1x32xf32> to vector<8x32xf32>
    %218 = arith.addf %216, %217 : vector<8x32xf32>
    %cst_66 = arith.constant dense<0.000000e+00> : vector<8x32xf32>
    %219 = tpu.matmul %215, %18, %cst_66 {dimension_numbers = #tpu.dot_dimension_numbers<[1], [0], [0], [1], [0, 0, 1, 1], [], []>} : vector<8x32xf32>, vector<32x32xf32>, vector<8x32xf32> -> vector<8x32xf32>
    %220 = vector.broadcast %21 : vector<1x32xf32> to vector<8x32xf32>
    %221 = arith.addf %219, %220 : vector<8x32xf32>
    %cst_67 = arith.constant dense<0.000000e+00> : vector<8x32xf32>
    %222 = tpu.matmul %215, %19, %cst_67 {dimension_numbers = #tpu.dot_dimension_numbers<[1], [0], [0], [1], [0, 0, 1, 1], [], []>} : vector<8x32xf32>, vector<32x32xf32>, vector<8x32xf32> -> vector<8x32xf32>
    %223 = vector.broadcast %22 : vector<1x32xf32> to vector<8x32xf32>
    %224 = arith.addf %222, %223 : vector<8x32xf32>
    %225 = vector.extract_strided_slice %6 {offsets = [48, 0], sizes = [8, 32], strides = [1, 1]} : vector<64x32xf32> to vector<8x32xf32>
    %226 = arith.addf %225, %218 : vector<8x32xf32>
    %227 = arith.negf %226 : vector<8x32xf32>
    %228 = math.exp %227 : vector<8x32xf32>
    %cst_68 = arith.constant 1.000000e+00 : f32
    %229 = vector.broadcast %cst_68 : f32 to vector<8x32xf32>
    %230 = arith.addf %229, %228 : vector<8x32xf32>
    %231 = arith.divf %229, %230 : vector<8x32xf32>
    %232 = vector.extract_strided_slice %11 {offsets = [48, 0], sizes = [8, 32], strides = [1, 1]} : vector<64x32xf32> to vector<8x32xf32>
    %233 = arith.addf %232, %221 : vector<8x32xf32>
    %234 = arith.negf %233 : vector<8x32xf32>
    %235 = math.exp %234 : vector<8x32xf32>
    %cst_69 = arith.constant 1.000000e+00 : f32
    %236 = vector.broadcast %cst_69 : f32 to vector<8x32xf32>
    %237 = arith.addf %236, %235 : vector<8x32xf32>
    %238 = arith.divf %236, %237 : vector<8x32xf32>
    %239 = vector.extract_strided_slice %16 {offsets = [48, 0], sizes = [8, 32], strides = [1, 1]} : vector<64x32xf32> to vector<8x32xf32>
    %240 = arith.mulf %231, %224 : vector<8x32xf32>
    %241 = arith.addf %239, %240 : vector<8x32xf32>
    %242 = math.tanh %241 : vector<8x32xf32>
    %cst_70 = arith.constant 1.000000e+00 : f32
    %243 = vector.broadcast %cst_70 : f32 to vector<8x32xf32>
    %244 = arith.subf %243, %238 : vector<8x32xf32>
    %245 = arith.mulf %244, %242 : vector<8x32xf32>
    %246 = arith.mulf %238, %215 : vector<8x32xf32>
    %247 = arith.addf %245, %246 : vector<8x32xf32>
    %cst_71 = arith.constant dense<0.000000e+00> : vector<8x32xf32>
    %248 = tpu.matmul %247, %17, %cst_71 {dimension_numbers = #tpu.dot_dimension_numbers<[1], [0], [0], [1], [0, 0, 1, 1], [], []>} : vector<8x32xf32>, vector<32x32xf32>, vector<8x32xf32> -> vector<8x32xf32>
    %249 = vector.broadcast %20 : vector<1x32xf32> to vector<8x32xf32>
    %250 = arith.addf %248, %249 : vector<8x32xf32>
    %cst_72 = arith.constant dense<0.000000e+00> : vector<8x32xf32>
    %251 = tpu.matmul %247, %18, %cst_72 {dimension_numbers = #tpu.dot_dimension_numbers<[1], [0], [0], [1], [0, 0, 1, 1], [], []>} : vector<8x32xf32>, vector<32x32xf32>, vector<8x32xf32> -> vector<8x32xf32>
    %252 = vector.broadcast %21 : vector<1x32xf32> to vector<8x32xf32>
    %253 = arith.addf %251, %252 : vector<8x32xf32>
    %cst_73 = arith.constant dense<0.000000e+00> : vector<8x32xf32>
    %254 = tpu.matmul %247, %19, %cst_73 {dimension_numbers = #tpu.dot_dimension_numbers<[1], [0], [0], [1], [0, 0, 1, 1], [], []>} : vector<8x32xf32>, vector<32x32xf32>, vector<8x32xf32> -> vector<8x32xf32>
    %255 = vector.broadcast %22 : vector<1x32xf32> to vector<8x32xf32>
    %256 = arith.addf %254, %255 : vector<8x32xf32>
    %257 = vector.extract_strided_slice %6 {offsets = [56, 0], sizes = [8, 32], strides = [1, 1]} : vector<64x32xf32> to vector<8x32xf32>
    %258 = arith.addf %257, %250 : vector<8x32xf32>
    %259 = arith.negf %258 : vector<8x32xf32>
    %260 = math.exp %259 : vector<8x32xf32>
    %cst_74 = arith.constant 1.000000e+00 : f32
    %261 = vector.broadcast %cst_74 : f32 to vector<8x32xf32>
    %262 = arith.addf %261, %260 : vector<8x32xf32>
    %263 = arith.divf %261, %262 : vector<8x32xf32>
    %264 = vector.extract_strided_slice %11 {offsets = [56, 0], sizes = [8, 32], strides = [1, 1]} : vector<64x32xf32> to vector<8x32xf32>
    %265 = arith.addf %264, %253 : vector<8x32xf32>
    %266 = arith.negf %265 : vector<8x32xf32>
    %267 = math.exp %266 : vector<8x32xf32>
    %cst_75 = arith.constant 1.000000e+00 : f32
    %268 = vector.broadcast %cst_75 : f32 to vector<8x32xf32>
    %269 = arith.addf %268, %267 : vector<8x32xf32>
    %270 = arith.divf %268, %269 : vector<8x32xf32>
    %271 = vector.extract_strided_slice %16 {offsets = [56, 0], sizes = [8, 32], strides = [1, 1]} : vector<64x32xf32> to vector<8x32xf32>
    %272 = arith.mulf %263, %256 : vector<8x32xf32>
    %273 = arith.addf %271, %272 : vector<8x32xf32>
    %274 = math.tanh %273 : vector<8x32xf32>
    %cst_76 = arith.constant 1.000000e+00 : f32
    %275 = vector.broadcast %cst_76 : f32 to vector<8x32xf32>
    %276 = arith.subf %275, %270 : vector<8x32xf32>
    %277 = arith.mulf %276, %274 : vector<8x32xf32>
    %278 = arith.mulf %270, %247 : vector<8x32xf32>
    %279 = arith.addf %277, %278 : vector<8x32xf32>
    %c0_77 = arith.constant 0 : index
    %c0_78 = arith.constant 0 : index
    %280 = vector.load %arg14[%c0_77, %c0_78] : memref<32x128xf32, #tpu.memory_space<vmem>>, vector<32x128xf32>
    %cst_79 = arith.constant dense<0.000000e+00> : vector<8x128xf32>
    %281 = tpu.matmul %279, %280, %cst_79 {dimension_numbers = #tpu.dot_dimension_numbers<[1], [0], [0], [1], [0, 0, 1, 1], [], []>} : vector<8x32xf32>, vector<32x128xf32>, vector<8x128xf32> -> vector<8x128xf32>
    %c0_80 = arith.constant 0 : index
    %c0_81 = arith.constant 0 : index
    %282 = vector.load %arg15[%c0_80, %c0_81] : memref<1x128xf32, #tpu.memory_space<vmem>>, vector<1x128xf32>
    %283 = vector.broadcast %282 : vector<1x128xf32> to vector<8x128xf32>
    %284 = arith.addf %281, %283 : vector<8x128xf32>
    %c0_82 = arith.constant 0 : index
    %c0_83 = arith.constant 0 : index
    %285 = vector.load %arg16[%c0_82, %c0_83] : memref<128x64xf32, #tpu.memory_space<vmem>>, vector<128x64xf32>
    %cst_84 = arith.constant dense<0.000000e+00> : vector<8x64xf32>
    %286 = tpu.matmul %284, %285, %cst_84 {dimension_numbers = #tpu.dot_dimension_numbers<[1], [0], [0], [1], [0, 0, 1, 1], [], []>} : vector<8x128xf32>, vector<128x64xf32>, vector<8x64xf32> -> vector<8x64xf32>
    %c0_85 = arith.constant 0 : index
    %c0_86 = arith.constant 0 : index
    %287 = vector.load %arg17[%c0_85, %c0_86] : memref<1x64xf32, #tpu.memory_space<vmem>>, vector<1x64xf32>
    %288 = vector.broadcast %287 : vector<1x64xf32> to vector<8x64xf32>
    %289 = arith.addf %286, %288 : vector<8x64xf32>
    %c0_87 = arith.constant 0 : index
    %c0_88 = arith.constant 0 : index
    %290 = vector.load %arg18[%c0_87, %c0_88] : memref<64x128xf32, #tpu.memory_space<vmem>>, vector<64x128xf32>
    %cst_89 = arith.constant dense<0.000000e+00> : vector<8x128xf32>
    %291 = tpu.matmul %289, %290, %cst_89 {dimension_numbers = #tpu.dot_dimension_numbers<[1], [0], [0], [1], [0, 0, 1, 1], [], []>} : vector<8x64xf32>, vector<64x128xf32>, vector<8x128xf32> -> vector<8x128xf32>
    %c0_90 = arith.constant 0 : index
    %c0_91 = arith.constant 0 : index
    %292 = vector.load %arg19[%c0_90, %c0_91] : memref<1x128xf32, #tpu.memory_space<vmem>>, vector<1x128xf32>
    %293 = vector.broadcast %292 : vector<1x128xf32> to vector<8x128xf32>
    %294 = arith.addf %291, %293 : vector<8x128xf32>
    %c0_92 = arith.constant 0 : index
    %c0_93 = arith.constant 0 : index
    %295 = vector.load %arg20[%c0_92, %c0_93] : memref<8x128xf32, #tpu.memory_space<vmem>>, vector<8x128xf32>
    tpu.vector_store %arg20[%c0_92, %c0_93], %294 {strides = array<i32>} : memref<8x128xf32, #tpu.memory_space<vmem>>, vector<8x128xf32>,
    return
  }
  func.func @transform_0(%arg0: i32) -> (i32, i32, i32) {
    %c0_i32 = arith.constant 0 : i32
    %c0_i32_0 = arith.constant 0 : i32
    %c0_i32_1 = arith.constant 0 : i32
    return %c0_i32, %arg0, %c0_i32_0 : i32, i32, i32
  }
  func.func @transform_1(%arg0: i32) -> (i32, i32) {
    %c0_i32 = arith.constant 0 : i32
    %c0_i32_0 = arith.constant 0 : i32
    %c0_i32_1 = arith.constant 0 : i32
    return %c0_i32, %c0_i32_0 : i32, i32
  }
  func.func @transform_2(%arg0: i32) -> (i32, i32) {
    %c0_i32 = arith.constant 0 : i32
    %c0_i32_0 = arith.constant 0 : i32
    %c0_i32_1 = arith.constant 0 : i32
    return %c0_i32, %c0_i32_0 : i32, i32
  }
  func.func @transform_3(%arg0: i32) -> (i32, i32) {
    %c0_i32 = arith.constant 0 : i32
    %c0_i32_0 = arith.constant 0 : i32
    %c0_i32_1 = arith.constant 0 : i32
    return %c0_i32, %c0_i32_0 : i32, i32
  }
  func.func @transform_4(%arg0: i32) -> (i32, i32) {
    %c0_i32 = arith.constant 0 : i32
    %c0_i32_0 = arith.constant 0 : i32
    %c0_i32_1 = arith.constant 0 : i32
    return %c0_i32, %c0_i32_0 : i32, i32
  }
  func.func @transform_5(%arg0: i32) -> (i32, i32) {
    %c0_i32 = arith.constant 0 : i32
    %c0_i32_0 = arith.constant 0 : i32
    %c0_i32_1 = arith.constant 0 : i32
    return %c0_i32, %c0_i32_0 : i32, i32
  }
  func.func @transform_6(%arg0: i32) -> (i32, i32) {
    %c0_i32 = arith.constant 0 : i32
    %c0_i32_0 = arith.constant 0 : i32
    %c0_i32_1 = arith.constant 0 : i32
    return %c0_i32, %c0_i32_0 : i32, i32
  }
  func.func @transform_7(%arg0: i32) -> (i32, i32) {
    %c0_i32 = arith.constant 0 : i32
    %c0_i32_0 = arith.constant 0 : i32
    %c0_i32_1 = arith.constant 0 : i32
    return %c0_i32, %c0_i32_0 : i32, i32
  }
  func.func @transform_8(%arg0: i32) -> (i32, i32) {
    %c0_i32 = arith.constant 0 : i32
    %c0_i32_0 = arith.constant 0 : i32
    %c0_i32_1 = arith.constant 0 : i32
    return %c0_i32, %c0_i32_0 : i32, i32
  }
  func.func @transform_9(%arg0: i32) -> (i32, i32) {
    %c0_i32 = arith.constant 0 : i32
    %c0_i32_0 = arith.constant 0 : i32
    %c0_i32_1 = arith.constant 0 : i32
    return %c0_i32, %c0_i32_0 : i32, i32
  }
  func.func @transform_10(%arg0: i32) -> (i32, i32) {
    %c0_i32 = arith.constant 0 : i32
    %c0_i32_0 = arith.constant 0 : i32
    %c0_i32_1 = arith.constant 0 : i32
    return %c0_i32, %c0_i32_0 : i32, i32
  }
  func.func @transform_11(%arg0: i32) -> (i32, i32) {
    %c0_i32 = arith.constant 0 : i32
    %c0_i32_0 = arith.constant 0 : i32
    %c0_i32_1 = arith.constant 0 : i32
    return %c0_i32, %c0_i32_0 : i32, i32
  }
  func.func @transform_12(%arg0: i32) -> (i32, i32) {
    %c0_i32 = arith.constant 0 : i32
    %c0_i32_0 = arith.constant 0 : i32
    %c0_i32_1 = arith.constant 0 : i32
    return %c0_i32, %c0_i32_0 : i32, i32
  }
  func.func @transform_13(%arg0: i32) -> (i32, i32) {
    %c0_i32 = arith.constant 0 : i32
    %c0_i32_0 = arith.constant 0 : i32
    %c0_i32_1 = arith.constant 0 : i32
    return %c0_i32, %c0_i32_0 : i32, i32
  }
  func.func @transform_14(%arg0: i32) -> (i32, i32) {
    %c0_i32 = arith.constant 0 : i32
    %c0_i32_0 = arith.constant 0 : i32
    %c0_i32_1 = arith.constant 0 : i32
    return %c0_i32, %c0_i32_0 : i32, i32
  }
  func.func @transform_15(%arg0: i32) -> (i32, i32) {
    %c0_i32 = arith.constant 0 : i32
    %c0_i32_0 = arith.constant 0 : i32
    %c0_i32_1 = arith.constant 0 : i32
    return %c0_i32, %c0_i32_0 : i32, i32
  }
  func.func @transform_16(%arg0: i32) -> (i32, i32) {
    %c0_i32 = arith.constant 0 : i32
    %c0_i32_0 = arith.constant 0 : i32
    %c0_i32_1 = arith.constant 0 : i32
    return %c0_i32, %c0_i32_0 : i32, i32
  }
  func.func @transform_17(%arg0: i32) -> (i32, i32) {
    %c0_i32 = arith.constant 0 : i32
    %c0_i32_0 = arith.constant 0 : i32
    %c0_i32_1 = arith.constant 0 : i32
    return %c0_i32, %c0_i32_0 : i32, i32
  }
  func.func @transform_18(%arg0: i32) -> (i32, i32) {
    %c0_i32 = arith.constant 0 : i32
    %c0_i32_0 = arith.constant 0 : i32
    %c0_i32_1 = arith.constant 0 : i32
    return %c0_i32, %c0_i32_0 : i32, i32
  }
  func.func @transform_19(%arg0: i32) -> (i32, i32) {
    %c0_i32 = arith.constant 0 : i32
    %c0_i32_0 = arith.constant 0 : i32
    return %arg0, %c0_i32 : i32, i32
  }
}

</mosaic_0001>

<llo_original>
// kernel: tpu_custom_call.1
$region0: #{tpu_custom_call.1}
  #allocation0 [shape = 'u32[]', space=smem, size = 0x4, offset = 0x4, fixed_abs, tag = 'smem constant byte address 0x4 - core index']
  #allocation1 [shape = 'u32[144,128]{1,0:T(1,128)}', space=vmem, size = 0x12000, scoped, tag = 'internal scratch']
  %s0 = inlined_call_operand.vmem [shape: f32[8,8,16], index: 0, kind: input, shape index: {}]
  %s1 = inlined_call_operand.hbm [shape: f32[16,32], index: 1, kind: input, shape index: {}]
  %s2 = inlined_call_operand.hbm [shape: f32[16,32], index: 2, kind: input, shape index: {}]
  %s3 = inlined_call_operand.hbm [shape: f32[16,32], index: 3, kind: input, shape index: {}]
  %s4 = inlined_call_operand.vmem [shape: f32[1,32], index: 4, kind: input, shape index: {}]
  %s5 = inlined_call_operand.vmem [shape: f32[1,32], index: 5, kind: input, shape index: {}]
  %s6 = inlined_call_operand.hbm [shape: f32[1,32], index: 6, kind: input, shape index: {}]
  %s7 = inlined_call_operand.vmem [shape: f32[32,32], index: 7, kind: input, shape index: {}]
  %s8 = inlined_call_operand.vmem [shape: f32[32,32], index: 8, kind: input, shape index: {}]
  %s9 = inlined_call_operand.vmem [shape: f32[32,32], index: 9, kind: input, shape index: {}]
  %s10 = inlined_call_operand.vmem [shape: f32[1,32], index: 10, kind: input, shape index: {}]
  %s11 = inlined_call_operand.vmem [shape: f32[1,32], index: 11, kind: input, shape index: {}]
  %s12 = inlined_call_operand.vmem [shape: f32[1,32], index: 12, kind: input, shape index: {}]
  %s13 = inlined_call_operand.hbm [shape: f32[32,128], index: 13, kind: input, shape index: {}]
  %s14 = inlined_call_operand.vmem [shape: f32[1,128], index: 14, kind: input, shape index: {}]
  %s15 = inlined_call_operand.vmem [shape: f32[128,64], index: 15, kind: input, shape index: {}]
  %s16 = inlined_call_operand.vmem [shape: f32[1,64], index: 16, kind: input, shape index: {}]
  %s17 = inlined_call_operand.vmem [shape: f32[64,128], index: 17, kind: input, shape index: {}]
  %s18 = inlined_call_operand.vmem [shape: f32[1,128], index: 18, kind: input, shape index: {}]
  %s19 = inlined_call_operand.hbm [shape: f32[8,128], index: 19, kind: output, shape index: {}]
  %s20 = sld [smem:[#allocation0]]
  $region106: #{tpu_custom_call.1} parent=0
    _
  %s22 = ssub.s32 1, %s20
  %s23 = scalar_select 0, %s22, %s20
  $region1: #{tpu_custom_call.1} parent=0
    #allocation2 [shape = 'u8[8192]{0}', space=vmem, size = 0x2000, scoped, tag = 'input window, operand 1, single buffered']
    #allocation3 [shape = 's32[1]{0}', space=sflag, size = 0x4, scoped, tag = 'scoped memory for tpu_custom_call.1']
    #allocation4 [shape = 's32[1]{0}', space=sflag, size = 0x4, scoped, tag = 'scoped memory for tpu_custom_call.1']
    #allocation5 [shape = 'u8[8192]{0}', space=vmem, size = 0x2000, scoped, tag = 'input window, operand 2, single buffered']
    #allocation6 [shape = 's32[1]{0}', space=sflag, size = 0x4, scoped, tag = 'scoped memory for tpu_custom_call.1']
    #allocation7 [shape = 'u8[8192]{0}', space=vmem, size = 0x2000, scoped, tag = 'input window, operand 3, single buffered']
    #allocation8 [shape = 'u8[512]{0}', space=vmem, size = 0x400, scoped, tag = 'input window, operand 6, single buffered']
    #allocation9 [shape = 's32[1]{0}', space=sflag, size = 0x4, scoped, tag = 'scoped memory for tpu_custom_call.1']
    #allocation10 [shape = 'u8[16384]{0}', space=vmem, size = 0x4000, scoped, tag = 'input window, operand 13, single buffered']
    #allocation11 [shape = 'u8[4096]{0}', space=vmem, size = 0x1000, scoped, tag = 'output window, operand 0, single buffered']
    %24 = vsyncpa [#allocation3], 0
    %25 = vsyncpa [#allocation6], 0
    %26 = vsyncpa [#allocation9], 0
    %27 = vsyncpa [#allocation4], 0
    // Predicated region
    $region2: #{tpu_custom_call.1} parent=1 // pred_check
      _
    $region3: #{tpu_custom_call.1} parent=1 // pred_check_branch
      %29 = sbr.rel (0) target = $region5
    $region4: #{tpu_custom_call.1} parent=1 // pred_region
      _
    $region5: #{tpu_custom_call.1} parent=1 // pred_fallthru
      _
    // Predicated region
    $region6: #{tpu_custom_call.1} parent=1 // pred_check
      _
    $region7: #{tpu_custom_call.1} parent=1 // pred_check_branch
      %31 = sbr.rel (0) target = $region9
    $region8: #{tpu_custom_call.1} parent=1 // pred_region
      %s33 = ssub.s32 256, 256
      %34 = vsyncadd [#allocation3], %s33
      %s35 = sshll.u32 [#allocation2], 4
      %s36 = int_to_ptr.vmem [resolvable:$true] %s35
      %41 = dma.hbm_to_vmem [thread:$0]  %s1, 256, %s36, [#allocation3], 128, 128, 8
    $region9: #{tpu_custom_call.1} parent=1 // pred_fallthru
      _
    // Predicated region
    $region10: #{tpu_custom_call.1} parent=1 // pred_check
      _
    $region11: #{tpu_custom_call.1} parent=1 // pred_check_branch
      %43 = sbr.rel (0) target = $region13
    $region12: #{tpu_custom_call.1} parent=1 // pred_region
      %s45 = ssub.s32 256, 256
      %46 = vsyncadd [#allocation6], %s45
      %s47 = sshll.u32 [#allocation5], 4
      %s48 = int_to_ptr.vmem [resolvable:$true] %s47
      %53 = dma.hbm_to_vmem [thread:$0]  %s2, 256, %s48, [#allocation6], 128, 128, 8
    $region13: #{tpu_custom_call.1} parent=1 // pred_fallthru
      _
    // Predicated region
    $region14: #{tpu_custom_call.1} parent=1 // pred_check
      _
    $region15: #{tpu_custom_call.1} parent=1 // pred_check_branch
      %55 = sbr.rel (0) target = $region17
    $region16: #{tpu_custom_call.1} parent=1 // pred_region
      %s57 = ssub.s32 256, 256
      %58 = vsyncadd [#allocation6], %s57
      %s59 = sshll.u32 [#allocation7], 4
      %s60 = int_to_ptr.vmem [resolvable:$true] %s59
      %65 = dma.hbm_to_vmem [thread:$0]  %s3, 256, %s60, [#allocation6], 128, 128, 8
    $region17: #{tpu_custom_call.1} parent=1 // pred_fallthru
      _
    // Predicated region
    $region18: #{tpu_custom_call.1} parent=1 // pred_check
      _
    $region19: #{tpu_custom_call.1} parent=1 // pred_check_branch
      %67 = sbr.rel (0) target = $region21
    $region20: #{tpu_custom_call.1} parent=1 // pred_region
      _
    $region21: #{tpu_custom_call.1} parent=1 // pred_fallthru
      _
    // Predicated region
    $region22: #{tpu_custom_call.1} parent=1 // pred_check
      _
    $region23: #{tpu_custom_call.1} parent=1 // pred_check_branch
      %69 = sbr.rel (0) target = $region25
    $region24: #{tpu_custom_call.1} parent=1 // pred_region
      _
    $region25: #{tpu_custom_call.1} parent=1 // pred_fallthru
      _
    // Predicated region
    $region26: #{tpu_custom_call.1} parent=1 // pred_check
      _
    $region27: #{tpu_custom_call.1} parent=1 // pred_check_branch
      %71 = sbr.rel (0) target = $region29
    $region28: #{tpu_custom_call.1} parent=1 // pred_region
      %s73 = ssub.s32 16, 16
      %74 = vsyncadd [#allocation9], %s73
      %s76 = sshll.u32 [#allocation8], 4
      %s77 = int_to_ptr.vmem [resolvable:$true] %s76
      %79 = dma.hbm_to_vmem [thread:$0]  %s6, 16, %s77, [#allocation9]
    $region29: #{tpu_custom_call.1} parent=1 // pred_fallthru
      _
    // Predicated region
    $region30: #{tpu_custom_call.1} parent=1 // pred_check
      _
    $region31: #{tpu_custom_call.1} parent=1 // pred_check_branch
      %81 = sbr.rel (0) target = $region33
    $region32: #{tpu_custom_call.1} parent=1 // pred_region
      _
    $region33: #{tpu_custom_call.1} parent=1 // pred_fallthru
      _
    // Predicated region
    $region34: #{tpu_custom_call.1} parent=1 // pred_check
      _
    $region35: #{tpu_custom_call.1} parent=1 // pred_check_branch
      %83 = sbr.rel (0) target = $region37
    $region36: #{tpu_custom_call.1} parent=1 // pred_region
      _
    $region37: #{tpu_custom_call.1} parent=1 // pred_fallthru
      _
    // Predicated region
    $region38: #{tpu_custom_call.1} parent=1 // pred_check
      _
    $region39: #{tpu_custom_call.1} parent=1 // pred_check_branch
      %85 = sbr.rel (0) target = $region41
    $region40: #{tpu_custom_call.1} parent=1 // pred_region
      _
    $region41: #{tpu_custom_call.1} parent=1 // pred_fallthru
      _
    // Predicated region
    $region42: #{tpu_custom_call.1} parent=1 // pred_check
      _
    $region43: #{tpu_custom_call.1} parent=1 // pred_check_branch
      %87 = sbr.rel (0) target = $region45
    $region44: #{tpu_custom_call.1} parent=1 // pred_region
      _
    $region45: #{tpu_custom_call.1} parent=1 // pred_fallthru
      _
    // Predicated region
    $region46: #{tpu_custom_call.1} parent=1 // pred_check
      _
    $region47: #{tpu_custom_call.1} parent=1 // pred_check_branch
      %89 = sbr.rel (0) target = $region49
    $region48: #{tpu_custom_call.1} parent=1 // pred_region
      _
    $region49: #{tpu_custom_call.1} parent=1 // pred_fallthru
      _
    // Predicated region
    $region50: #{tpu_custom_call.1} parent=1 // pred_check
      _
    $region51: #{tpu_custom_call.1} parent=1 // pred_check_branch
      %91 = sbr.rel (0) target = $region53
    $region52: #{tpu_custom_call.1} parent=1 // pred_region
      _
    $region53: #{tpu_custom_call.1} parent=1 // pred_fallthru
      _
    // Predicated region
    $region54: #{tpu_custom_call.1} parent=1 // pred_check
      _
    $region55: #{tpu_custom_call.1} parent=1 // pred_check_branch
      %93 = sbr.rel (0) target = $region57
    $region56: #{tpu_custom_call.1} parent=1 // pred_region
      %s95 = ssub.s32 512, 512
      %96 = vsyncadd [#allocation9], %s95
      %s97 = sshll.u32 [#allocation10], 4
      %s98 = int_to_ptr.vmem [resolvable:$true] %s97
      %103 = dma.hbm_to_vmem [thread:$0]  %s13, 512, %s98, [#allocation9], 128, 128, 8
    $region57: #{tpu_custom_call.1} parent=1 // pred_fallthru
      _
    // Predicated region
    $region58: #{tpu_custom_call.1} parent=1 // pred_check
      _
    $region59: #{tpu_custom_call.1} parent=1 // pred_check_branch
      %105 = sbr.rel (0) target = $region61
    $region60: #{tpu_custom_call.1} parent=1 // pred_region
      _
    $region61: #{tpu_custom_call.1} parent=1 // pred_fallthru
      _
    // Predicated region
    $region62: #{tpu_custom_call.1} parent=1 // pred_check
      _
    $region63: #{tpu_custom_call.1} parent=1 // pred_check_branch
      %107 = sbr.rel (0) target = $region65
    $region64: #{tpu_custom_call.1} parent=1 // pred_region
      _
    $region65: #{tpu_custom_call.1} parent=1 // pred_fallthru
      _
    // Predicated region
    $region66: #{tpu_custom_call.1} parent=1 // pred_check
      _
    $region67: #{tpu_custom_call.1} parent=1 // pred_check_branch
      %109 = sbr.rel (0) target = $region69
    $region68: #{tpu_custom_call.1} parent=1 // pred_region
      _
    $region69: #{tpu_custom_call.1} parent=1 // pred_fallthru
      _
    // Predicated region
    $region70: #{tpu_custom_call.1} parent=1 // pred_check
      _
    $region71: #{tpu_custom_call.1} parent=1 // pred_check_branch
      %111 = sbr.rel (0) target = $region73
    $region72: #{tpu_custom_call.1} parent=1 // pred_region
      _
    $region73: #{tpu_custom_call.1} parent=1 // pred_fallthru
      _
    // Predicated region
    $region74: #{tpu_custom_call.1} parent=1 // pred_check
      _
    $region75: #{tpu_custom_call.1} parent=1 // pred_check_branch
      %113 = sbr.rel (0) target = $region77
    $region76: #{tpu_custom_call.1} parent=1 // pred_region
      _
    $region77: #{tpu_custom_call.1} parent=1 // pred_fallthru
      _
    // Predicated region
    $region78: #{tpu_custom_call.1} parent=1 // pred_check
      _
    $region79: #{tpu_custom_call.1} parent=1 // pred_check_branch
      %115 = sbr.rel (0) target = $region81
    $region80: #{tpu_custom_call.1} parent=1 // pred_region
      %116 = dma.done [#allocation3], 256
    $region81: #{tpu_custom_call.1} parent=1 // pred_fallthru
      _
    // Predicated region
    $region82: #{tpu_custom_call.1} parent=1 // pred_check
      _
    $region83: #{tpu_custom_call.1} parent=1 // pred_check_branch
      %118 = sbr.rel (0) target = $region85
    $region84: #{tpu_custom_call.1} parent=1 // pred_region
      %119 = dma.done [#allocation6], 256
    $region85: #{tpu_custom_call.1} parent=1 // pred_fallthru
      _
    // Predicated region
    $region86: #{tpu_custom_call.1} parent=1 // pred_check
      _
    $region87: #{tpu_custom_call.1} parent=1 // pred_check_branch
      %121 = sbr.rel (0) target = $region89
    $region88: #{tpu_custom_call.1} parent=1 // pred_region
      %122 = dma.done [#allocation6], 256
    $region89: #{tpu_custom_call.1} parent=1 // pred_fallthru
      _
    // Predicated region
    $region90: #{tpu_custom_call.1} parent=1 // pred_check
      _
    $region91: #{tpu_custom_call.1} parent=1 // pred_check_branch
      %124 = sbr.rel (0) target = $region93
    $region92: #{tpu_custom_call.1} parent=1 // pred_region
      %125 = dma.done [#allocation9], 16
    $region93: #{tpu_custom_call.1} parent=1 // pred_fallthru
      _
    // Predicated region
    $region94: #{tpu_custom_call.1} parent=1 // pred_check
      _
    $region95: #{tpu_custom_call.1} parent=1 // pred_check_branch
      %127 = sbr.rel (0) target = $region97
    $region96: #{tpu_custom_call.1} parent=1 // pred_region
      %128 = dma.done [#allocation9], 512
    $region97: #{tpu_custom_call.1} parent=1 // pred_fallthru
      _
    %v129 = vld [vmem:[%s0] sm:$0xff]
    %v130 = vld [vmem:[%s0 + $0x8] sm:$0xff]
    %v131 = vld [vmem:[%s0 + $0x10] sm:$0xff]
    %v132 = vld [vmem:[%s0 + $0x18] sm:$0xff]
    %v133 = vld [vmem:[%s0 + $0x20] sm:$0xff]
    %v134 = vld [vmem:[%s0 + $0x28] sm:$0xff]
    %v135 = vld [vmem:[%s0 + $0x30] sm:$0xff]
    %v136 = vld [vmem:[%s0 + $0x38] sm:$0xff]
    %v137 = vld [vmem:[#allocation2] sm:$0xff]
    %v138 = vld [vmem:[#allocation2 + $0x8] sm:$0xff]
    %v139 = vld [vmem:[%s4] sm:$0x1]
    %v141 = vlaneseq
    %v142 = vshrl.u32 %v141, 7
    %v143 = vsub.s32 0, %v142
    %v144 = vrot.slane %v139, %v143
    %vm146 = vcmask 130048
    %v148 = vsel %vm146, %v129, 0
    %v151 = vsel %vm146, %v130, 0
    %v154 = vsel %vm146, %v131, 0
    %v157 = vsel %vm146, %v132, 0
    %v160 = vsel %vm146, %v133, 0
    %v163 = vsel %vm146, %v134, 0
    %v166 = vsel %vm146, %v135, 0
    %v169 = vsel %vm146, %v136, 0
    %171 = vmatprep.subr.mxu0 0.0
    %172 = vmatpush1.msra.mxu0 %v137
    %173 = vmatprep.subr.mxu0 0.0
    %174 = vmatpush1.msra.mxu0 %v138
    %175 = vmatprep.subr.mxu0 0.0
    %176 = vmatpush1.msra.mxu0 0.0
    %177 = vmatprep.subr.mxu0 0.0
    %178 = vmatpush1.msra.mxu0 0.0
    %179 = vmatprep.subr.mxu0 0.0
    %180 = vmatpush1.msra.mxu0 0.0
    %181 = vmatprep.subr.mxu0 0.0
    %182 = vmatpush1.msra.mxu0 0.0
    %183 = vmatprep.subr.mxu0 0.0
    %184 = vmatpush1.msra.mxu0 0.0
    %185 = vmatprep.subr.mxu0 0.0
    %186 = vmatpush1.msra.mxu0 0.0
    %187 = vmatprep.subr.mxu0 0.0
    %188 = vmatpush1.msra.mxu0 0.0
    %189 = vmatprep.subr.mxu0 0.0
    %190 = vmatpush1.msra.mxu0 0.0
    %191 = vmatprep.subr.mxu0 0.0
    %192 = vmatpush1.msra.mxu0 0.0
    %193 = vmatprep.subr.mxu0 0.0
    %194 = vmatpush1.msra.mxu0 0.0
    %195 = vmatprep.subr.mxu0 0.0
    %196 = vmatpush1.msra.mxu0 0.0
    %197 = vmatprep.subr.mxu0 0.0
    %198 = vmatpush1.msra.mxu0 0.0
    %199 = vmatprep.subr.mxu0 0.0
    %200 = vmatpush1.msra.mxu0 0.0
    %201 = vmatprep.subr.mxu0 0.0
    %202 = vmatpush1.msra.mxu0 0.0
    %203 = vmatprep.subr.mxu0 0.0
    %204 = vmatpush1.msra.mxu0 0.0
    %205 = vmatprep.subr.mxu0 0.0
    %206 = vmatpush1.msra.mxu0 0.0
    %207 = vmatprep.subr.mxu0 0.0
    %208 = vmatpush1.msra.mxu0 0.0
    %209 = vmatprep.subr.mxu0 0.0
    %210 = vmatpush1.msra.mxu0 0.0
    %211 = vmatprep.subr.mxu0 0.0
    %212 = vmatpush1.msra.mxu0 0.0
    %213 = vmatprep.subr.mxu0 0.0
    %214 = vmatpush1.msra.mxu0 0.0
    %215 = vmatprep.subr.mxu0 0.0
    %216 = vmatpush1.msra.mxu0 0.0
    %217 = vmatprep.subr.mxu0 0.0
    %218 = vmatpush1.msra.mxu0 0.0
    %219 = vmatprep.subr.mxu0 0.0
    %220 = vmatpush1.msra.mxu0 0.0
    %221 = vmatprep.subr.mxu0 0.0
    %222 = vmatpush1.msra.mxu0 0.0
    %223 = vmatprep.subr.mxu0 0.0
    %224 = vmatpush1.msra.mxu0 0.0
    %225 = vmatprep.subr.mxu0 0.0
    %226 = vmatpush1.msra.mxu0 0.0
    %227 = vmatprep.subr.mxu0 0.0
    %228 = vmatpush1.msra.mxu0 0.0
    %229 = vmatprep.subr.mxu0 0.0
    %230 = vmatpush1.msra.mxu0 0.0
    %231 = vmatprep.subr.mxu0 0.0
    %232 = vmatpush1.msra.mxu0 0.0
    %233 = vmatprep.subr.mxu0 0.0
    %234 = vmatpush1.msra.mxu0 0.0
    %235 = vmatprep.mubr.f32.mxu0 0.0
    %236 = vmatmul.mubr.f32.gmra.mrb[0].mxu0 %v148
    %v237 = vpop.f32.mrb[0].mxu0
    %v238 = vadd.f32 %v144, %v237
    %v239 = vpop.f32.mrb[0].mxu0
    %240 = vmatprep.mubr.f32.mxu0 0.0
    %241 = vmatmul.mubr.f32.gmra.mrb[0].mxu0 %v151
    %v242 = vpop.f32.mrb[0].mxu0
    %v243 = vadd.f32 %v144, %v242
    %v244 = vpop.f32.mrb[0].mxu0
    %245 = vmatprep.mubr.f32.mxu0 0.0
    %246 = vmatmul.mubr.f32.gmra.mrb[0].mxu0 %v154
    %v247 = vpop.f32.mrb[0].mxu0
    %v248 = vadd.f32 %v144, %v247
    %v249 = vpop.f32.mrb[0].mxu0
    %250 = vmatprep.mubr.f32.mxu0 0.0
    %251 = vmatmul.mubr.f32.gmra.mrb[0].mxu0 %v157
    %v252 = vpop.f32.mrb[0].mxu0
    %v253 = vadd.f32 %v144, %v252
    %v254 = vpop.f32.mrb[0].mxu0
    %255 = vmatprep.mubr.f32.mxu0 0.0
    %256 = vmatmul.mubr.f32.gmra.mrb[0].mxu0 %v160
    %v257 = vpop.f32.mrb[0].mxu0
    %v258 = vadd.f32 %v144, %v257
    %v259 = vpop.f32.mrb[0].mxu0
    %260 = vmatprep.mubr.f32.mxu0 0.0
    %261 = vmatmul.mubr.f32.gmra.mrb[0].mxu0 %v163
    %v262 = vpop.f32.mrb[0].mxu0
    %v263 = vadd.f32 %v144, %v262
    %v264 = vpop.f32.mrb[0].mxu0
    %265 = vmatprep.mubr.f32.mxu0 0.0
    %266 = vmatmul.mubr.f32.gmra.mrb[0].mxu0 %v166
    %v267 = vpop.f32.mrb[0].mxu0
    %v268 = vadd.f32 %v144, %v267
    %v269 = vpop.f32.mrb[0].mxu0
    %270 = vmatprep.mubr.f32.mxu0 0.0
    %271 = vmatmul.mubr.f32.gmra.mrb[0].mxu0 %v169
    %v272 = vpop.f32.mrb[0].mxu0
    %v273 = vadd.f32 %v144, %v272
    %v274 = vpop.f32.mrb[0].mxu0
    %275 = vdwg.mxu0
    %v276 = vld [vmem:[#allocation5] sm:$0xff]
    %v277 = vld [vmem:[#allocation5 + $0x8] sm:$0xff]
    %v278 = vld [vmem:[%s5] sm:$0x1]
    %v280 = vlaneseq
    %v281 = vshrl.u32 %v280, 7
    %v282 = vsub.s32 0, %v281
    %v283 = vrot.slane %v278, %v282
    %285 = vmatprep.subr.mxu0 0.0
    %286 = vmatpush1.msra.mxu0 %v276
    %287 = vmatprep.subr.mxu0 0.0
    %288 = vmatpush1.msra.mxu0 %v277
    %289 = vmatprep.subr.mxu0 0.0
    %290 = vmatpush1.msra.mxu0 0.0
    %291 = vmatprep.subr.mxu0 0.0
    %292 = vmatpush1.msra.mxu0 0.0
    %293 = vmatprep.subr.mxu0 0.0
    %294 = vmatpush1.msra.mxu0 0.0
    %295 = vmatprep.subr.mxu0 0.0
    %296 = vmatpush1.msra.mxu0 0.0
    %297 = vmatprep.subr.mxu0 0.0
    %298 = vmatpush1.msra.mxu0 0.0
    %299 = vmatprep.subr.mxu0 0.0
    %300 = vmatpush1.msra.mxu0 0.0
    %301 = vmatprep.subr.mxu0 0.0
    %302 = vmatpush1.msra.mxu0 0.0
    %303 = vmatprep.subr.mxu0 0.0
    %304 = vmatpush1.msra.mxu0 0.0
    %305 = vmatprep.subr.mxu0 0.0
    %306 = vmatpush1.msra.mxu0 0.0
    %307 = vmatprep.subr.mxu0 0.0
    %308 = vmatpush1.msra.mxu0 0.0
    %309 = vmatprep.subr.mxu0 0.0
    %310 = vmatpush1.msra.mxu0 0.0
    %311 = vmatprep.subr.mxu0 0.0
    %312 = vmatpush1.msra.mxu0 0.0
    %313 = vmatprep.subr.mxu0 0.0
    %314 = vmatpush1.msra.mxu0 0.0
    %315 = vmatprep.subr.mxu0 0.0
    %316 = vmatpush1.msra.mxu0 0.0
    %317 = vmatprep.subr.mxu0 0.0
    %318 = vmatpush1.msra.mxu0 0.0
    %319 = vmatprep.subr.mxu0 0.0
    %320 = vmatpush1.msra.mxu0 0.0
    %321 = vmatprep.subr.mxu0 0.0
    %322 = vmatpush1.msra.mxu0 0.0
    %323 = vmatprep.subr.mxu0 0.0
    %324 = vmatpush1.msra.mxu0 0.0
    %325 = vmatprep.subr.mxu0 0.0
    %326 = vmatpush1.msra.mxu0 0.0
    %327 = vmatprep.subr.mxu0 0.0
    %328 = vmatpush1.msra.mxu0 0.0
    %329 = vmatprep.subr.mxu0 0.0
    %330 = vmatpush1.msra.mxu0 0.0
    %331 = vmatprep.subr.mxu0 0.0
    %332 = vmatpush1.msra.mxu0 0.0
    %333 = vmatprep.subr.mxu0 0.0
    %334 = vmatpush1.msra.mxu0 0.0
    %335 = vmatprep.subr.mxu0 0.0
    %336 = vmatpush1.msra.mxu0 0.0
    %337 = vmatprep.subr.mxu0 0.0
    %338 = vmatpush1.msra.mxu0 0.0
    %339 = vmatprep.subr.mxu0 0.0
    %340 = vmatpush1.msra.mxu0 0.0
    %341 = vmatprep.subr.mxu0 0.0
    %342 = vmatpush1.msra.mxu0 0.0
    %343 = vmatprep.subr.mxu0 0.0
    %344 = vmatpush1.msra.mxu0 0.0
    %345 = vmatprep.subr.mxu0 0.0
    %346 = vmatpush1.msra.mxu0 0.0
    %347 = vmatprep.subr.mxu0 0.0
    %348 = vmatpush1.msra.mxu0 0.0
    %349 = vmatprep.mubr.f32.mxu0 0.0
    %350 = vmatmul.mubr.f32.gmra.mrb[0].mxu0 %v148
    %v351 = vpop.f32.mrb[0].mxu0
    %v352 = vadd.f32 %v283, %v351
    %v353 = vpop.f32.mrb[0].mxu0
    %354 = vmatprep.mubr.f32.mxu0 0.0
    %355 = vmatmul.mubr.f32.gmra.mrb[0].mxu0 %v151
    %v356 = vpop.f32.mrb[0].mxu0
    %v357 = vadd.f32 %v283, %v356
    %v358 = vpop.f32.mrb[0].mxu0
    %359 = vmatprep.mubr.f32.mxu0 0.0
    %360 = vmatmul.mubr.f32.gmra.mrb[0].mxu0 %v154
    %v361 = vpop.f32.mrb[0].mxu0
    %v362 = vadd.f32 %v283, %v361
    %v363 = vpop.f32.mrb[0].mxu0
    %364 = vmatprep.mubr.f32.mxu0 0.0
    %365 = vmatmul.mubr.f32.gmra.mrb[0].mxu0 %v157
    %v366 = vpop.f32.mrb[0].mxu0
    %v367 = vadd.f32 %v283, %v366
    %v368 = vpop.f32.mrb[0].mxu0
    %369 = vmatprep.mubr.f32.mxu0 0.0
    %370 = vmatmul.mubr.f32.gmra.mrb[0].mxu0 %v160
    %v371 = vpop.f32.mrb[0].mxu0
    %v372 = vadd.f32 %v283, %v371
    %v373 = vpop.f32.mrb[0].mxu0
    %374 = vmatprep.mubr.f32.mxu0 0.0
    %375 = vmatmul.mubr.f32.gmra.mrb[0].mxu0 %v163
    %v376 = vpop.f32.mrb[0].mxu0
    %v377 = vadd.f32 %v283, %v376
    %v378 = vpop.f32.mrb[0].mxu0
    %379 = vmatprep.mubr.f32.mxu0 0.0
    %380 = vmatmul.mubr.f32.gmra.mrb[0].mxu0 %v166
    %v381 = vpop.f32.mrb[0].mxu0
    %v382 = vadd.f32 %v283, %v381
    %v383 = vpop.f32.mrb[0].mxu0
    %384 = vmatprep.mubr.f32.mxu0 0.0
    %385 = vmatmul.mubr.f32.gmra.mrb[0].mxu0 %v169
    %v386 = vpop.f32.mrb[0].mxu0
    %v387 = vadd.f32 %v283, %v386
    %v388 = vpop.f32.mrb[0].mxu0
    %389 = vdwg.mxu0
    %v390 = vld [vmem:[#allocation7] sm:$0xff]
    %v391 = vld [vmem:[#allocation7 + $0x8] sm:$0xff]
    %v392 = vld [vmem:[#allocation8] sm:$0x1]
    %v394 = vlaneseq
    %v395 = vshrl.u32 %v394, 7
    %v396 = vsub.s32 0, %v395
    %v397 = vrot.slane %v392, %v396
    %399 = vmatprep.subr.mxu0 0.0
    %400 = vmatpush1.msra.mxu0 %v390
    %401 = vmatprep.subr.mxu0 0.0
    %402 = vmatpush1.msra.mxu0 %v391
    %403 = vmatprep.subr.mxu0 0.0
    %404 = vmatpush1.msra.mxu0 0.0
    %405 = vmatprep.subr.mxu0 0.0
    %406 = vmatpush1.msra.mxu0 0.0
    %407 = vmatprep.subr.mxu0 0.0
    %408 = vmatpush1.msra.mxu0 0.0
    %409 = vmatprep.subr.mxu0 0.0
    %410 = vmatpush1.msra.mxu0 0.0
    %411 = vmatprep.subr.mxu0 0.0
    %412 = vmatpush1.msra.mxu0 0.0
    %413 = vmatprep.subr.mxu0 0.0
    %414 = vmatpush1.msra.mxu0 0.0
    %415 = vmatprep.subr.mxu0 0.0
    %416 = vmatpush1.msra.mxu0 0.0
    %417 = vmatprep.subr.mxu0 0.0
    %418 = vmatpush1.msra.mxu0 0.0
    %419 = vmatprep.subr.mxu0 0.0
    %420 = vmatpush1.msra.mxu0 0.0
    %421 = vmatprep.subr.mxu0 0.0
    %422 = vmatpush1.msra.mxu0 0.0
    %423 = vmatprep.subr.mxu0 0.0
    %424 = vmatpush1.msra.mxu0 0.0
    %425 = vmatprep.subr.mxu0 0.0
    %426 = vmatpush1.msra.mxu0 0.0
    %427 = vmatprep.subr.mxu0 0.0
    %428 = vmatpush1.msra.mxu0 0.0
    %429 = vmatprep.subr.mxu0 0.0
    %430 = vmatpush1.msra.mxu0 0.0
    %431 = vmatprep.subr.mxu0 0.0
    %432 = vmatpush1.msra.mxu0 0.0
    %433 = vmatprep.subr.mxu0 0.0
    %434 = vmatpush1.msra.mxu0 0.0
    %435 = vmatprep.subr.mxu0 0.0
    %436 = vmatpush1.msra.mxu0 0.0
    %437 = vmatprep.subr.mxu0 0.0
    %438 = vmatpush1.msra.mxu0 0.0
    %439 = vmatprep.subr.mxu0 0.0
    %440 = vmatpush1.msra.mxu0 0.0
    %441 = vmatprep.subr.mxu0 0.0
    %442 = vmatpush1.msra.mxu0 0.0
    %443 = vmatprep.subr.mxu0 0.0
    %444 = vmatpush1.msra.mxu0 0.0
    %445 = vmatprep.subr.mxu0 0.0
    %446 = vmatpush1.msra.mxu0 0.0
    %447 = vmatprep.subr.mxu0 0.0
    %448 = vmatpush1.msra.mxu0 0.0
    %449 = vmatprep.subr.mxu0 0.0
    %450 = vmatpush1.msra.mxu0 0.0
    %451 = vmatprep.subr.mxu0 0.0
    %452 = vmatpush1.msra.mxu0 0.0
    %453 = vmatprep.subr.mxu0 0.0
    %454 = vmatpush1.msra.mxu0 0.0
    %455 = vmatprep.subr.mxu0 0.0
    %456 = vmatpush1.msra.mxu0 0.0
    %457 = vmatprep.subr.mxu0 0.0
    %458 = vmatpush1.msra.mxu0 0.0
    %459 = vmatprep.subr.mxu0 0.0
    %460 = vmatpush1.msra.mxu0 0.0
    %461 = vmatprep.subr.mxu0 0.0
    %462 = vmatpush1.msra.mxu0 0.0
    %463 = vmatprep.mubr.f32.mxu0 0.0
    %464 = vmatmul.mubr.f32.gmra.mrb[0].mxu0 %v148
    %v465 = vpop.f32.mrb[0].mxu0
    %v466 = vadd.f32 %v397, %v465
    %v467 = vpop.f32.mrb[0].mxu0
    %468 = vmatprep.mubr.f32.mxu0 0.0
    %469 = vmatmul.mubr.f32.gmra.mrb[0].mxu0 %v151
    %v470 = vpop.f32.mrb[0].mxu0
    %v471 = vadd.f32 %v397, %v470
    %v472 = vpop.f32.mrb[0].mxu0
    %473 = vmatprep.mubr.f32.mxu0 0.0
    %474 = vmatmul.mubr.f32.gmra.mrb[0].mxu0 %v154
    %v475 = vpop.f32.mrb[0].mxu0
    %v476 = vadd.f32 %v397, %v475
    %v477 = vpop.f32.mrb[0].mxu0
    %478 = vmatprep.mubr.f32.mxu0 0.0
    %479 = vmatmul.mubr.f32.gmra.mrb[0].mxu0 %v157
    %v480 = vpop.f32.mrb[0].mxu0
    %v481 = vadd.f32 %v397, %v480
    %v482 = vpop.f32.mrb[0].mxu0
    %483 = vmatprep.mubr.f32.mxu0 0.0
    %484 = vmatmul.mubr.f32.gmra.mrb[0].mxu0 %v160
    %v485 = vpop.f32.mrb[0].mxu0
    %v486 = vadd.f32 %v397, %v485
    %v487 = vpop.f32.mrb[0].mxu0
    %488 = vmatprep.mubr.f32.mxu0 0.0
    %489 = vmatmul.mubr.f32.gmra.mrb[0].mxu0 %v163
    %v490 = vpop.f32.mrb[0].mxu0
    %v491 = vadd.f32 %v397, %v490
    %v492 = vpop.f32.mrb[0].mxu0
    %493 = vmatprep.mubr.f32.mxu0 0.0
    %494 = vmatmul.mubr.f32.gmra.mrb[0].mxu0 %v166
    %v495 = vpop.f32.mrb[0].mxu0
    %v496 = vadd.f32 %v397, %v495
    %v497 = vpop.f32.mrb[0].mxu0
    %498 = vmatprep.mubr.f32.mxu0 0.0
    %499 = vmatmul.mubr.f32.gmra.mrb[0].mxu0 %v169
    %v500 = vpop.f32.mrb[0].mxu0
    %v501 = vadd.f32 %v397, %v500
    %v502 = vpop.f32.mrb[0].mxu0
    %503 = vdwg.mxu0
    %v504 = vld [vmem:[%s7] sm:$0xff]
    %v505 = vld [vmem:[%s7 + $0x8] sm:$0xff]
    %v506 = vld [vmem:[%s7 + $0x10] sm:$0xff]
    %v507 = vld [vmem:[%s7 + $0x18] sm:$0xff]
    %v508 = vld [vmem:[%s8] sm:$0xff]
    %v509 = vld [vmem:[%s8 + $0x8] sm:$0xff]
    %v510 = vld [vmem:[%s8 + $0x10] sm:$0xff]
    %v511 = vld [vmem:[%s8 + $0x18] sm:$0xff]
    %v512 = vld [vmem:[%s9] sm:$0xff]
    %v513 = vld [vmem:[%s9 + $0x8] sm:$0xff]
    %v514 = vld [vmem:[%s9 + $0x10] sm:$0xff]
    %v515 = vld [vmem:[%s9 + $0x18] sm:$0xff]
    %v516 = vld [vmem:[%s10] sm:$0x1]
    %v517 = vld [vmem:[%s11] sm:$0x1]
    %v518 = vld [vmem:[%s12] sm:$0x1]
    %v520 = vlaneseq
    %v521 = vshrl.u32 %v520, 7
    %v522 = vsub.s32 0, %v521
    %v523 = vrot.slane %v516, %v522
    %vm525 = vcmask 261120
    %v527 = vsel %vm525, 0.0, 0
    %529 = vmatprep.subr.mxu0 0.0
    %530 = vmatpush1.msra.mxu0 %v504
    %531 = vmatprep.subr.mxu0 0.0
    %532 = vmatpush1.msra.mxu0 %v505
    %533 = vmatprep.subr.mxu0 0.0
    %534 = vmatpush1.msra.mxu0 %v506
    %535 = vmatprep.subr.mxu0 0.0
    %536 = vmatpush1.msra.mxu0 %v507
    %537 = vmatprep.subr.mxu0 0.0
    %538 = vmatpush1.msra.mxu0 0.0
    %539 = vmatprep.subr.mxu0 0.0
    %540 = vmatpush1.msra.mxu0 0.0
    %541 = vmatprep.subr.mxu0 0.0
    %542 = vmatpush1.msra.mxu0 0.0
    %543 = vmatprep.subr.mxu0 0.0
    %544 = vmatpush1.msra.mxu0 0.0
    %545 = vmatprep.subr.mxu0 0.0
    %546 = vmatpush1.msra.mxu0 0.0
    %547 = vmatprep.subr.mxu0 0.0
    %548 = vmatpush1.msra.mxu0 0.0
    %549 = vmatprep.subr.mxu0 0.0
    %550 = vmatpush1.msra.mxu0 0.0
    %551 = vmatprep.subr.mxu0 0.0
    %552 = vmatpush1.msra.mxu0 0.0
    %553 = vmatprep.subr.mxu0 0.0
    %554 = vmatpush1.msra.mxu0 0.0
    %555 = vmatprep.subr.mxu0 0.0
    %556 = vmatpush1.msra.mxu0 0.0
    %557 = vmatprep.subr.mxu0 0.0
    %558 = vmatpush1.msra.mxu0 0.0
    %559 = vmatprep.subr.mxu0 0.0
    %560 = vmatpush1.msra.mxu0 0.0
    %561 = vmatprep.subr.mxu0 0.0
    %562 = vmatpush1.msra.mxu0 0.0
    %563 = vmatprep.subr.mxu0 0.0
    %564 = vmatpush1.msra.mxu0 0.0
    %565 = vmatprep.subr.mxu0 0.0
    %566 = vmatpush1.msra.mxu0 0.0
    %567 = vmatprep.subr.mxu0 0.0
    %568 = vmatpush1.msra.mxu0 0.0
    %569 = vmatprep.subr.mxu0 0.0
    %570 = vmatpush1.msra.mxu0 0.0
    %571 = vmatprep.subr.mxu0 0.0
    %572 = vmatpush1.msra.mxu0 0.0
    %573 = vmatprep.subr.mxu0 0.0
    %574 = vmatpush1.msra.mxu0 0.0
    %575 = vmatprep.subr.mxu0 0.0
    %576 = vmatpush1.msra.mxu0 0.0
    %577 = vmatprep.subr.mxu0 0.0
    %578 = vmatpush1.msra.mxu0 0.0
    %579 = vmatprep.subr.mxu0 0.0
    %580 = vmatpush1.msra.mxu0 0.0
    %581 = vmatprep.subr.mxu0 0.0
    %582 = vmatpush1.msra.mxu0 0.0
    %583 = vmatprep.subr.mxu0 0.0
    %584 = vmatpush1.msra.mxu0 0.0
    %585 = vmatprep.subr.mxu0 0.0
    %586 = vmatpush1.msra.mxu0 0.0
    %587 = vmatprep.subr.mxu0 0.0
    %588 = vmatpush1.msra.mxu0 0.0
    %589 = vmatprep.subr.mxu0 0.0
    %590 = vmatpush1.msra.mxu0 0.0
    %591 = vmatprep.subr.mxu0 0.0
    %592 = vmatpush1.msra.mxu0 0.0
    %593 = vmatprep.mubr.f32.mxu0 0.0
    %594 = vmatmul.mubr.f32.gmra.mrb[0].mxu0 %v527
    %v595 = vpop.f32.mrb[0].mxu0
    %v596 = vadd.f32 %v523, %v595
    %v597 = vpop.f32.mrb[0].mxu0
    %598 = vdwg.mxu0
    %v600 = vlaneseq
    %v601 = vshrl.u32 %v600, 7
    %v602 = vsub.s32 0, %v601
    %v603 = vrot.slane %v517, %v602
    %605 = vmatprep.subr.mxu0 0.0
    %606 = vmatpush1.msra.mxu0 %v508
    %607 = vmatprep.subr.mxu0 0.0
    %608 = vmatpush1.msra.mxu0 %v509
    %609 = vmatprep.subr.mxu0 0.0
    %610 = vmatpush1.msra.mxu0 %v510
    %611 = vmatprep.subr.mxu0 0.0
    %612 = vmatpush1.msra.mxu0 %v511
    %613 = vmatprep.subr.mxu0 0.0
    %614 = vmatpush1.msra.mxu0 0.0
    %615 = vmatprep.subr.mxu0 0.0
    %616 = vmatpush1.msra.mxu0 0.0
    %617 = vmatprep.subr.mxu0 0.0
    %618 = vmatpush1.msra.mxu0 0.0
    %619 = vmatprep.subr.mxu0 0.0
    %620 = vmatpush1.msra.mxu0 0.0
    %621 = vmatprep.subr.mxu0 0.0
    %622 = vmatpush1.msra.mxu0 0.0
    %623 = vmatprep.subr.mxu0 0.0
    %624 = vmatpush1.msra.mxu0 0.0
    %625 = vmatprep.subr.mxu0 0.0
    %626 = vmatpush1.msra.mxu0 0.0
    %627 = vmatprep.subr.mxu0 0.0
    %628 = vmatpush1.msra.mxu0 0.0
    %629 = vmatprep.subr.mxu0 0.0
    %630 = vmatpush1.msra.mxu0 0.0
    %631 = vmatprep.subr.mxu0 0.0
    %632 = vmatpush1.msra.mxu0 0.0
    %633 = vmatprep.subr.mxu0 0.0
    %634 = vmatpush1.msra.mxu0 0.0
    %635 = vmatprep.subr.mxu0 0.0
    %636 = vmatpush1.msra.mxu0 0.0
    %637 = vmatprep.subr.mxu0 0.0
    %638 = vmatpush1.msra.mxu0 0.0
    %639 = vmatprep.subr.mxu0 0.0
    %640 = vmatpush1.msra.mxu0 0.0
    %641 = vmatprep.subr.mxu0 0.0
    %642 = vmatpush1.msra.mxu0 0.0
    %643 = vmatprep.subr.mxu0 0.0
    %644 = vmatpush1.msra.mxu0 0.0
    %645 = vmatprep.subr.mxu0 0.0
    %646 = vmatpush1.msra.mxu0 0.0
    %647 = vmatprep.subr.mxu0 0.0
    %648 = vmatpush1.msra.mxu0 0.0
    %649 = vmatprep.subr.mxu0 0.0
    %650 = vmatpush1.msra.mxu0 0.0
    %651 = vmatprep.subr.mxu0 0.0
    %652 = vmatpush1.msra.mxu0 0.0
    %653 = vmatprep.subr.mxu0 0.0
    %654 = vmatpush1.msra.mxu0 0.0
    %655 = vmatprep.subr.mxu0 0.0
    %656 = vmatpush1.msra.mxu0 0.0
    %657 = vmatprep.subr.mxu0 0.0
    %658 = vmatpush1.msra.mxu0 0.0
    %659 = vmatprep.subr.mxu0 0.0
    %660 = vmatpush1.msra.mxu0 0.0
    %661 = vmatprep.subr.mxu0 0.0
    %662 = vmatpush1.msra.mxu0 0.0
    %663 = vmatprep.subr.mxu0 0.0
    %664 = vmatpush1.msra.mxu0 0.0
    %665 = vmatprep.subr.mxu0 0.0
    %666 = vmatpush1.msra.mxu0 0.0
    %667 = vmatprep.subr.mxu0 0.0
    %668 = vmatpush1.msra.mxu0 0.0
    %669 = vmatprep.mubr.f32.mxu0 0.0
    %670 = vmatmul.mubr.f32.gmra.mrb[0].mxu0 %v527
    %v671 = vpop.f32.mrb[0].mxu0
    %v672 = vadd.f32 %v603, %v671
    %v673 = vpop.f32.mrb[0].mxu0
    %674 = vdwg.mxu0
    %v676 = vlaneseq
    %v677 = vshrl.u32 %v676, 7
    %v678 = vsub.s32 0, %v677
    %v679 = vrot.slane %v518, %v678
    %681 = vmatprep.subr.mxu0 0.0
    %682 = vmatpush1.msra.mxu0 %v512
    %683 = vmatprep.subr.mxu0 0.0
    %684 = vmatpush1.msra.mxu0 %v513
    %685 = vmatprep.subr.mxu0 0.0
    %686 = vmatpush1.msra.mxu0 %v514
    %687 = vmatprep.subr.mxu0 0.0
    %688 = vmatpush1.msra.mxu0 %v515
    %689 = vmatprep.subr.mxu0 0.0
    %690 = vmatpush1.msra.mxu0 0.0
    %691 = vmatprep.subr.mxu0 0.0
    %692 = vmatpush1.msra.mxu0 0.0
    %693 = vmatprep.subr.mxu0 0.0
    %694 = vmatpush1.msra.mxu0 0.0
    %695 = vmatprep.subr.mxu0 0.0
    %696 = vmatpush1.msra.mxu0 0.0
    %697 = vmatprep.subr.mxu0 0.0
    %698 = vmatpush1.msra.mxu0 0.0
    %699 = vmatprep.subr.mxu0 0.0
    %700 = vmatpush1.msra.mxu0 0.0
    %701 = vmatprep.subr.mxu0 0.0
    %702 = vmatpush1.msra.mxu0 0.0
    %703 = vmatprep.subr.mxu0 0.0
    %704 = vmatpush1.msra.mxu0 0.0
    %705 = vmatprep.subr.mxu0 0.0
    %706 = vmatpush1.msra.mxu0 0.0
    %707 = vmatprep.subr.mxu0 0.0
    %708 = vmatpush1.msra.mxu0 0.0
    %709 = vmatprep.subr.mxu0 0.0
    %710 = vmatpush1.msra.mxu0 0.0
    %711 = vmatprep.subr.mxu0 0.0
    %712 = vmatpush1.msra.mxu0 0.0
    %713 = vmatprep.subr.mxu0 0.0
    %714 = vmatpush1.msra.mxu0 0.0
    %715 = vmatprep.subr.mxu0 0.0
    %716 = vmatpush1.msra.mxu0 0.0
    %717 = vmatprep.subr.mxu0 0.0
    %718 = vmatpush1.msra.mxu0 0.0
    %719 = vmatprep.subr.mxu0 0.0
    %720 = vmatpush1.msra.mxu0 0.0
    %721 = vmatprep.subr.mxu0 0.0
    %722 = vmatpush1.msra.mxu0 0.0
    %723 = vmatprep.subr.mxu0 0.0
    %724 = vmatpush1.msra.mxu0 0.0
    %725 = vmatprep.subr.mxu0 0.0
    %726 = vmatpush1.msra.mxu0 0.0
    %727 = vmatprep.subr.mxu0 0.0
    %728 = vmatpush1.msra.mxu0 0.0
    %729 = vmatprep.subr.mxu0 0.0
    %730 = vmatpush1.msra.mxu0 0.0
    %731 = vmatprep.subr.mxu0 0.0
    %732 = vmatpush1.msra.mxu0 0.0
    %733 = vmatprep.subr.mxu0 0.0
    %734 = vmatpush1.msra.mxu0 0.0
    %735 = vmatprep.subr.mxu0 0.0
    %736 = vmatpush1.msra.mxu0 0.0
    %737 = vmatprep.subr.mxu0 0.0
    %738 = vmatpush1.msra.mxu0 0.0
    %739 = vmatprep.subr.mxu0 0.0
    %740 = vmatpush1.msra.mxu0 0.0
    %741 = vmatprep.subr.mxu0 0.0
    %742 = vmatpush1.msra.mxu0 0.0
    %743 = vmatprep.subr.mxu0 0.0
    %744 = vmatpush1.msra.mxu0 0.0
    %745 = vmatprep.mubr.f32.mxu0 0.0
    %746 = vmatmul.mubr.f32.gmra.mrb[0].mxu0 %v527
    %v747 = vpop.f32.mrb[0].mxu0
    %v748 = vadd.f32 %v679, %v747
    %v749 = vpop.f32.mrb[0].mxu0
    %750 = vdwg.mxu0
    %v751 = vadd.f32 %v238, %v596
    %v752 = vxor.u32 %v751, 2147483648
    %v753 = vmul.f32 %v752, 1.442695
    %v754 = vpow.pop %v753
    %v755 = vadd.f32 %v754, 1.0
    %v756 = vrcp.pop %v755
    %v757 = vmul.f32 1.0, %v756
    %v758 = vadd.f32 %v352, %v672
    %v759 = vxor.u32 %v758, 2147483648
    %v760 = vmul.f32 %v759, 1.442695
    %v761 = vpow.pop %v760
    %v762 = vadd.f32 %v761, 1.0
    %v763 = vrcp.pop %v762
    %v764 = vmul.f32 1.0, %v763
    %v765 = vmul.f32 %v757, %v748
    %v766 = vadd.f32 %v466, %v765
    %v767 = vtanh.pop %v766
    %v768 = vsub.f32 1.0, %v764
    %v769 = vmul.f32 %v768, %v767
    %v770 = vmul.f32 %v764, 0.0
    %v771 = vadd.f32 %v769, %v770
    %v773 = vsel %vm525, %v771, 0
    %775 = vmatprep.subr.mxu0 0.0
    %776 = vmatpush1.msra.mxu0 %v504
    %777 = vmatprep.subr.mxu0 0.0
    %778 = vmatpush1.msra.mxu0 %v505
    %779 = vmatprep.subr.mxu0 0.0
    %780 = vmatpush1.msra.mxu0 %v506
    %781 = vmatprep.subr.mxu0 0.0
    %782 = vmatpush1.msra.mxu0 %v507
    %783 = vmatprep.subr.mxu0 0.0
    %784 = vmatpush1.msra.mxu0 0.0
    %785 = vmatprep.subr.mxu0 0.0
    %786 = vmatpush1.msra.mxu0 0.0
    %787 = vmatprep.subr.mxu0 0.0
    %788 = vmatpush1.msra.mxu0 0.0
    %789 = vmatprep.subr.mxu0 0.0
    %790 = vmatpush1.msra.mxu0 0.0
    %791 = vmatprep.subr.mxu0 0.0
    %792 = vmatpush1.msra.mxu0 0.0
    %793 = vmatprep.subr.mxu0 0.0
    %794 = vmatpush1.msra.mxu0 0.0
    %795 = vmatprep.subr.mxu0 0.0
    %796 = vmatpush1.msra.mxu0 0.0
    %797 = vmatprep.subr.mxu0 0.0
    %798 = vmatpush1.msra.mxu0 0.0
    %799 = vmatprep.subr.mxu0 0.0
    %800 = vmatpush1.msra.mxu0 0.0
    %801 = vmatprep.subr.mxu0 0.0
    %802 = vmatpush1.msra.mxu0 0.0
    %803 = vmatprep.subr.mxu0 0.0
    %804 = vmatpush1.msra.mxu0 0.0
    %805 = vmatprep.subr.mxu0 0.0
    %806 = vmatpush1.msra.mxu0 0.0
    %807 = vmatprep.subr.mxu0 0.0
    %808 = vmatpush1.msra.mxu0 0.0
    %809 = vmatprep.subr.mxu0 0.0
    %810 = vmatpush1.msra.mxu0 0.0
    %811 = vmatprep.subr.mxu0 0.0
    %812 = vmatpush1.msra.mxu0 0.0
    %813 = vmatprep.subr.mxu0 0.0
    %814 = vmatpush1.msra.mxu0 0.0
    %815 = vmatprep.subr.mxu0 0.0
    %816 = vmatpush1.msra.mxu0 0.0
    %817 = vmatprep.subr.mxu0 0.0
    %818 = vmatpush1.msra.mxu0 0.0
    %819 = vmatprep.subr.mxu0 0.0
    %820 = vmatpush1.msra.mxu0 0.0
    %821 = vmatprep.subr.mxu0 0.0
    %822 = vmatpush1.msra.mxu0 0.0
    %823 = vmatprep.subr.mxu0 0.0
    %824 = vmatpush1.msra.mxu0 0.0
    %825 = vmatprep.subr.mxu0 0.0
    %826 = vmatpush1.msra.mxu0 0.0
    %827 = vmatprep.subr.mxu0 0.0
    %828 = vmatpush1.msra.mxu0 0.0
    %829 = vmatprep.subr.mxu0 0.0
    %830 = vmatpush1.msra.mxu0 0.0
    %831 = vmatprep.subr.mxu0 0.0
    %832 = vmatpush1.msra.mxu0 0.0
    %833 = vmatprep.subr.mxu0 0.0
    %834 = vmatpush1.msra.mxu0 0.0
    %835 = vmatprep.subr.mxu0 0.0
    %836 = vmatpush1.msra.mxu0 0.0
    %837 = vmatprep.subr.mxu0 0.0
    %838 = vmatpush1.msra.mxu0 0.0
    %839 = vmatprep.mubr.f32.mxu0 0.0
    %840 = vmatmul.mubr.f32.gmra.mrb[0].mxu0 %v773
    %v841 = vpop.f32.mrb[0].mxu0
    %v842 = vadd.f32 %v523, %v841
    %v843 = vpop.f32.mrb[0].mxu0
    %844 = vdwg.mxu0
    %845 = vmatprep.subr.mxu0 0.0
    %846 = vmatpush1.msra.mxu0 %v508
    %847 = vmatprep.subr.mxu0 0.0
    %848 = vmatpush1.msra.mxu0 %v509
    %849 = vmatprep.subr.mxu0 0.0
    %850 = vmatpush1.msra.mxu0 %v510
    %851 = vmatprep.subr.mxu0 0.0
    %852 = vmatpush1.msra.mxu0 %v511
    %853 = vmatprep.subr.mxu0 0.0
    %854 = vmatpush1.msra.mxu0 0.0
    %855 = vmatprep.subr.mxu0 0.0
    %856 = vmatpush1.msra.mxu0 0.0
    %857 = vmatprep.subr.mxu0 0.0
    %858 = vmatpush1.msra.mxu0 0.0
    %859 = vmatprep.subr.mxu0 0.0
    %860 = vmatpush1.msra.mxu0 0.0
    %861 = vmatprep.subr.mxu0 0.0
    %862 = vmatpush1.msra.mxu0 0.0
    %863 = vmatprep.subr.mxu0 0.0
    %864 = vmatpush1.msra.mxu0 0.0
    %865 = vmatprep.subr.mxu0 0.0
    %866 = vmatpush1.msra.mxu0 0.0
    %867 = vmatprep.subr.mxu0 0.0
    %868 = vmatpush1.msra.mxu0 0.0
    %869 = vmatprep.subr.mxu0 0.0
    %870 = vmatpush1.msra.mxu0 0.0
    %871 = vmatprep.subr.mxu0 0.0
    %872 = vmatpush1.msra.mxu0 0.0
    %873 = vmatprep.subr.mxu0 0.0
    %874 = vmatpush1.msra.mxu0 0.0
    %875 = vmatprep.subr.mxu0 0.0
    %876 = vmatpush1.msra.mxu0 0.0
    %877 = vmatprep.subr.mxu0 0.0
    %878 = vmatpush1.msra.mxu0 0.0
    %879 = vmatprep.subr.mxu0 0.0
    %880 = vmatpush1.msra.mxu0 0.0
    %881 = vmatprep.subr.mxu0 0.0
    %882 = vmatpush1.msra.mxu0 0.0
    %883 = vmatprep.subr.mxu0 0.0
    %884 = vmatpush1.msra.mxu0 0.0
    %885 = vmatprep.subr.mxu0 0.0
    %886 = vmatpush1.msra.mxu0 0.0
    %887 = vmatprep.subr.mxu0 0.0
    %888 = vmatpush1.msra.mxu0 0.0
    %889 = vmatprep.subr.mxu0 0.0
    %890 = vmatpush1.msra.mxu0 0.0
    %891 = vmatprep.subr.mxu0 0.0
    %892 = vmatpush1.msra.mxu0 0.0
    %893 = vmatprep.subr.mxu0 0.0
    %894 = vmatpush1.msra.mxu0 0.0
    %895 = vmatprep.subr.mxu0 0.0
    %896 = vmatpush1.msra.mxu0 0.0
    %897 = vmatprep.subr.mxu0 0.0
    %898 = vmatpush1.msra.mxu0 0.0
    %899 = vmatprep.subr.mxu0 0.0
    %900 = vmatpush1.msra.mxu0 0.0
    %901 = vmatprep.subr.mxu0 0.0
    %902 = vmatpush1.msra.mxu0 0.0
    %903 = vmatprep.subr.mxu0 0.0
    %904 = vmatpush1.msra.mxu0 0.0
    %905 = vmatprep.subr.mxu0 0.0
    %906 = vmatpush1.msra.mxu0 0.0
    %907 = vmatprep.subr.mxu0 0.0
    %908 = vmatpush1.msra.mxu0 0.0
    %909 = vmatprep.mubr.f32.mxu0 0.0
    %910 = vmatmul.mubr.f32.gmra.mrb[0].mxu0 %v773
    %v911 = vpop.f32.mrb[0].mxu0
    %v912 = vadd.f32 %v603, %v911
    %v913 = vpop.f32.mrb[0].mxu0
    %914 = vdwg.mxu0
    %915 = vmatprep.subr.mxu0 0.0
    %916 = vmatpush1.msra.mxu0 %v512
    %917 = vmatprep.subr.mxu0 0.0
    %918 = vmatpush1.msra.mxu0 %v513
    %919 = vmatprep.subr.mxu0 0.0
    %920 = vmatpush1.msra.mxu0 %v514
    %921 = vmatprep.subr.mxu0 0.0
    %922 = vmatpush1.msra.mxu0 %v515
    %923 = vmatprep.subr.mxu0 0.0
    %924 = vmatpush1.msra.mxu0 0.0
    %925 = vmatprep.subr.mxu0 0.0
    %926 = vmatpush1.msra.mxu0 0.0
    %927 = vmatprep.subr.mxu0 0.0
    %928 = vmatpush1.msra.mxu0 0.0
    %929 = vmatprep.subr.mxu0 0.0
    %930 = vmatpush1.msra.mxu0 0.0
    %931 = vmatprep.subr.mxu0 0.0
    %932 = vmatpush1.msra.mxu0 0.0
    %933 = vmatprep.subr.mxu0 0.0
    %934 = vmatpush1.msra.mxu0 0.0
    %935 = vmatprep.subr.mxu0 0.0
    %936 = vmatpush1.msra.mxu0 0.0
    %937 = vmatprep.subr.mxu0 0.0
    %938 = vmatpush1.msra.mxu0 0.0
    %939 = vmatprep.subr.mxu0 0.0
    %940 = vmatpush1.msra.mxu0 0.0
    %941 = vmatprep.subr.mxu0 0.0
    %942 = vmatpush1.msra.mxu0 0.0
    %943 = vmatprep.subr.mxu0 0.0
    %944 = vmatpush1.msra.mxu0 0.0
    %945 = vmatprep.subr.mxu0 0.0
    %946 = vmatpush1.msra.mxu0 0.0
    %947 = vmatprep.subr.mxu0 0.0
    %948 = vmatpush1.msra.mxu0 0.0
    %949 = vmatprep.subr.mxu0 0.0
    %950 = vmatpush1.msra.mxu0 0.0
    %951 = vmatprep.subr.mxu0 0.0
    %952 = vmatpush1.msra.mxu0 0.0
    %953 = vmatprep.subr.mxu0 0.0
    %954 = vmatpush1.msra.mxu0 0.0
    %955 = vmatprep.subr.mxu0 0.0
    %956 = vmatpush1.msra.mxu0 0.0
    %957 = vmatprep.subr.mxu0 0.0
    %958 = vmatpush1.msra.mxu0 0.0
    %959 = vmatprep.subr.mxu0 0.0
    %960 = vmatpush1.msra.mxu0 0.0
    %961 = vmatprep.subr.mxu0 0.0
    %962 = vmatpush1.msra.mxu0 0.0
    %963 = vmatprep.subr.mxu0 0.0
    %964 = vmatpush1.msra.mxu0 0.0
    %965 = vmatprep.subr.mxu0 0.0
    %966 = vmatpush1.msra.mxu0 0.0
    %967 = vmatprep.subr.mxu0 0.0
    %968 = vmatpush1.msra.mxu0 0.0
    %969 = vmatprep.subr.mxu0 0.0
    %970 = vmatpush1.msra.mxu0 0.0
    %971 = vmatprep.subr.mxu0 0.0
    %972 = vmatpush1.msra.mxu0 0.0
    %973 = vmatprep.subr.mxu0 0.0
    %974 = vmatpush1.msra.mxu0 0.0
    %975 = vmatprep.subr.mxu0 0.0
    %976 = vmatpush1.msra.mxu0 0.0
    %977 = vmatprep.subr.mxu0 0.0
    %978 = vmatpush1.msra.mxu0 0.0
    %979 = vmatprep.mubr.f32.mxu0 0.0
    %980 = vmatmul.mubr.f32.gmra.mrb[0].mxu0 %v773
    %v981 = vpop.f32.mrb[0].mxu0
    %v982 = vadd.f32 %v679, %v981
    %v983 = vpop.f32.mrb[0].mxu0
    %984 = vdwg.mxu0
    %v985 = vadd.f32 %v243, %v842
    %v986 = vxor.u32 %v985, 2147483648
    %v987 = vmul.f32 %v986, 1.442695
    %v988 = vpow.pop %v987
    %v989 = vadd.f32 %v988, 1.0
    %v990 = vrcp.pop %v989
    %v991 = vmul.f32 1.0, %v990
    %v992 = vadd.f32 %v357, %v912
    %v993 = vxor.u32 %v992, 2147483648
    %v994 = vmul.f32 %v993, 1.442695
    %v995 = vpow.pop %v994
    %v996 = vadd.f32 %v995, 1.0
    %v997 = vrcp.pop %v996
    %v998 = vmul.f32 1.0, %v997
    %v999 = vmul.f32 %v991, %v982
    %v1000 = vadd.f32 %v471, %v999
    %v1001 = vtanh.pop %v1000
    %v1002 = vsub.f32 1.0, %v998
    %v1003 = vmul.f32 %v1002, %v1001
    %v1004 = vmul.f32 %v998, %v771
    %v1005 = vadd.f32 %v1003, %v1004
    %v1007 = vsel %vm525, %v1005, 0
    %1009 = vmatprep.subr.mxu0 0.0
    %1010 = vmatpush1.msra.mxu0 %v504
    %1011 = vmatprep.subr.mxu0 0.0
    %1012 = vmatpush1.msra.mxu0 %v505
    %1013 = vmatprep.subr.mxu0 0.0
    %1014 = vmatpush1.msra.mxu0 %v506
    %1015 = vmatprep.subr.mxu0 0.0
    %1016 = vmatpush1.msra.mxu0 %v507
    %1017 = vmatprep.subr.mxu0 0.0
    %1018 = vmatpush1.msra.mxu0 0.0
    %1019 = vmatprep.subr.mxu0 0.0
    %1020 = vmatpush1.msra.mxu0 0.0
    %1021 = vmatprep.subr.mxu0 0.0
    %1022 = vmatpush1.msra.mxu0 0.0
    %1023 = vmatprep.subr.mxu0 0.0
    %1024 = vmatpush1.msra.mxu0 0.0
    %1025 = vmatprep.subr.mxu0 0.0
    %1026 = vmatpush1.msra.mxu0 0.0
    %1027 = vmatprep.subr.mxu0 0.0
    %1028 = vmatpush1.msra.mxu0 0.0
    %1029 = vmatprep.subr.mxu0 0.0
    %1030 = vmatpush1.msra.mxu0 0.0
    %1031 = vmatprep.subr.mxu0 0.0
    %1032 = vmatpush1.msra.mxu0 0.0
    %1033 = vmatprep.subr.mxu0 0.0
    %1034 = vmatpush1.msra.mxu0 0.0
    %1035 = vmatprep.subr.mxu0 0.0
    %1036 = vmatpush1.msra.mxu0 0.0
    %1037 = vmatprep.subr.mxu0 0.0
    %1038 = vmatpush1.msra.mxu0 0.0
    %1039 = vmatprep.subr.mxu0 0.0
    %1040 = vmatpush1.msra.mxu0 0.0
    %1041 = vmatprep.subr.mxu0 0.0
    %1042 = vmatpush1.msra.mxu0 0.0
    %1043 = vmatprep.subr.mxu0 0.0
    %1044 = vmatpush1.msra.mxu0 0.0
    %1045 = vmatprep.subr.mxu0 0.0
    %1046 = vmatpush1.msra.mxu0 0.0
    %1047 = vmatprep.subr.mxu0 0.0
    %1048 = vmatpush1.msra.mxu0 0.0
    %1049 = vmatprep.subr.mxu0 0.0
    %1050 = vmatpush1.msra.mxu0 0.0
    %1051 = vmatprep.subr.mxu0 0.0
    %1052 = vmatpush1.msra.mxu0 0.0
    %1053 = vmatprep.subr.mxu0 0.0
    %1054 = vmatpush1.msra.mxu0 0.0
    %1055 = vmatprep.subr.mxu0 0.0
    %1056 = vmatpush1.msra.mxu0 0.0
    %1057 = vmatprep.subr.mxu0 0.0
    %1058 = vmatpush1.msra.mxu0 0.0
    %1059 = vmatprep.subr.mxu0 0.0
    %1060 = vmatpush1.msra.mxu0 0.0
    %1061 = vmatprep.subr.mxu0 0.0
    %1062 = vmatpush1.msra.mxu0 0.0
    %1063 = vmatprep.subr.mxu0 0.0
    %1064 = vmatpush1.msra.mxu0 0.0
    %1065 = vmatprep.subr.mxu0 0.0
    %1066 = vmatpush1.msra.mxu0 0.0
    %1067 = vmatprep.subr.mxu0 0.0
    %1068 = vmatpush1.msra.mxu0 0.0
    %1069 = vmatprep.subr.mxu0 0.0
    %1070 = vmatpush1.msra.mxu0 0.0
    %1071 = vmatprep.subr.mxu0 0.0
    %1072 = vmatpush1.msra.mxu0 0.0
    %1073 = vmatprep.mubr.f32.mxu0 0.0
    %1074 = vmatmul.mubr.f32.gmra.mrb[0].mxu0 %v1007
    %v1075 = vpop.f32.mrb[0].mxu0
    %v1076 = vadd.f32 %v523, %v1075
    %v1077 = vpop.f32.mrb[0].mxu0
    %1078 = vdwg.mxu0
    %1079 = vmatprep.subr.mxu0 0.0
    %1080 = vmatpush1.msra.mxu0 %v508
    %1081 = vmatprep.subr.mxu0 0.0
    %1082 = vmatpush1.msra.mxu0 %v509
    %1083 = vmatprep.subr.mxu0 0.0
    %1084 = vmatpush1.msra.mxu0 %v510
    %1085 = vmatprep.subr.mxu0 0.0
    %1086 = vmatpush1.msra.mxu0 %v511
    %1087 = vmatprep.subr.mxu0 0.0
    %1088 = vmatpush1.msra.mxu0 0.0
    %1089 = vmatprep.subr.mxu0 0.0
    %1090 = vmatpush1.msra.mxu0 0.0
    %1091 = vmatprep.subr.mxu0 0.0
    %1092 = vmatpush1.msra.mxu0 0.0
    %1093 = vmatprep.subr.mxu0 0.0
    %1094 = vmatpush1.msra.mxu0 0.0
    %1095 = vmatprep.subr.mxu0 0.0
    %1096 = vmatpush1.msra.mxu0 0.0
    %1097 = vmatprep.subr.mxu0 0.0
    %1098 = vmatpush1.msra.mxu0 0.0
    %1099 = vmatprep.subr.mxu0 0.0
    %1100 = vmatpush1.msra.mxu0 0.0
    %1101 = vmatprep.subr.mxu0 0.0
    %1102 = vmatpush1.msra.mxu0 0.0
    %1103 = vmatprep.subr.mxu0 0.0
    %1104 = vmatpush1.msra.mxu0 0.0
    %1105 = vmatprep.subr.mxu0 0.0
    %1106 = vmatpush1.msra.mxu0 0.0
    %1107 = vmatprep.subr.mxu0 0.0
    %1108 = vmatpush1.msra.mxu0 0.0
    %1109 = vmatprep.subr.mxu0 0.0
    %1110 = vmatpush1.msra.mxu0 0.0
    %1111 = vmatprep.subr.mxu0 0.0
    %1112 = vmatpush1.msra.mxu0 0.0
    %1113 = vmatprep.subr.mxu0 0.0
    %1114 = vmatpush1.msra.mxu0 0.0
    %1115 = vmatprep.subr.mxu0 0.0
    %1116 = vmatpush1.msra.mxu0 0.0
    %1117 = vmatprep.subr.mxu0 0.0
    %1118 = vmatpush1.msra.mxu0 0.0
    %1119 = vmatprep.subr.mxu0 0.0
    %1120 = vmatpush1.msra.mxu0 0.0
    %1121 = vmatprep.subr.mxu0 0.0
    %1122 = vmatpush1.msra.mxu0 0.0
    %1123 = vmatprep.subr.mxu0 0.0
    %1124 = vmatpush1.msra.mxu0 0.0
    %1125 = vmatprep.subr.mxu0 0.0
    %1126 = vmatpush1.msra.mxu0 0.0
    %1127 = vmatprep.subr.mxu0 0.0
    %1128 = vmatpush1.msra.mxu0 0.0
    %1129 = vmatprep.subr.mxu0 0.0
    %1130 = vmatpush1.msra.mxu0 0.0
    %1131 = vmatprep.subr.mxu0 0.0
    %1132 = vmatpush1.msra.mxu0 0.0
    %1133 = vmatprep.subr.mxu0 0.0
    %1134 = vmatpush1.msra.mxu0 0.0
    %1135 = vmatprep.subr.mxu0 0.0
    %1136 = vmatpush1.msra.mxu0 0.0
    %1137 = vmatprep.subr.mxu0 0.0
    %1138 = vmatpush1.msra.mxu0 0.0
    %1139 = vmatprep.subr.mxu0 0.0
    %1140 = vmatpush1.msra.mxu0 0.0
    %1141 = vmatprep.subr.mxu0 0.0
    %1142 = vmatpush1.msra.mxu0 0.0
    %1143 = vmatprep.mubr.f32.mxu0 0.0
    %1144 = vmatmul.mubr.f32.gmra.mrb[0].mxu0 %v1007
    %v1145 = vpop.f32.mrb[0].mxu0
    %v1146 = vadd.f32 %v603, %v1145
    %v1147 = vpop.f32.mrb[0].mxu0
    %1148 = vdwg.mxu0
    %1149 = vmatprep.subr.mxu0 0.0
    %1150 = vmatpush1.msra.mxu0 %v512
    %1151 = vmatprep.subr.mxu0 0.0
    %1152 = vmatpush1.msra.mxu0 %v513
    %1153 = vmatprep.subr.mxu0 0.0
    %1154 = vmatpush1.msra.mxu0 %v514
    %1155 = vmatprep.subr.mxu0 0.0
    %1156 = vmatpush1.msra.mxu0 %v515
    %1157 = vmatprep.subr.mxu0 0.0
    %1158 = vmatpush1.msra.mxu0 0.0
    %1159 = vmatprep.subr.mxu0 0.0
    %1160 = vmatpush1.msra.mxu0 0.0
    %1161 = vmatprep.subr.mxu0 0.0
    %1162 = vmatpush1.msra.mxu0 0.0
    %1163 = vmatprep.subr.mxu0 0.0
    %1164 = vmatpush1.msra.mxu0 0.0
    %1165 = vmatprep.subr.mxu0 0.0
    %1166 = vmatpush1.msra.mxu0 0.0
    %1167 = vmatprep.subr.mxu0 0.0
    %1168 = vmatpush1.msra.mxu0 0.0
    %1169 = vmatprep.subr.mxu0 0.0
    %1170 = vmatpush1.msra.mxu0 0.0
    %1171 = vmatprep.subr.mxu0 0.0
    %1172 = vmatpush1.msra.mxu0 0.0
    %1173 = vmatprep.subr.mxu0 0.0
    %1174 = vmatpush1.msra.mxu0 0.0
    %1175 = vmatprep.subr.mxu0 0.0
    %1176 = vmatpush1.msra.mxu0 0.0
    %1177 = vmatprep.subr.mxu0 0.0
    %1178 = vmatpush1.msra.mxu0 0.0
    %1179 = vmatprep.subr.mxu0 0.0
    %1180 = vmatpush1.msra.mxu0 0.0
    %1181 = vmatprep.subr.mxu0 0.0
    %1182 = vmatpush1.msra.mxu0 0.0
    %1183 = vmatprep.subr.mxu0 0.0
    %1184 = vmatpush1.msra.mxu0 0.0
    %1185 = vmatprep.subr.mxu0 0.0
    %1186 = vmatpush1.msra.mxu0 0.0
    %1187 = vmatprep.subr.mxu0 0.0
    %1188 = vmatpush1.msra.mxu0 0.0
    %1189 = vmatprep.subr.mxu0 0.0
    %1190 = vmatpush1.msra.mxu0 0.0
    %1191 = vmatprep.subr.mxu0 0.0
    %1192 = vmatpush1.msra.mxu0 0.0
    %1193 = vmatprep.subr.mxu0 0.0
    %1194 = vmatpush1.msra.mxu0 0.0
    %1195 = vmatprep.subr.mxu0 0.0
    %1196 = vmatpush1.msra.mxu0 0.0
    %1197 = vmatprep.subr.mxu0 0.0
    %1198 = vmatpush1.msra.mxu0 0.0
    %1199 = vmatprep.subr.mxu0 0.0
    %1200 = vmatpush1.msra.mxu0 0.0
    %1201 = vmatprep.subr.mxu0 0.0
    %1202 = vmatpush1.msra.mxu0 0.0
    %1203 = vmatprep.subr.mxu0 0.0
    %1204 = vmatpush1.msra.mxu0 0.0
    %1205 = vmatprep.subr.mxu0 0.0
    %1206 = vmatpush1.msra.mxu0 0.0
    %1207 = vmatprep.subr.mxu0 0.0
    %1208 = vmatpush1.msra.mxu0 0.0
    %1209 = vmatprep.subr.mxu0 0.0
    %1210 = vmatpush1.msra.mxu0 0.0
    %1211 = vmatprep.subr.mxu0 0.0
    %1212 = vmatpush1.msra.mxu0 0.0
    %1213 = vmatprep.mubr.f32.mxu0 0.0
    %1214 = vmatmul.mubr.f32.gmra.mrb[0].mxu0 %v1007
    %v1215 = vpop.f32.mrb[0].mxu0
    %v1216 = vadd.f32 %v679, %v1215
    %v1217 = vpop.f32.mrb[0].mxu0
    %1218 = vdwg.mxu0
    %v1219 = vadd.f32 %v248, %v1076
    %v1220 = vxor.u32 %v1219, 2147483648
    %v1221 = vmul.f32 %v1220, 1.442695
    %v1222 = vpow.pop %v1221
    %v1223 = vadd.f32 %v1222, 1.0
    %v1224 = vrcp.pop %v1223
    %v1225 = vmul.f32 1.0, %v1224
    %v1226 = vadd.f32 %v362, %v1146
    %v1227 = vxor.u32 %v1226, 2147483648
    %v1228 = vmul.f32 %v1227, 1.442695
    %v1229 = vpow.pop %v1228
    %v1230 = vadd.f32 %v1229, 1.0
    %v1231 = vrcp.pop %v1230
    %v1232 = vmul.f32 1.0, %v1231
    %v1233 = vmul.f32 %v1225, %v1216
    %v1234 = vadd.f32 %v476, %v1233
    %v1235 = vtanh.pop %v1234
    %v1236 = vsub.f32 1.0, %v1232
    %v1237 = vmul.f32 %v1236, %v1235
    %v1238 = vmul.f32 %v1232, %v1005
    %v1239 = vadd.f32 %v1237, %v1238
    %v1241 = vsel %vm525, %v1239, 0
    %1243 = vmatprep.subr.mxu0 0.0
    %1244 = vmatpush1.msra.mxu0 %v504
    %1245 = vmatprep.subr.mxu0 0.0
    %1246 = vmatpush1.msra.mxu0 %v505
    %1247 = vmatprep.subr.mxu0 0.0
    %1248 = vmatpush1.msra.mxu0 %v506
    %1249 = vmatprep.subr.mxu0 0.0
    %1250 = vmatpush1.msra.mxu0 %v507
    %1251 = vmatprep.subr.mxu0 0.0
    %1252 = vmatpush1.msra.mxu0 0.0
    %1253 = vmatprep.subr.mxu0 0.0
    %1254 = vmatpush1.msra.mxu0 0.0
    %1255 = vmatprep.subr.mxu0 0.0
    %1256 = vmatpush1.msra.mxu0 0.0
    %1257 = vmatprep.subr.mxu0 0.0
    %1258 = vmatpush1.msra.mxu0 0.0
    %1259 = vmatprep.subr.mxu0 0.0
    %1260 = vmatpush1.msra.mxu0 0.0
    %1261 = vmatprep.subr.mxu0 0.0
    %1262 = vmatpush1.msra.mxu0 0.0
    %1263 = vmatprep.subr.mxu0 0.0
    %1264 = vmatpush1.msra.mxu0 0.0
    %1265 = vmatprep.subr.mxu0 0.0
    %1266 = vmatpush1.msra.mxu0 0.0
    %1267 = vmatprep.subr.mxu0 0.0
    %1268 = vmatpush1.msra.mxu0 0.0
    %1269 = vmatprep.subr.mxu0 0.0
    %1270 = vmatpush1.msra.mxu0 0.0
    %1271 = vmatprep.subr.mxu0 0.0
    %1272 = vmatpush1.msra.mxu0 0.0
    %1273 = vmatprep.subr.mxu0 0.0
    %1274 = vmatpush1.msra.mxu0 0.0
    %1275 = vmatprep.subr.mxu0 0.0
    %1276 = vmatpush1.msra.mxu0 0.0
    %1277 = vmatprep.subr.mxu0 0.0
    %1278 = vmatpush1.msra.mxu0 0.0
    %1279 = vmatprep.subr.mxu0 0.0
    %1280 = vmatpush1.msra.mxu0 0.0
    %1281 = vmatprep.subr.mxu0 0.0
    %1282 = vmatpush1.msra.mxu0 0.0
    %1283 = vmatprep.subr.mxu0 0.0
    %1284 = vmatpush1.msra.mxu0 0.0
    %1285 = vmatprep.subr.mxu0 0.0
    %1286 = vmatpush1.msra.mxu0 0.0
    %1287 = vmatprep.subr.mxu0 0.0
    %1288 = vmatpush1.msra.mxu0 0.0
    %1289 = vmatprep.subr.mxu0 0.0
    %1290 = vmatpush1.msra.mxu0 0.0
    %1291 = vmatprep.subr.mxu0 0.0
    %1292 = vmatpush1.msra.mxu0 0.0
    %1293 = vmatprep.subr.mxu0 0.0
    %1294 = vmatpush1.msra.mxu0 0.0
    %1295 = vmatprep.subr.mxu0 0.0
    %1296 = vmatpush1.msra.mxu0 0.0
    %1297 = vmatprep.subr.mxu0 0.0
    %1298 = vmatpush1.msra.mxu0 0.0
    %1299 = vmatprep.subr.mxu0 0.0
    %1300 = vmatpush1.msra.mxu0 0.0
    %1301 = vmatprep.subr.mxu0 0.0
    %1302 = vmatpush1.msra.mxu0 0.0
    %1303 = vmatprep.subr.mxu0 0.0
    %1304 = vmatpush1.msra.mxu0 0.0
    %1305 = vmatprep.subr.mxu0 0.0
    %1306 = vmatpush1.msra.mxu0 0.0
    %1307 = vmatprep.mubr.f32.mxu0 0.0
    %1308 = vmatmul.mubr.f32.gmra.mrb[0].mxu0 %v1241
    %v1309 = vpop.f32.mrb[0].mxu0
    %v1310 = vadd.f32 %v523, %v1309
    %v1311 = vpop.f32.mrb[0].mxu0
    %1312 = vdwg.mxu0
    %1313 = vmatprep.subr.mxu0 0.0
    %1314 = vmatpush1.msra.mxu0 %v508
    %1315 = vmatprep.subr.mxu0 0.0
    %1316 = vmatpush1.msra.mxu0 %v509
    %1317 = vmatprep.subr.mxu0 0.0
    %1318 = vmatpush1.msra.mxu0 %v510
    %1319 = vmatprep.subr.mxu0 0.0
    %1320 = vmatpush1.msra.mxu0 %v511
    %1321 = vmatprep.subr.mxu0 0.0
    %1322 = vmatpush1.msra.mxu0 0.0
    %1323 = vmatprep.subr.mxu0 0.0
    %1324 = vmatpush1.msra.mxu0 0.0
    %1325 = vmatprep.subr.mxu0 0.0
    %1326 = vmatpush1.msra.mxu0 0.0
    %1327 = vmatprep.subr.mxu0 0.0
    %1328 = vmatpush1.msra.mxu0 0.0
    %1329 = vmatprep.subr.mxu0 0.0
    %1330 = vmatpush1.msra.mxu0 0.0
    %1331 = vmatprep.subr.mxu0 0.0
    %1332 = vmatpush1.msra.mxu0 0.0
    %1333 = vmatprep.subr.mxu0 0.0
    %1334 = vmatpush1.msra.mxu0 0.0
    %1335 = vmatprep.subr.mxu0 0.0
    %1336 = vmatpush1.msra.mxu0 0.0
    %1337 = vmatprep.subr.mxu0 0.0
    %1338 = vmatpush1.msra.mxu0 0.0
    %1339 = vmatprep.subr.mxu0 0.0
    %1340 = vmatpush1.msra.mxu0 0.0
    %1341 = vmatprep.subr.mxu0 0.0
    %1342 = vmatpush1.msra.mxu0 0.0
    %1343 = vmatprep.subr.mxu0 0.0
    %1344 = vmatpush1.msra.mxu0 0.0
    %1345 = vmatprep.subr.mxu0 0.0
    %1346 = vmatpush1.msra.mxu0 0.0
    %1347 = vmatprep.subr.mxu0 0.0
    %1348 = vmatpush1.msra.mxu0 0.0
    %1349 = vmatprep.subr.mxu0 0.0
    %1350 = vmatpush1.msra.mxu0 0.0
    %1351 = vmatprep.subr.mxu0 0.0
    %1352 = vmatpush1.msra.mxu0 0.0
    %1353 = vmatprep.subr.mxu0 0.0
    %1354 = vmatpush1.msra.mxu0 0.0
    %1355 = vmatprep.subr.mxu0 0.0
    %1356 = vmatpush1.msra.mxu0 0.0
    %1357 = vmatprep.subr.mxu0 0.0
    %1358 = vmatpush1.msra.mxu0 0.0
    %1359 = vmatprep.subr.mxu0 0.0
    %1360 = vmatpush1.msra.mxu0 0.0
    %1361 = vmatprep.subr.mxu0 0.0
    %1362 = vmatpush1.msra.mxu0 0.0
    %1363 = vmatprep.subr.mxu0 0.0
    %1364 = vmatpush1.msra.mxu0 0.0
    %1365 = vmatprep.subr.mxu0 0.0
    %1366 = vmatpush1.msra.mxu0 0.0
    %1367 = vmatprep.subr.mxu0 0.0
    %1368 = vmatpush1.msra.mxu0 0.0
    %1369 = vmatprep.subr.mxu0 0.0
    %1370 = vmatpush1.msra.mxu0 0.0
    %1371 = vmatprep.subr.mxu0 0.0
    %1372 = vmatpush1.msra.mxu0 0.0
    %1373 = vmatprep.subr.mxu0 0.0
    %1374 = vmatpush1.msra.mxu0 0.0
    %1375 = vmatprep.subr.mxu0 0.0
    %1376 = vmatpush1.msra.mxu0 0.0
    %1377 = vmatprep.mubr.f32.mxu0 0.0
    %1378 = vmatmul.mubr.f32.gmra.mrb[0].mxu0 %v1241
    %v1379 = vpop.f32.mrb[0].mxu0
    %v1380 = vadd.f32 %v603, %v1379
    %v1381 = vpop.f32.mrb[0].mxu0
    %1382 = vdwg.mxu0
    %1383 = vmatprep.subr.mxu0 0.0
    %1384 = vmatpush1.msra.mxu0 %v512
    %1385 = vmatprep.subr.mxu0 0.0
    %1386 = vmatpush1.msra.mxu0 %v513
    %1387 = vmatprep.subr.mxu0 0.0
    %1388 = vmatpush1.msra.mxu0 %v514
    %1389 = vmatprep.subr.mxu0 0.0
    %1390 = vmatpush1.msra.mxu0 %v515
    %1391 = vmatprep.subr.mxu0 0.0
    %1392 = vmatpush1.msra.mxu0 0.0
    %1393 = vmatprep.subr.mxu0 0.0
    %1394 = vmatpush1.msra.mxu0 0.0
    %1395 = vmatprep.subr.mxu0 0.0
    %1396 = vmatpush1.msra.mxu0 0.0
    %1397 = vmatprep.subr.mxu0 0.0
    %1398 = vmatpush1.msra.mxu0 0.0
    %1399 = vmatprep.subr.mxu0 0.0
    %1400 = vmatpush1.msra.mxu0 0.0
    %1401 = vmatprep.subr.mxu0 0.0
    %1402 = vmatpush1.msra.mxu0 0.0
    %1403 = vmatprep.subr.mxu0 0.0
    %1404 = vmatpush1.msra.mxu0 0.0
    %1405 = vmatprep.subr.mxu0 0.0
    %1406 = vmatpush1.msra.mxu0 0.0
    %1407 = vmatprep.subr.mxu0 0.0
    %1408 = vmatpush1.msra.mxu0 0.0
    %1409 = vmatprep.subr.mxu0 0.0
    %1410 = vmatpush1.msra.mxu0 0.0
    %1411 = vmatprep.subr.mxu0 0.0
    %1412 = vmatpush1.msra.mxu0 0.0
    %1413 = vmatprep.subr.mxu0 0.0
    %1414 = vmatpush1.msra.mxu0 0.0
    %1415 = vmatprep.subr.mxu0 0.0
    %1416 = vmatpush1.msra.mxu0 0.0
    %1417 = vmatprep.subr.mxu0 0.0
    %1418 = vmatpush1.msra.mxu0 0.0
    %1419 = vmatprep.subr.mxu0 0.0
    %1420 = vmatpush1.msra.mxu0 0.0
    %1421 = vmatprep.subr.mxu0 0.0
    %1422 = vmatpush1.msra.mxu0 0.0
    %1423 = vmatprep.subr.mxu0 0.0
    %1424 = vmatpush1.msra.mxu0 0.0
    %1425 = vmatprep.subr.mxu0 0.0
    %1426 = vmatpush1.msra.mxu0 0.0
    %1427 = vmatprep.subr.mxu0 0.0
    %1428 = vmatpush1.msra.mxu0 0.0
    %1429 = vmatprep.subr.mxu0 0.0
    %1430 = vmatpush1.msra.mxu0 0.0
    %1431 = vmatprep.subr.mxu0 0.0
    %1432 = vmatpush1.msra.mxu0 0.0
    %1433 = vmatprep.subr.mxu0 0.0
    %1434 = vmatpush1.msra.mxu0 0.0
    %1435 = vmatprep.subr.mxu0 0.0
    %1436 = vmatpush1.msra.mxu0 0.0
    %1437 = vmatprep.subr.mxu0 0.0
    %1438 = vmatpush1.msra.mxu0 0.0
    %1439 = vmatprep.subr.mxu0 0.0
    %1440 = vmatpush1.msra.mxu0 0.0
    %1441 = vmatprep.subr.mxu0 0.0
    %1442 = vmatpush1.msra.mxu0 0.0
    %1443 = vmatprep.subr.mxu0 0.0
    %1444 = vmatpush1.msra.mxu0 0.0
    %1445 = vmatprep.subr.mxu0 0.0
    %1446 = vmatpush1.msra.mxu0 0.0
    %1447 = vmatprep.mubr.f32.mxu0 0.0
    %1448 = vmatmul.mubr.f32.gmra.mrb[0].mxu0 %v1241
    %v1449 = vpop.f32.mrb[0].mxu0
    %v1450 = vadd.f32 %v679, %v1449
    %v1451 = vpop.f32.mrb[0].mxu0
    %1452 = vdwg.mxu0
    %v1453 = vadd.f32 %v253, %v1310
    %v1454 = vxor.u32 %v1453, 2147483648
    %v1455 = vmul.f32 %v1454, 1.442695
    %v1456 = vpow.pop %v1455
    %v1457 = vadd.f32 %v1456, 1.0
    %v1458 = vrcp.pop %v1457
    %v1459 = vmul.f32 1.0, %v1458
    %v1460 = vadd.f32 %v367, %v1380
    %v1461 = vxor.u32 %v1460, 2147483648
    %v1462 = vmul.f32 %v1461, 1.442695
    %v1463 = vpow.pop %v1462
    %v1464 = vadd.f32 %v1463, 1.0
    %v1465 = vrcp.pop %v1464
    %v1466 = vmul.f32 1.0, %v1465
    %v1467 = vmul.f32 %v1459, %v1450
    %v1468 = vadd.f32 %v481, %v1467
    %v1469 = vtanh.pop %v1468
    %v1470 = vsub.f32 1.0, %v1466
    %v1471 = vmul.f32 %v1470, %v1469
    %v1472 = vmul.f32 %v1466, %v1239
    %v1473 = vadd.f32 %v1471, %v1472
    %v1475 = vsel %vm525, %v1473, 0
    %1477 = vmatprep.subr.mxu0 0.0
    %1478 = vmatpush1.msra.mxu0 %v504
    %1479 = vmatprep.subr.mxu0 0.0
    %1480 = vmatpush1.msra.mxu0 %v505
    %1481 = vmatprep.subr.mxu0 0.0
    %1482 = vmatpush1.msra.mxu0 %v506
    %1483 = vmatprep.subr.mxu0 0.0
    %1484 = vmatpush1.msra.mxu0 %v507
    %1485 = vmatprep.subr.mxu0 0.0
    %1486 = vmatpush1.msra.mxu0 0.0
    %1487 = vmatprep.subr.mxu0 0.0
    %1488 = vmatpush1.msra.mxu0 0.0
    %1489 = vmatprep.subr.mxu0 0.0
    %1490 = vmatpush1.msra.mxu0 0.0
    %1491 = vmatprep.subr.mxu0 0.0
    %1492 = vmatpush1.msra.mxu0 0.0
    %1493 = vmatprep.subr.mxu0 0.0
    %1494 = vmatpush1.msra.mxu0 0.0
    %1495 = vmatprep.subr.mxu0 0.0
    %1496 = vmatpush1.msra.mxu0 0.0
    %1497 = vmatprep.subr.mxu0 0.0
    %1498 = vmatpush1.msra.mxu0 0.0
    %1499 = vmatprep.subr.mxu0 0.0
    %1500 = vmatpush1.msra.mxu0 0.0
    %1501 = vmatprep.subr.mxu0 0.0
    %1502 = vmatpush1.msra.mxu0 0.0
    %1503 = vmatprep.subr.mxu0 0.0
    %1504 = vmatpush1.msra.mxu0 0.0
    %1505 = vmatprep.subr.mxu0 0.0
    %1506 = vmatpush1.msra.mxu0 0.0
    %1507 = vmatprep.subr.mxu0 0.0
    %1508 = vmatpush1.msra.mxu0 0.0
    %1509 = vmatprep.subr.mxu0 0.0
    %1510 = vmatpush1.msra.mxu0 0.0
    %1511 = vmatprep.subr.mxu0 0.0
    %1512 = vmatpush1.msra.mxu0 0.0
    %1513 = vmatprep.subr.mxu0 0.0
    %1514 = vmatpush1.msra.mxu0 0.0
    %1515 = vmatprep.subr.mxu0 0.0
    %1516 = vmatpush1.msra.mxu0 0.0
    %1517 = vmatprep.subr.mxu0 0.0
    %1518 = vmatpush1.msra.mxu0 0.0
    %1519 = vmatprep.subr.mxu0 0.0
    %1520 = vmatpush1.msra.mxu0 0.0
    %1521 = vmatprep.subr.mxu0 0.0
    %1522 = vmatpush1.msra.mxu0 0.0
    %1523 = vmatprep.subr.mxu0 0.0
    %1524 = vmatpush1.msra.mxu0 0.0
    %1525 = vmatprep.subr.mxu0 0.0
    %1526 = vmatpush1.msra.mxu0 0.0
    %1527 = vmatprep.subr.mxu0 0.0
    %1528 = vmatpush1.msra.mxu0 0.0
    %1529 = vmatprep.subr.mxu0 0.0
    %1530 = vmatpush1.msra.mxu0 0.0
    %1531 = vmatprep.subr.mxu0 0.0
    %1532 = vmatpush1.msra.mxu0 0.0
    %1533 = vmatprep.subr.mxu0 0.0
    %1534 = vmatpush1.msra.mxu0 0.0
    %1535 = vmatprep.subr.mxu0 0.0
    %1536 = vmatpush1.msra.mxu0 0.0
    %1537 = vmatprep.subr.mxu0 0.0
    %1538 = vmatpush1.msra.mxu0 0.0
    %1539 = vmatprep.subr.mxu0 0.0
    %1540 = vmatpush1.msra.mxu0 0.0
    %1541 = vmatprep.mubr.f32.mxu0 0.0
    %1542 = vmatmul.mubr.f32.gmra.mrb[0].mxu0 %v1475
    %v1543 = vpop.f32.mrb[0].mxu0
    %v1544 = vadd.f32 %v523, %v1543
    %v1545 = vpop.f32.mrb[0].mxu0
    %1546 = vdwg.mxu0
    %1547 = vmatprep.subr.mxu0 0.0
    %1548 = vmatpush1.msra.mxu0 %v508
    %1549 = vmatprep.subr.mxu0 0.0
    %1550 = vmatpush1.msra.mxu0 %v509
    %1551 = vmatprep.subr.mxu0 0.0
    %1552 = vmatpush1.msra.mxu0 %v510
    %1553 = vmatprep.subr.mxu0 0.0
    %1554 = vmatpush1.msra.mxu0 %v511
    %1555 = vmatprep.subr.mxu0 0.0
    %1556 = vmatpush1.msra.mxu0 0.0
    %1557 = vmatprep.subr.mxu0 0.0
    %1558 = vmatpush1.msra.mxu0 0.0
    %1559 = vmatprep.subr.mxu0 0.0
    %1560 = vmatpush1.msra.mxu0 0.0
    %1561 = vmatprep.subr.mxu0 0.0
    %1562 = vmatpush1.msra.mxu0 0.0
    %1563 = vmatprep.subr.mxu0 0.0
    %1564 = vmatpush1.msra.mxu0 0.0
    %1565 = vmatprep.subr.mxu0 0.0
    %1566 = vmatpush1.msra.mxu0 0.0
    %1567 = vmatprep.subr.mxu0 0.0
    %1568 = vmatpush1.msra.mxu0 0.0
    %1569 = vmatprep.subr.mxu0 0.0
    %1570 = vmatpush1.msra.mxu0 0.0
    %1571 = vmatprep.subr.mxu0 0.0
    %1572 = vmatpush1.msra.mxu0 0.0
    %1573 = vmatprep.subr.mxu0 0.0
    %1574 = vmatpush1.msra.mxu0 0.0
    %1575 = vmatprep.subr.mxu0 0.0
    %1576 = vmatpush1.msra.mxu0 0.0
    %1577 = vmatprep.subr.mxu0 0.0
    %1578 = vmatpush1.msra.mxu0 0.0
    %1579 = vmatprep.subr.mxu0 0.0
    %1580 = vmatpush1.msra.mxu0 0.0
    %1581 = vmatprep.subr.mxu0 0.0
    %1582 = vmatpush1.msra.mxu0 0.0
    %1583 = vmatprep.subr.mxu0 0.0
    %1584 = vmatpush1.msra.mxu0 0.0
    %1585 = vmatprep.subr.mxu0 0.0
    %1586 = vmatpush1.msra.mxu0 0.0
    %1587 = vmatprep.subr.mxu0 0.0
    %1588 = vmatpush1.msra.mxu0 0.0
    %1589 = vmatprep.subr.mxu0 0.0
    %1590 = vmatpush1.msra.mxu0 0.0
    %1591 = vmatprep.subr.mxu0 0.0
    %1592 = vmatpush1.msra.mxu0 0.0
    %1593 = vmatprep.subr.mxu0 0.0
    %1594 = vmatpush1.msra.mxu0 0.0
    %1595 = vmatprep.subr.mxu0 0.0
    %1596 = vmatpush1.msra.mxu0 0.0
    %1597 = vmatprep.subr.mxu0 0.0
    %1598 = vmatpush1.msra.mxu0 0.0
    %1599 = vmatprep.subr.mxu0 0.0
    %1600 = vmatpush1.msra.mxu0 0.0
    %1601 = vmatprep.subr.mxu0 0.0
    %1602 = vmatpush1.msra.mxu0 0.0
    %1603 = vmatprep.subr.mxu0 0.0
    %1604 = vmatpush1.msra.mxu0 0.0
    %1605 = vmatprep.subr.mxu0 0.0
    %1606 = vmatpush1.msra.mxu0 0.0
    %1607 = vmatprep.subr.mxu0 0.0
    %1608 = vmatpush1.msra.mxu0 0.0
    %1609 = vmatprep.subr.mxu0 0.0
    %1610 = vmatpush1.msra.mxu0 0.0
    %1611 = vmatprep.mubr.f32.mxu0 0.0
    %1612 = vmatmul.mubr.f32.gmra.mrb[0].mxu0 %v1475
    %v1613 = vpop.f32.mrb[0].mxu0
    %v1614 = vadd.f32 %v603, %v1613
    %v1615 = vpop.f32.mrb[0].mxu0
    %1616 = vdwg.mxu0
    %1617 = vmatprep.subr.mxu0 0.0
    %1618 = vmatpush1.msra.mxu0 %v512
    %1619 = vmatprep.subr.mxu0 0.0
    %1620 = vmatpush1.msra.mxu0 %v513
    %1621 = vmatprep.subr.mxu0 0.0
    %1622 = vmatpush1.msra.mxu0 %v514
    %1623 = vmatprep.subr.mxu0 0.0
    %1624 = vmatpush1.msra.mxu0 %v515
    %1625 = vmatprep.subr.mxu0 0.0
    %1626 = vmatpush1.msra.mxu0 0.0
    %1627 = vmatprep.subr.mxu0 0.0
    %1628 = vmatpush1.msra.mxu0 0.0
    %1629 = vmatprep.subr.mxu0 0.0
    %1630 = vmatpush1.msra.mxu0 0.0
    %1631 = vmatprep.subr.mxu0 0.0
    %1632 = vmatpush1.msra.mxu0 0.0
    %1633 = vmatprep.subr.mxu0 0.0
    %1634 = vmatpush1.msra.mxu0 0.0
    %1635 = vmatprep.subr.mxu0 0.0
    %1636 = vmatpush1.msra.mxu0 0.0
    %1637 = vmatprep.subr.mxu0 0.0
    %1638 = vmatpush1.msra.mxu0 0.0
    %1639 = vmatprep.subr.mxu0 0.0
    %1640 = vmatpush1.msra.mxu0 0.0
    %1641 = vmatprep.subr.mxu0 0.0
    %1642 = vmatpush1.msra.mxu0 0.0
    %1643 = vmatprep.subr.mxu0 0.0
    %1644 = vmatpush1.msra.mxu0 0.0
    %1645 = vmatprep.subr.mxu0 0.0
    %1646 = vmatpush1.msra.mxu0 0.0
    %1647 = vmatprep.subr.mxu0 0.0
    %1648 = vmatpush1.msra.mxu0 0.0
    %1649 = vmatprep.subr.mxu0 0.0
    %1650 = vmatpush1.msra.mxu0 0.0
    %1651 = vmatprep.subr.mxu0 0.0
    %1652 = vmatpush1.msra.mxu0 0.0
    %1653 = vmatprep.subr.mxu0 0.0
    %1654 = vmatpush1.msra.mxu0 0.0
    %1655 = vmatprep.subr.mxu0 0.0
    %1656 = vmatpush1.msra.mxu0 0.0
    %1657 = vmatprep.subr.mxu0 0.0
    %1658 = vmatpush1.msra.mxu0 0.0
    %1659 = vmatprep.subr.mxu0 0.0
    %1660 = vmatpush1.msra.mxu0 0.0
    %1661 = vmatprep.subr.mxu0 0.0
    %1662 = vmatpush1.msra.mxu0 0.0
    %1663 = vmatprep.subr.mxu0 0.0
    %1664 = vmatpush1.msra.mxu0 0.0
    %1665 = vmatprep.subr.mxu0 0.0
    %1666 = vmatpush1.msra.mxu0 0.0
    %1667 = vmatprep.subr.mxu0 0.0
    %1668 = vmatpush1.msra.mxu0 0.0
    %1669 = vmatprep.subr.mxu0 0.0
    %1670 = vmatpush1.msra.mxu0 0.0
    %1671 = vmatprep.subr.mxu0 0.0
    %1672 = vmatpush1.msra.mxu0 0.0
    %1673 = vmatprep.subr.mxu0 0.0
    %1674 = vmatpush1.msra.mxu0 0.0
    %1675 = vmatprep.subr.mxu0 0.0
    %1676 = vmatpush1.msra.mxu0 0.0
    %1677 = vmatprep.subr.mxu0 0.0
    %1678 = vmatpush1.msra.mxu0 0.0
    %1679 = vmatprep.subr.mxu0 0.0
    %1680 = vmatpush1.msra.mxu0 0.0
    %1681 = vmatprep.mubr.f32.mxu0 0.0
    %1682 = vmatmul.mubr.f32.gmra.mrb[0].mxu0 %v1475
    %v1683 = vpop.f32.mrb[0].mxu0
    %v1684 = vadd.f32 %v679, %v1683
    %v1685 = vpop.f32.mrb[0].mxu0
    %1686 = vdwg.mxu0
    %v1687 = vadd.f32 %v258, %v1544
    %v1688 = vxor.u32 %v1687, 2147483648
    %v1689 = vmul.f32 %v1688, 1.442695
    %v1690 = vpow.pop %v1689
    %v1691 = vadd.f32 %v1690, 1.0
    %v1692 = vrcp.pop %v1691
    %v1693 = vmul.f32 1.0, %v1692
    %v1694 = vadd.f32 %v372, %v1614
    %v1695 = vxor.u32 %v1694, 2147483648
    %v1696 = vmul.f32 %v1695, 1.442695
    %v1697 = vpow.pop %v1696
    %v1698 = vadd.f32 %v1697, 1.0
    %v1699 = vrcp.pop %v1698
    %v1700 = vmul.f32 1.0, %v1699
    %v1701 = vmul.f32 %v1693, %v1684
    %v1702 = vadd.f32 %v486, %v1701
    %v1703 = vtanh.pop %v1702
    %v1704 = vsub.f32 1.0, %v1700
    %v1705 = vmul.f32 %v1704, %v1703
    %v1706 = vmul.f32 %v1700, %v1473
    %v1707 = vadd.f32 %v1705, %v1706
    %v1709 = vsel %vm525, %v1707, 0
    %1711 = vmatprep.subr.mxu0 0.0
    %1712 = vmatpush1.msra.mxu0 %v504
    %1713 = vmatprep.subr.mxu0 0.0
    %1714 = vmatpush1.msra.mxu0 %v505
    %1715 = vmatprep.subr.mxu0 0.0
    %1716 = vmatpush1.msra.mxu0 %v506
    %1717 = vmatprep.subr.mxu0 0.0
    %1718 = vmatpush1.msra.mxu0 %v507
    %1719 = vmatprep.subr.mxu0 0.0
    %1720 = vmatpush1.msra.mxu0 0.0
    %1721 = vmatprep.subr.mxu0 0.0
    %1722 = vmatpush1.msra.mxu0 0.0
    %1723 = vmatprep.subr.mxu0 0.0
    %1724 = vmatpush1.msra.mxu0 0.0
    %1725 = vmatprep.subr.mxu0 0.0
    %1726 = vmatpush1.msra.mxu0 0.0
    %1727 = vmatprep.subr.mxu0 0.0
    %1728 = vmatpush1.msra.mxu0 0.0
    %1729 = vmatprep.subr.mxu0 0.0
    %1730 = vmatpush1.msra.mxu0 0.0
    %1731 = vmatprep.subr.mxu0 0.0
    %1732 = vmatpush1.msra.mxu0 0.0
    %1733 = vmatprep.subr.mxu0 0.0
    %1734 = vmatpush1.msra.mxu0 0.0
    %1735 = vmatprep.subr.mxu0 0.0
    %1736 = vmatpush1.msra.mxu0 0.0
    %1737 = vmatprep.subr.mxu0 0.0
    %1738 = vmatpush1.msra.mxu0 0.0
    %1739 = vmatprep.subr.mxu0 0.0
    %1740 = vmatpush1.msra.mxu0 0.0
    %1741 = vmatprep.subr.mxu0 0.0
    %1742 = vmatpush1.msra.mxu0 0.0
    %1743 = vmatprep.subr.mxu0 0.0
    %1744 = vmatpush1.msra.mxu0 0.0
    %1745 = vmatprep.subr.mxu0 0.0
    %1746 = vmatpush1.msra.mxu0 0.0
    %1747 = vmatprep.subr.mxu0 0.0
    %1748 = vmatpush1.msra.mxu0 0.0
    %1749 = vmatprep.subr.mxu0 0.0
    %1750 = vmatpush1.msra.mxu0 0.0
    %1751 = vmatprep.subr.mxu0 0.0
    %1752 = vmatpush1.msra.mxu0 0.0
    %1753 = vmatprep.subr.mxu0 0.0
    %1754 = vmatpush1.msra.mxu0 0.0
    %1755 = vmatprep.subr.mxu0 0.0
    %1756 = vmatpush1.msra.mxu0 0.0
    %1757 = vmatprep.subr.mxu0 0.0
    %1758 = vmatpush1.msra.mxu0 0.0
    %1759 = vmatprep.subr.mxu0 0.0
    %1760 = vmatpush1.msra.mxu0 0.0
    %1761 = vmatprep.subr.mxu0 0.0
    %1762 = vmatpush1.msra.mxu0 0.0
    %1763 = vmatprep.subr.mxu0 0.0
    %1764 = vmatpush1.msra.mxu0 0.0
    %1765 = vmatprep.subr.mxu0 0.0
    %1766 = vmatpush1.msra.mxu0 0.0
    %1767 = vmatprep.subr.mxu0 0.0
    %1768 = vmatpush1.msra.mxu0 0.0
    %1769 = vmatprep.subr.mxu0 0.0
    %1770 = vmatpush1.msra.mxu0 0.0
    %1771 = vmatprep.subr.mxu0 0.0
    %1772 = vmatpush1.msra.mxu0 0.0
    %1773 = vmatprep.subr.mxu0 0.0
    %1774 = vmatpush1.msra.mxu0 0.0
    %1775 = vmatprep.mubr.f32.mxu0 0.0
    %1776 = vmatmul.mubr.f32.gmra.mrb[0].mxu0 %v1709
    %v1777 = vpop.f32.mrb[0].mxu0
    %v1778 = vadd.f32 %v523, %v1777
    %v1779 = vpop.f32.mrb[0].mxu0
    %1780 = vdwg.mxu0
    %1781 = vmatprep.subr.mxu0 0.0
    %1782 = vmatpush1.msra.mxu0 %v508
    %1783 = vmatprep.subr.mxu0 0.0
    %1784 = vmatpush1.msra.mxu0 %v509
    %1785 = vmatprep.subr.mxu0 0.0
    %1786 = vmatpush1.msra.mxu0 %v510
    %1787 = vmatprep.subr.mxu0 0.0
    %1788 = vmatpush1.msra.mxu0 %v511
    %1789 = vmatprep.subr.mxu0 0.0
    %1790 = vmatpush1.msra.mxu0 0.0
    %1791 = vmatprep.subr.mxu0 0.0
    %1792 = vmatpush1.msra.mxu0 0.0
    %1793 = vmatprep.subr.mxu0 0.0
    %1794 = vmatpush1.msra.mxu0 0.0
    %1795 = vmatprep.subr.mxu0 0.0
    %1796 = vmatpush1.msra.mxu0 0.0
    %1797 = vmatprep.subr.mxu0 0.0
    %1798 = vmatpush1.msra.mxu0 0.0
    %1799 = vmatprep.subr.mxu0 0.0
    %1800 = vmatpush1.msra.mxu0 0.0
    %1801 = vmatprep.subr.mxu0 0.0
    %1802 = vmatpush1.msra.mxu0 0.0
    %1803 = vmatprep.subr.mxu0 0.0
    %1804 = vmatpush1.msra.mxu0 0.0
    %1805 = vmatprep.subr.mxu0 0.0
    %1806 = vmatpush1.msra.mxu0 0.0
    %1807 = vmatprep.subr.mxu0 0.0
    %1808 = vmatpush1.msra.mxu0 0.0
    %1809 = vmatprep.subr.mxu0 0.0
    %1810 = vmatpush1.msra.mxu0 0.0
    %1811 = vmatprep.subr.mxu0 0.0
    %1812 = vmatpush1.msra.mxu0 0.0
    %1813 = vmatprep.subr.mxu0 0.0
    %1814 = vmatpush1.msra.mxu0 0.0
    %1815 = vmatprep.subr.mxu0 0.0
    %1816 = vmatpush1.msra.mxu0 0.0
    %1817 = vmatprep.subr.mxu0 0.0
    %1818 = vmatpush1.msra.mxu0 0.0
    %1819 = vmatprep.subr.mxu0 0.0
    %1820 = vmatpush1.msra.mxu0 0.0
    %1821 = vmatprep.subr.mxu0 0.0
    %1822 = vmatpush1.msra.mxu0 0.0
    %1823 = vmatprep.subr.mxu0 0.0
    %1824 = vmatpush1.msra.mxu0 0.0
    %1825 = vmatprep.subr.mxu0 0.0
    %1826 = vmatpush1.msra.mxu0 0.0
    %1827 = vmatprep.subr.mxu0 0.0
    %1828 = vmatpush1.msra.mxu0 0.0
    %1829 = vmatprep.subr.mxu0 0.0
    %1830 = vmatpush1.msra.mxu0 0.0
    %1831 = vmatprep.subr.mxu0 0.0
    %1832 = vmatpush1.msra.mxu0 0.0
    %1833 = vmatprep.subr.mxu0 0.0
    %1834 = vmatpush1.msra.mxu0 0.0
    %1835 = vmatprep.subr.mxu0 0.0
    %1836 = vmatpush1.msra.mxu0 0.0
    %1837 = vmatprep.subr.mxu0 0.0
    %1838 = vmatpush1.msra.mxu0 0.0
    %1839 = vmatprep.subr.mxu0 0.0
    %1840 = vmatpush1.msra.mxu0 0.0
    %1841 = vmatprep.subr.mxu0 0.0
    %1842 = vmatpush1.msra.mxu0 0.0
    %1843 = vmatprep.subr.mxu0 0.0
    %1844 = vmatpush1.msra.mxu0 0.0
    %1845 = vmatprep.mubr.f32.mxu0 0.0
    %1846 = vmatmul.mubr.f32.gmra.mrb[0].mxu0 %v1709
    %v1847 = vpop.f32.mrb[0].mxu0
    %v1848 = vadd.f32 %v603, %v1847
    %v1849 = vpop.f32.mrb[0].mxu0
    %1850 = vdwg.mxu0
    %1851 = vmatprep.subr.mxu0 0.0
    %1852 = vmatpush1.msra.mxu0 %v512
    %1853 = vmatprep.subr.mxu0 0.0
    %1854 = vmatpush1.msra.mxu0 %v513
    %1855 = vmatprep.subr.mxu0 0.0
    %1856 = vmatpush1.msra.mxu0 %v514
    %1857 = vmatprep.subr.mxu0 0.0
    %1858 = vmatpush1.msra.mxu0 %v515
    %1859 = vmatprep.subr.mxu0 0.0
    %1860 = vmatpush1.msra.mxu0 0.0
    %1861 = vmatprep.subr.mxu0 0.0
    %1862 = vmatpush1.msra.mxu0 0.0
    %1863 = vmatprep.subr.mxu0 0.0
    %1864 = vmatpush1.msra.mxu0 0.0
    %1865 = vmatprep.subr.mxu0 0.0
    %1866 = vmatpush1.msra.mxu0 0.0
    %1867 = vmatprep.subr.mxu0 0.0
    %1868 = vmatpush1.msra.mxu0 0.0
    %1869 = vmatprep.subr.mxu0 0.0
    %1870 = vmatpush1.msra.mxu0 0.0
    %1871 = vmatprep.subr.mxu0 0.0
    %1872 = vmatpush1.msra.mxu0 0.0
    %1873 = vmatprep.subr.mxu0 0.0
    %1874 = vmatpush1.msra.mxu0 0.0
    %1875 = vmatprep.subr.mxu0 0.0
    %1876 = vmatpush1.msra.mxu0 0.0
    %1877 = vmatprep.subr.mxu0 0.0
    %1878 = vmatpush1.msra.mxu0 0.0
    %1879 = vmatprep.subr.mxu0 0.0
    %1880 = vmatpush1.msra.mxu0 0.0
    %1881 = vmatprep.subr.mxu0 0.0
    %1882 = vmatpush1.msra.mxu0 0.0
    %1883 = vmatprep.subr.mxu0 0.0
    %1884 = vmatpush1.msra.mxu0 0.0
    %1885 = vmatprep.subr.mxu0 0.0
    %1886 = vmatpush1.msra.mxu0 0.0
    %1887 = vmatprep.subr.mxu0 0.0
    %1888 = vmatpush1.msra.mxu0 0.0
    %1889 = vmatprep.subr.mxu0 0.0
    %1890 = vmatpush1.msra.mxu0 0.0
    %1891 = vmatprep.subr.mxu0 0.0
    %1892 = vmatpush1.msra.mxu0 0.0
    %1893 = vmatprep.subr.mxu0 0.0
    %1894 = vmatpush1.msra.mxu0 0.0
    %1895 = vmatprep.subr.mxu0 0.0
    %1896 = vmatpush1.msra.mxu0 0.0
    %1897 = vmatprep.subr.mxu0 0.0
    %1898 = vmatpush1.msra.mxu0 0.0
    %1899 = vmatprep.subr.mxu0 0.0
    %1900 = vmatpush1.msra.mxu0 0.0
    %1901 = vmatprep.subr.mxu0 0.0
    %1902 = vmatpush1.msra.mxu0 0.0
    %1903 = vmatprep.subr.mxu0 0.0
    %1904 = vmatpush1.msra.mxu0 0.0
    %1905 = vmatprep.subr.mxu0 0.0
    %1906 = vmatpush1.msra.mxu0 0.0
    %1907 = vmatprep.subr.mxu0 0.0
    %1908 = vmatpush1.msra.mxu0 0.0
    %1909 = vmatprep.subr.mxu0 0.0
    %1910 = vmatpush1.msra.mxu0 0.0
    %1911 = vmatprep.subr.mxu0 0.0
    %1912 = vmatpush1.msra.mxu0 0.0
    %1913 = vmatprep.subr.mxu0 0.0
    %1914 = vmatpush1.msra.mxu0 0.0
    %1915 = vmatprep.mubr.f32.mxu0 0.0
    %1916 = vmatmul.mubr.f32.gmra.mrb[0].mxu0 %v1709
    %v1917 = vpop.f32.mrb[0].mxu0
    %v1918 = vadd.f32 %v679, %v1917
    %v1919 = vpop.f32.mrb[0].mxu0
    %1920 = vdwg.mxu0
    %v1921 = vadd.f32 %v263, %v1778
    %v1922 = vxor.u32 %v1921, 2147483648
    %v1923 = vmul.f32 %v1922, 1.442695
    %v1924 = vpow.pop %v1923
    %v1925 = vadd.f32 %v1924, 1.0
    %v1926 = vrcp.pop %v1925
    %v1927 = vmul.f32 1.0, %v1926
    %v1928 = vadd.f32 %v377, %v1848
    %v1929 = vxor.u32 %v1928, 2147483648
    %v1930 = vmul.f32 %v1929, 1.442695
    %v1931 = vpow.pop %v1930
    %v1932 = vadd.f32 %v1931, 1.0
    %v1933 = vrcp.pop %v1932
    %v1934 = vmul.f32 1.0, %v1933
    %v1935 = vmul.f32 %v1927, %v1918
    %v1936 = vadd.f32 %v491, %v1935
    %v1937 = vtanh.pop %v1936
    %v1938 = vsub.f32 1.0, %v1934
    %v1939 = vmul.f32 %v1938, %v1937
    %v1940 = vmul.f32 %v1934, %v1707
    %v1941 = vadd.f32 %v1939, %v1940
    %v1943 = vsel %vm525, %v1941, 0
    %1945 = vmatprep.subr.mxu0 0.0
    %1946 = vmatpush1.msra.mxu0 %v504
    %1947 = vmatprep.subr.mxu0 0.0
    %1948 = vmatpush1.msra.mxu0 %v505
    %1949 = vmatprep.subr.mxu0 0.0
    %1950 = vmatpush1.msra.mxu0 %v506
    %1951 = vmatprep.subr.mxu0 0.0
    %1952 = vmatpush1.msra.mxu0 %v507
    %1953 = vmatprep.subr.mxu0 0.0
    %1954 = vmatpush1.msra.mxu0 0.0
    %1955 = vmatprep.subr.mxu0 0.0
    %1956 = vmatpush1.msra.mxu0 0.0
    %1957 = vmatprep.subr.mxu0 0.0
    %1958 = vmatpush1.msra.mxu0 0.0
    %1959 = vmatprep.subr.mxu0 0.0
    %1960 = vmatpush1.msra.mxu0 0.0
    %1961 = vmatprep.subr.mxu0 0.0
    %1962 = vmatpush1.msra.mxu0 0.0
    %1963 = vmatprep.subr.mxu0 0.0
    %1964 = vmatpush1.msra.mxu0 0.0
    %1965 = vmatprep.subr.mxu0 0.0
    %1966 = vmatpush1.msra.mxu0 0.0
    %1967 = vmatprep.subr.mxu0 0.0
    %1968 = vmatpush1.msra.mxu0 0.0
    %1969 = vmatprep.subr.mxu0 0.0
    %1970 = vmatpush1.msra.mxu0 0.0
    %1971 = vmatprep.subr.mxu0 0.0
    %1972 = vmatpush1.msra.mxu0 0.0
    %1973 = vmatprep.subr.mxu0 0.0
    %1974 = vmatpush1.msra.mxu0 0.0
    %1975 = vmatprep.subr.mxu0 0.0
    %1976 = vmatpush1.msra.mxu0 0.0
    %1977 = vmatprep.subr.mxu0 0.0
    %1978 = vmatpush1.msra.mxu0 0.0
    %1979 = vmatprep.subr.mxu0 0.0
    %1980 = vmatpush1.msra.mxu0 0.0
    %1981 = vmatprep.subr.mxu0 0.0
    %1982 = vmatpush1.msra.mxu0 0.0
    %1983 = vmatprep.subr.mxu0 0.0
    %1984 = vmatpush1.msra.mxu0 0.0
    %1985 = vmatprep.subr.mxu0 0.0
    %1986 = vmatpush1.msra.mxu0 0.0
    %1987 = vmatprep.subr.mxu0 0.0
    %1988 = vmatpush1.msra.mxu0 0.0
    %1989 = vmatprep.subr.mxu0 0.0
    %1990 = vmatpush1.msra.mxu0 0.0
    %1991 = vmatprep.subr.mxu0 0.0
    %1992 = vmatpush1.msra.mxu0 0.0
    %1993 = vmatprep.subr.mxu0 0.0
    %1994 = vmatpush1.msra.mxu0 0.0
    %1995 = vmatprep.subr.mxu0 0.0
    %1996 = vmatpush1.msra.mxu0 0.0
    %1997 = vmatprep.subr.mxu0 0.0
    %1998 = vmatpush1.msra.mxu0 0.0
    %1999 = vmatprep.subr.mxu0 0.0
    %2000 = vmatpush1.msra.mxu0 0.0
    %2001 = vmatprep.subr.mxu0 0.0
    %2002 = vmatpush1.msra.mxu0 0.0
    %2003 = vmatprep.subr.mxu0 0.0
    %2004 = vmatpush1.msra.mxu0 0.0
    %2005 = vmatprep.subr.mxu0 0.0
    %2006 = vmatpush1.msra.mxu0 0.0
    %2007 = vmatprep.subr.mxu0 0.0
    %2008 = vmatpush1.msra.mxu0 0.0
    %2009 = vmatprep.mubr.f32.mxu0 0.0
    %2010 = vmatmul.mubr.f32.gmra.mrb[0].mxu0 %v1943
    %v2011 = vpop.f32.mrb[0].mxu0
    %v2012 = vadd.f32 %v523, %v2011
    %v2013 = vpop.f32.mrb[0].mxu0
    %2014 = vdwg.mxu0
    %2015 = vmatprep.subr.mxu0 0.0
    %2016 = vmatpush1.msra.mxu0 %v508
    %2017 = vmatprep.subr.mxu0 0.0
    %2018 = vmatpush1.msra.mxu0 %v509
    %2019 = vmatprep.subr.mxu0 0.0
    %2020 = vmatpush1.msra.mxu0 %v510
    %2021 = vmatprep.subr.mxu0 0.0
    %2022 = vmatpush1.msra.mxu0 %v511
    %2023 = vmatprep.subr.mxu0 0.0
    %2024 = vmatpush1.msra.mxu0 0.0
    %2025 = vmatprep.subr.mxu0 0.0
    %2026 = vmatpush1.msra.mxu0 0.0
    %2027 = vmatprep.subr.mxu0 0.0
    %2028 = vmatpush1.msra.mxu0 0.0
    %2029 = vmatprep.subr.mxu0 0.0
    %2030 = vmatpush1.msra.mxu0 0.0
    %2031 = vmatprep.subr.mxu0 0.0
    %2032 = vmatpush1.msra.mxu0 0.0
    %2033 = vmatprep.subr.mxu0 0.0
    %2034 = vmatpush1.msra.mxu0 0.0
    %2035 = vmatprep.subr.mxu0 0.0
    %2036 = vmatpush1.msra.mxu0 0.0
    %2037 = vmatprep.subr.mxu0 0.0
    %2038 = vmatpush1.msra.mxu0 0.0
    %2039 = vmatprep.subr.mxu0 0.0
    %2040 = vmatpush1.msra.mxu0 0.0
    %2041 = vmatprep.subr.mxu0 0.0
    %2042 = vmatpush1.msra.mxu0 0.0
    %2043 = vmatprep.subr.mxu0 0.0
    %2044 = vmatpush1.msra.mxu0 0.0
    %2045 = vmatprep.subr.mxu0 0.0
    %2046 = vmatpush1.msra.mxu0 0.0
    %2047 = vmatprep.subr.mxu0 0.0
    %2048 = vmatpush1.msra.mxu0 0.0
    %2049 = vmatprep.subr.mxu0 0.0
    %2050 = vmatpush1.msra.mxu0 0.0
    %2051 = vmatprep.subr.mxu0 0.0
    %2052 = vmatpush1.msra.mxu0 0.0
    %2053 = vmatprep.subr.mxu0 0.0
    %2054 = vmatpush1.msra.mxu0 0.0
    %2055 = vmatprep.subr.mxu0 0.0
    %2056 = vmatpush1.msra.mxu0 0.0
    %2057 = vmatprep.subr.mxu0 0.0
    %2058 = vmatpush1.msra.mxu0 0.0
    %2059 = vmatprep.subr.mxu0 0.0
    %2060 = vmatpush1.msra.mxu0 0.0
    %2061 = vmatprep.subr.mxu0 0.0
    %2062 = vmatpush1.msra.mxu0 0.0
    %2063 = vmatprep.subr.mxu0 0.0
    %2064 = vmatpush1.msra.mxu0 0.0
    %2065 = vmatprep.subr.mxu0 0.0
    %2066 = vmatpush1.msra.mxu0 0.0
    %2067 = vmatprep.subr.mxu0 0.0
    %2068 = vmatpush1.msra.mxu0 0.0
    %2069 = vmatprep.subr.mxu0 0.0
    %2070 = vmatpush1.msra.mxu0 0.0
    %2071 = vmatprep.subr.mxu0 0.0
    %2072 = vmatpush1.msra.mxu0 0.0
    %2073 = vmatprep.subr.mxu0 0.0
    %2074 = vmatpush1.msra.mxu0 0.0
    %2075 = vmatprep.subr.mxu0 0.0
    %2076 = vmatpush1.msra.mxu0 0.0
    %2077 = vmatprep.subr.mxu0 0.0
    %2078 = vmatpush1.msra.mxu0 0.0
    %2079 = vmatprep.mubr.f32.mxu0 0.0
    %2080 = vmatmul.mubr.f32.gmra.mrb[0].mxu0 %v1943
    %v2081 = vpop.f32.mrb[0].mxu0
    %v2082 = vadd.f32 %v603, %v2081
    %v2083 = vpop.f32.mrb[0].mxu0
    %2084 = vdwg.mxu0
    %2085 = vmatprep.subr.mxu0 0.0
    %2086 = vmatpush1.msra.mxu0 %v512
    %2087 = vmatprep.subr.mxu0 0.0
    %2088 = vmatpush1.msra.mxu0 %v513
    %2089 = vmatprep.subr.mxu0 0.0
    %2090 = vmatpush1.msra.mxu0 %v514
    %2091 = vmatprep.subr.mxu0 0.0
    %2092 = vmatpush1.msra.mxu0 %v515
    %2093 = vmatprep.subr.mxu0 0.0
    %2094 = vmatpush1.msra.mxu0 0.0
    %2095 = vmatprep.subr.mxu0 0.0
    %2096 = vmatpush1.msra.mxu0 0.0
    %2097 = vmatprep.subr.mxu0 0.0
    %2098 = vmatpush1.msra.mxu0 0.0
    %2099 = vmatprep.subr.mxu0 0.0
    %2100 = vmatpush1.msra.mxu0 0.0
    %2101 = vmatprep.subr.mxu0 0.0
    %2102 = vmatpush1.msra.mxu0 0.0
    %2103 = vmatprep.subr.mxu0 0.0
    %2104 = vmatpush1.msra.mxu0 0.0
    %2105 = vmatprep.subr.mxu0 0.0
    %2106 = vmatpush1.msra.mxu0 0.0
    %2107 = vmatprep.subr.mxu0 0.0
    %2108 = vmatpush1.msra.mxu0 0.0
    %2109 = vmatprep.subr.mxu0 0.0
    %2110 = vmatpush1.msra.mxu0 0.0
    %2111 = vmatprep.subr.mxu0 0.0
    %2112 = vmatpush1.msra.mxu0 0.0
    %2113 = vmatprep.subr.mxu0 0.0
    %2114 = vmatpush1.msra.mxu0 0.0
    %2115 = vmatprep.subr.mxu0 0.0
    %2116 = vmatpush1.msra.mxu0 0.0
    %2117 = vmatprep.subr.mxu0 0.0
    %2118 = vmatpush1.msra.mxu0 0.0
    %2119 = vmatprep.subr.mxu0 0.0
    %2120 = vmatpush1.msra.mxu0 0.0
    %2121 = vmatprep.subr.mxu0 0.0
    %2122 = vmatpush1.msra.mxu0 0.0
    %2123 = vmatprep.subr.mxu0 0.0
    %2124 = vmatpush1.msra.mxu0 0.0
    %2125 = vmatprep.subr.mxu0 0.0
    %2126 = vmatpush1.msra.mxu0 0.0
    %2127 = vmatprep.subr.mxu0 0.0
    %2128 = vmatpush1.msra.mxu0 0.0
    %2129 = vmatprep.subr.mxu0 0.0
    %2130 = vmatpush1.msra.mxu0 0.0
    %2131 = vmatprep.subr.mxu0 0.0
    %2132 = vmatpush1.msra.mxu0 0.0
    %2133 = vmatprep.subr.mxu0 0.0
    %2134 = vmatpush1.msra.mxu0 0.0
    %2135 = vmatprep.subr.mxu0 0.0
    %2136 = vmatpush1.msra.mxu0 0.0
    %2137 = vmatprep.subr.mxu0 0.0
    %2138 = vmatpush1.msra.mxu0 0.0
    %2139 = vmatprep.subr.mxu0 0.0
    %2140 = vmatpush1.msra.mxu0 0.0
    %2141 = vmatprep.subr.mxu0 0.0
    %2142 = vmatpush1.msra.mxu0 0.0
    %2143 = vmatprep.subr.mxu0 0.0
    %2144 = vmatpush1.msra.mxu0 0.0
    %2145 = vmatprep.subr.mxu0 0.0
    %2146 = vmatpush1.msra.mxu0 0.0
    %2147 = vmatprep.subr.mxu0 0.0
    %2148 = vmatpush1.msra.mxu0 0.0
    %2149 = vmatprep.mubr.f32.mxu0 0.0
    %2150 = vmatmul.mubr.f32.gmra.mrb[0].mxu0 %v1943
    %v2151 = vpop.f32.mrb[0].mxu0
    %v2152 = vadd.f32 %v679, %v2151
    %v2153 = vpop.f32.mrb[0].mxu0
    %2154 = vdwg.mxu0
    %v2155 = vadd.f32 %v268, %v2012
    %v2156 = vxor.u32 %v2155, 2147483648
    %v2157 = vmul.f32 %v2156, 1.442695
    %v2158 = vpow.pop %v2157
    %v2159 = vadd.f32 %v2158, 1.0
    %v2160 = vrcp.pop %v2159
    %v2161 = vmul.f32 1.0, %v2160
    %v2162 = vadd.f32 %v382, %v2082
    %v2163 = vxor.u32 %v2162, 2147483648
    %v2164 = vmul.f32 %v2163, 1.442695
    %v2165 = vpow.pop %v2164
    %v2166 = vadd.f32 %v2165, 1.0
    %v2167 = vrcp.pop %v2166
    %v2168 = vmul.f32 1.0, %v2167
    %v2169 = vmul.f32 %v2161, %v2152
    %v2170 = vadd.f32 %v496, %v2169
    %v2171 = vtanh.pop %v2170
    %v2172 = vsub.f32 1.0, %v2168
    %v2173 = vmul.f32 %v2172, %v2171
    %v2174 = vmul.f32 %v2168, %v1941
    %v2175 = vadd.f32 %v2173, %v2174
    %v2177 = vsel %vm525, %v2175, 0
    %2179 = vmatprep.subr.mxu0 0.0
    %2180 = vmatpush1.msra.mxu0 %v504
    %2181 = vmatprep.subr.mxu0 0.0
    %2182 = vmatpush1.msra.mxu0 %v505
    %2183 = vmatprep.subr.mxu0 0.0
    %2184 = vmatpush1.msra.mxu0 %v506
    %2185 = vmatprep.subr.mxu0 0.0
    %2186 = vmatpush1.msra.mxu0 %v507
    %2187 = vmatprep.subr.mxu0 0.0
    %2188 = vmatpush1.msra.mxu0 0.0
    %2189 = vmatprep.subr.mxu0 0.0
    %2190 = vmatpush1.msra.mxu0 0.0
    %2191 = vmatprep.subr.mxu0 0.0
    %2192 = vmatpush1.msra.mxu0 0.0
    %2193 = vmatprep.subr.mxu0 0.0
    %2194 = vmatpush1.msra.mxu0 0.0
    %2195 = vmatprep.subr.mxu0 0.0
    %2196 = vmatpush1.msra.mxu0 0.0
    %2197 = vmatprep.subr.mxu0 0.0
    %2198 = vmatpush1.msra.mxu0 0.0
    %2199 = vmatprep.subr.mxu0 0.0
    %2200 = vmatpush1.msra.mxu0 0.0
    %2201 = vmatprep.subr.mxu0 0.0
    %2202 = vmatpush1.msra.mxu0 0.0
    %2203 = vmatprep.subr.mxu0 0.0
    %2204 = vmatpush1.msra.mxu0 0.0
    %2205 = vmatprep.subr.mxu0 0.0
    %2206 = vmatpush1.msra.mxu0 0.0
    %2207 = vmatprep.subr.mxu0 0.0
    %2208 = vmatpush1.msra.mxu0 0.0
    %2209 = vmatprep.subr.mxu0 0.0
    %2210 = vmatpush1.msra.mxu0 0.0
    %2211 = vmatprep.subr.mxu0 0.0
    %2212 = vmatpush1.msra.mxu0 0.0
    %2213 = vmatprep.subr.mxu0 0.0
    %2214 = vmatpush1.msra.mxu0 0.0
    %2215 = vmatprep.subr.mxu0 0.0
    %2216 = vmatpush1.msra.mxu0 0.0
    %2217 = vmatprep.subr.mxu0 0.0
    %2218 = vmatpush1.msra.mxu0 0.0
    %2219 = vmatprep.subr.mxu0 0.0
    %2220 = vmatpush1.msra.mxu0 0.0
    %2221 = vmatprep.subr.mxu0 0.0
    %2222 = vmatpush1.msra.mxu0 0.0
    %2223 = vmatprep.subr.mxu0 0.0
    %2224 = vmatpush1.msra.mxu0 0.0
    %2225 = vmatprep.subr.mxu0 0.0
    %2226 = vmatpush1.msra.mxu0 0.0
    %2227 = vmatprep.subr.mxu0 0.0
    %2228 = vmatpush1.msra.mxu0 0.0
    %2229 = vmatprep.subr.mxu0 0.0
    %2230 = vmatpush1.msra.mxu0 0.0
    %2231 = vmatprep.subr.mxu0 0.0
    %2232 = vmatpush1.msra.mxu0 0.0
    %2233 = vmatprep.subr.mxu0 0.0
    %2234 = vmatpush1.msra.mxu0 0.0
    %2235 = vmatprep.subr.mxu0 0.0
    %2236 = vmatpush1.msra.mxu0 0.0
    %2237 = vmatprep.subr.mxu0 0.0
    %2238 = vmatpush1.msra.mxu0 0.0
    %2239 = vmatprep.subr.mxu0 0.0
    %2240 = vmatpush1.msra.mxu0 0.0
    %2241 = vmatprep.subr.mxu0 0.0
    %2242 = vmatpush1.msra.mxu0 0.0
    %2243 = vmatprep.mubr.f32.mxu0 0.0
    %2244 = vmatmul.mubr.f32.gmra.mrb[0].mxu0 %v2177
    %v2245 = vpop.f32.mrb[0].mxu0
    %v2246 = vadd.f32 %v523, %v2245
    %v2247 = vpop.f32.mrb[0].mxu0
    %2248 = vdwg.mxu0
    %2249 = vmatprep.subr.mxu0 0.0
    %2250 = vmatpush1.msra.mxu0 %v508
    %2251 = vmatprep.subr.mxu0 0.0
    %2252 = vmatpush1.msra.mxu0 %v509
    %2253 = vmatprep.subr.mxu0 0.0
    %2254 = vmatpush1.msra.mxu0 %v510
    %2255 = vmatprep.subr.mxu0 0.0
    %2256 = vmatpush1.msra.mxu0 %v511
    %2257 = vmatprep.subr.mxu0 0.0
    %2258 = vmatpush1.msra.mxu0 0.0
    %2259 = vmatprep.subr.mxu0 0.0
    %2260 = vmatpush1.msra.mxu0 0.0
    %2261 = vmatprep.subr.mxu0 0.0
    %2262 = vmatpush1.msra.mxu0 0.0
    %2263 = vmatprep.subr.mxu0 0.0
    %2264 = vmatpush1.msra.mxu0 0.0
    %2265 = vmatprep.subr.mxu0 0.0
    %2266 = vmatpush1.msra.mxu0 0.0
    %2267 = vmatprep.subr.mxu0 0.0
    %2268 = vmatpush1.msra.mxu0 0.0
    %2269 = vmatprep.subr.mxu0 0.0
    %2270 = vmatpush1.msra.mxu0 0.0
    %2271 = vmatprep.subr.mxu0 0.0
    %2272 = vmatpush1.msra.mxu0 0.0
    %2273 = vmatprep.subr.mxu0 0.0
    %2274 = vmatpush1.msra.mxu0 0.0
    %2275 = vmatprep.subr.mxu0 0.0
    %2276 = vmatpush1.msra.mxu0 0.0
    %2277 = vmatprep.subr.mxu0 0.0
    %2278 = vmatpush1.msra.mxu0 0.0
    %2279 = vmatprep.subr.mxu0 0.0
    %2280 = vmatpush1.msra.mxu0 0.0
    %2281 = vmatprep.subr.mxu0 0.0
    %2282 = vmatpush1.msra.mxu0 0.0
    %2283 = vmatprep.subr.mxu0 0.0
    %2284 = vmatpush1.msra.mxu0 0.0
    %2285 = vmatprep.subr.mxu0 0.0
    %2286 = vmatpush1.msra.mxu0 0.0
    %2287 = vmatprep.subr.mxu0 0.0
    %2288 = vmatpush1.msra.mxu0 0.0
    %2289 = vmatprep.subr.mxu0 0.0
    %2290 = vmatpush1.msra.mxu0 0.0
    %2291 = vmatprep.subr.mxu0 0.0
    %2292 = vmatpush1.msra.mxu0 0.0
    %2293 = vmatprep.subr.mxu0 0.0
    %2294 = vmatpush1.msra.mxu0 0.0
    %2295 = vmatprep.subr.mxu0 0.0
    %2296 = vmatpush1.msra.mxu0 0.0
    %2297 = vmatprep.subr.mxu0 0.0
    %2298 = vmatpush1.msra.mxu0 0.0
    %2299 = vmatprep.subr.mxu0 0.0
    %2300 = vmatpush1.msra.mxu0 0.0
    %2301 = vmatprep.subr.mxu0 0.0
    %2302 = vmatpush1.msra.mxu0 0.0
    %2303 = vmatprep.subr.mxu0 0.0
    %2304 = vmatpush1.msra.mxu0 0.0
    %2305 = vmatprep.subr.mxu0 0.0
    %2306 = vmatpush1.msra.mxu0 0.0
    %2307 = vmatprep.subr.mxu0 0.0
    %2308 = vmatpush1.msra.mxu0 0.0
    %2309 = vmatprep.subr.mxu0 0.0
    %2310 = vmatpush1.msra.mxu0 0.0
    %2311 = vmatprep.subr.mxu0 0.0
    %2312 = vmatpush1.msra.mxu0 0.0
    %2313 = vmatprep.mubr.f32.mxu0 0.0
    %2314 = vmatmul.mubr.f32.gmra.mrb[0].mxu0 %v2177
    %v2315 = vpop.f32.mrb[0].mxu0
    %v2316 = vadd.f32 %v603, %v2315
    %v2317 = vpop.f32.mrb[0].mxu0
    %2318 = vdwg.mxu0
    %2319 = vmatprep.subr.mxu0 0.0
    %2320 = vmatpush1.msra.mxu0 %v512
    %2321 = vmatprep.subr.mxu0 0.0
    %2322 = vmatpush1.msra.mxu0 %v513
    %2323 = vmatprep.subr.mxu0 0.0
    %2324 = vmatpush1.msra.mxu0 %v514
    %2325 = vmatprep.subr.mxu0 0.0
    %2326 = vmatpush1.msra.mxu0 %v515
    %2327 = vmatprep.subr.mxu0 0.0
    %2328 = vmatpush1.msra.mxu0 0.0
    %2329 = vmatprep.subr.mxu0 0.0
    %2330 = vmatpush1.msra.mxu0 0.0
    %2331 = vmatprep.subr.mxu0 0.0
    %2332 = vmatpush1.msra.mxu0 0.0
    %2333 = vmatprep.subr.mxu0 0.0
    %2334 = vmatpush1.msra.mxu0 0.0
    %2335 = vmatprep.subr.mxu0 0.0
    %2336 = vmatpush1.msra.mxu0 0.0
    %2337 = vmatprep.subr.mxu0 0.0
    %2338 = vmatpush1.msra.mxu0 0.0
    %2339 = vmatprep.subr.mxu0 0.0
    %2340 = vmatpush1.msra.mxu0 0.0
    %2341 = vmatprep.subr.mxu0 0.0
    %2342 = vmatpush1.msra.mxu0 0.0
    %2343 = vmatprep.subr.mxu0 0.0
    %2344 = vmatpush1.msra.mxu0 0.0
    %2345 = vmatprep.subr.mxu0 0.0
    %2346 = vmatpush1.msra.mxu0 0.0
    %2347 = vmatprep.subr.mxu0 0.0
    %2348 = vmatpush1.msra.mxu0 0.0
    %2349 = vmatprep.subr.mxu0 0.0
    %2350 = vmatpush1.msra.mxu0 0.0
    %2351 = vmatprep.subr.mxu0 0.0
    %2352 = vmatpush1.msra.mxu0 0.0
    %2353 = vmatprep.subr.mxu0 0.0
    %2354 = vmatpush1.msra.mxu0 0.0
    %2355 = vmatprep.subr.mxu0 0.0
    %2356 = vmatpush1.msra.mxu0 0.0
    %2357 = vmatprep.subr.mxu0 0.0
    %2358 = vmatpush1.msra.mxu0 0.0
    %2359 = vmatprep.subr.mxu0 0.0
    %2360 = vmatpush1.msra.mxu0 0.0
    %2361 = vmatprep.subr.mxu0 0.0
    %2362 = vmatpush1.msra.mxu0 0.0
    %2363 = vmatprep.subr.mxu0 0.0
    %2364 = vmatpush1.msra.mxu0 0.0
    %2365 = vmatprep.subr.mxu0 0.0
    %2366 = vmatpush1.msra.mxu0 0.0
    %2367 = vmatprep.subr.mxu0 0.0
    %2368 = vmatpush1.msra.mxu0 0.0
    %2369 = vmatprep.subr.mxu0 0.0
    %2370 = vmatpush1.msra.mxu0 0.0
    %2371 = vmatprep.subr.mxu0 0.0
    %2372 = vmatpush1.msra.mxu0 0.0
    %2373 = vmatprep.subr.mxu0 0.0
    %2374 = vmatpush1.msra.mxu0 0.0
    %2375 = vmatprep.subr.mxu0 0.0
    %2376 = vmatpush1.msra.mxu0 0.0
    %2377 = vmatprep.subr.mxu0 0.0
    %2378 = vmatpush1.msra.mxu0 0.0
    %2379 = vmatprep.subr.mxu0 0.0
    %2380 = vmatpush1.msra.mxu0 0.0
    %2381 = vmatprep.subr.mxu0 0.0
    %2382 = vmatpush1.msra.mxu0 0.0
    %2383 = vmatprep.mubr.f32.mxu0 0.0
    %2384 = vmatmul.mubr.f32.gmra.mrb[0].mxu0 %v2177
    %v2385 = vpop.f32.mrb[0].mxu0
    %v2386 = vadd.f32 %v679, %v2385
    %v2387 = vpop.f32.mrb[0].mxu0
    %2388 = vdwg.mxu0
    %v2389 = vadd.f32 %v273, %v2246
    %v2390 = vxor.u32 %v2389, 2147483648
    %v2391 = vmul.f32 %v2390, 1.442695
    %v2392 = vpow.pop %v2391
    %v2393 = vadd.f32 %v2392, 1.0
    %v2394 = vrcp.pop %v2393
    %v2395 = vmul.f32 1.0, %v2394
    %v2396 = vadd.f32 %v387, %v2316
    %v2397 = vxor.u32 %v2396, 2147483648
    %v2398 = vmul.f32 %v2397, 1.442695
    %v2399 = vpow.pop %v2398
    %v2400 = vadd.f32 %v2399, 1.0
    %v2401 = vrcp.pop %v2400
    %v2402 = vmul.f32 1.0, %v2401
    %v2403 = vmul.f32 %v2395, %v2386
    %v2404 = vadd.f32 %v501, %v2403
    %v2405 = vtanh.pop %v2404
    %v2406 = vsub.f32 1.0, %v2402
    %v2407 = vmul.f32 %v2406, %v2405
    %v2408 = vmul.f32 %v2402, %v2175
    %v2409 = vadd.f32 %v2407, %v2408
    %v2410 = vld [vmem:[#allocation10] sm:$0xff]
    %v2411 = vld [vmem:[#allocation10 + $0x8] sm:$0xff]
    %v2412 = vld [vmem:[#allocation10 + $0x10] sm:$0xff]
    %v2413 = vld [vmem:[#allocation10 + $0x18] sm:$0xff]
    %v2414 = vld [vmem:[%s14] sm:$0x1]
    %v2416 = vlaneseq
    %v2417 = vshrl.u32 %v2416, 7
    %v2418 = vsub.s32 0, %v2417
    %v2419 = vrot.slane %v2414, %v2418
    %v2422 = vsel %vm525, %v2409, 0
    %2424 = vmatprep.subr.mxu0 0.0
    %2425 = vmatpush1.msra.mxu0 %v2410
    %2426 = vmatprep.subr.mxu0 0.0
    %2427 = vmatpush1.msra.mxu0 %v2411
    %2428 = vmatprep.subr.mxu0 0.0
    %2429 = vmatpush1.msra.mxu0 %v2412
    %2430 = vmatprep.subr.mxu0 0.0
    %2431 = vmatpush1.msra.mxu0 %v2413
    %2432 = vmatprep.subr.mxu0 0.0
    %2433 = vmatpush1.msra.mxu0 0.0
    %2434 = vmatprep.subr.mxu0 0.0
    %2435 = vmatpush1.msra.mxu0 0.0
    %2436 = vmatprep.subr.mxu0 0.0
    %2437 = vmatpush1.msra.mxu0 0.0
    %2438 = vmatprep.subr.mxu0 0.0
    %2439 = vmatpush1.msra.mxu0 0.0
    %2440 = vmatprep.subr.mxu0 0.0
    %2441 = vmatpush1.msra.mxu0 0.0
    %2442 = vmatprep.subr.mxu0 0.0
    %2443 = vmatpush1.msra.mxu0 0.0
    %2444 = vmatprep.subr.mxu0 0.0
    %2445 = vmatpush1.msra.mxu0 0.0
    %2446 = vmatprep.subr.mxu0 0.0
    %2447 = vmatpush1.msra.mxu0 0.0
    %2448 = vmatprep.subr.mxu0 0.0
    %2449 = vmatpush1.msra.mxu0 0.0
    %2450 = vmatprep.subr.mxu0 0.0
    %2451 = vmatpush1.msra.mxu0 0.0
    %2452 = vmatprep.subr.mxu0 0.0
    %2453 = vmatpush1.msra.mxu0 0.0
    %2454 = vmatprep.subr.mxu0 0.0
    %2455 = vmatpush1.msra.mxu0 0.0
    %2456 = vmatprep.subr.mxu0 0.0
    %2457 = vmatpush1.msra.mxu0 0.0
    %2458 = vmatprep.subr.mxu0 0.0
    %2459 = vmatpush1.msra.mxu0 0.0
    %2460 = vmatprep.subr.mxu0 0.0
    %2461 = vmatpush1.msra.mxu0 0.0
    %2462 = vmatprep.subr.mxu0 0.0
    %2463 = vmatpush1.msra.mxu0 0.0
    %2464 = vmatprep.subr.mxu0 0.0
    %2465 = vmatpush1.msra.mxu0 0.0
    %2466 = vmatprep.subr.mxu0 0.0
    %2467 = vmatpush1.msra.mxu0 0.0
    %2468 = vmatprep.subr.mxu0 0.0
    %2469 = vmatpush1.msra.mxu0 0.0
    %2470 = vmatprep.subr.mxu0 0.0
    %2471 = vmatpush1.msra.mxu0 0.0
    %2472 = vmatprep.subr.mxu0 0.0
    %2473 = vmatpush1.msra.mxu0 0.0
    %2474 = vmatprep.subr.mxu0 0.0
    %2475 = vmatpush1.msra.mxu0 0.0
    %2476 = vmatprep.subr.mxu0 0.0
    %2477 = vmatpush1.msra.mxu0 0.0
    %2478 = vmatprep.subr.mxu0 0.0
    %2479 = vmatpush1.msra.mxu0 0.0
    %2480 = vmatprep.subr.mxu0 0.0
    %2481 = vmatpush1.msra.mxu0 0.0
    %2482 = vmatprep.subr.mxu0 0.0
    %2483 = vmatpush1.msra.mxu0 0.0
    %2484 = vmatprep.subr.mxu0 0.0
    %2485 = vmatpush1.msra.mxu0 0.0
    %2486 = vmatprep.subr.mxu0 0.0
    %2487 = vmatpush1.msra.mxu0 0.0
    %2488 = vmatprep.mubr.f32.mxu0 0.0
    %2489 = vmatmul.mubr.f32.gmra.mrb[0].mxu0 %v2422
    %v2490 = vpop.f32.mrb[0].mxu0
    %v2491 = vadd.f32 %v2419, %v2490
    %v2492 = vpop.f32.mrb[0].mxu0
    %2493 = vdwg.mxu0
    %v2494 = vld [vmem:[%s15] sm:$0xff]
    %v2495 = vld [vmem:[%s15 + $0x8] sm:$0xff]
    %v2496 = vld [vmem:[%s15 + $0x10] sm:$0xff]
    %v2497 = vld [vmem:[%s15 + $0x18] sm:$0xff]
    %v2498 = vld [vmem:[%s15 + $0x20] sm:$0xff]
    %v2499 = vld [vmem:[%s15 + $0x28] sm:$0xff]
    %v2500 = vld [vmem:[%s15 + $0x30] sm:$0xff]
    %v2501 = vld [vmem:[%s15 + $0x38] sm:$0xff]
    %v2502 = vld [vmem:[%s15 + $0x40] sm:$0xff]
    %v2503 = vld [vmem:[%s15 + $0x48] sm:$0xff]
    %v2504 = vld [vmem:[%s15 + $0x50] sm:$0xff]
    %v2505 = vld [vmem:[%s15 + $0x58] sm:$0xff]
    %v2506 = vld [vmem:[%s15 + $0x60] sm:$0xff]
    %v2507 = vld [vmem:[%s15 + $0x68] sm:$0xff]
    %v2508 = vld [vmem:[%s15 + $0x70] sm:$0xff]
    %v2509 = vld [vmem:[%s15 + $0x78] sm:$0xff]
    %v2510 = vld [vmem:[%s16] sm:$0x1]
    %v2512 = vlaneseq
    %v2513 = vshrl.u32 %v2512, 7
    %v2514 = vsub.s32 0, %v2513
    %v2515 = vrot.slane %v2510, %v2514
    %2517 = vmatprep.subr.mxu0 0.0
    %2518 = vmatpush1.msra.mxu0 %v2494
    %2519 = vmatprep.subr.mxu0 0.0
    %2520 = vmatpush1.msra.mxu0 %v2495
    %2521 = vmatprep.subr.mxu0 0.0
    %2522 = vmatpush1.msra.mxu0 %v2496
    %2523 = vmatprep.subr.mxu0 0.0
    %2524 = vmatpush1.msra.mxu0 %v2497
    %2525 = vmatprep.subr.mxu0 0.0
    %2526 = vmatpush1.msra.mxu0 %v2498
    %2527 = vmatprep.subr.mxu0 0.0
    %2528 = vmatpush1.msra.mxu0 %v2499
    %2529 = vmatprep.subr.mxu0 0.0
    %2530 = vmatpush1.msra.mxu0 %v2500
    %2531 = vmatprep.subr.mxu0 0.0
    %2532 = vmatpush1.msra.mxu0 %v2501
    %2533 = vmatprep.subr.mxu0 0.0
    %2534 = vmatpush1.msra.mxu0 %v2502
    %2535 = vmatprep.subr.mxu0 0.0
    %2536 = vmatpush1.msra.mxu0 %v2503
    %2537 = vmatprep.subr.mxu0 0.0
    %2538 = vmatpush1.msra.mxu0 %v2504
    %2539 = vmatprep.subr.mxu0 0.0
    %2540 = vmatpush1.msra.mxu0 %v2505
    %2541 = vmatprep.subr.mxu0 0.0
    %2542 = vmatpush1.msra.mxu0 %v2506
    %2543 = vmatprep.subr.mxu0 0.0
    %2544 = vmatpush1.msra.mxu0 %v2507
    %2545 = vmatprep.subr.mxu0 0.0
    %2546 = vmatpush1.msra.mxu0 %v2508
    %2547 = vmatprep.subr.mxu0 0.0
    %2548 = vmatpush1.msra.mxu0 %v2509
    %2549 = vmatprep.subr.mxu0 0.0
    %2550 = vmatpush1.msra.mxu0 0.0
    %2551 = vmatprep.subr.mxu0 0.0
    %2552 = vmatpush1.msra.mxu0 0.0
    %2553 = vmatprep.subr.mxu0 0.0
    %2554 = vmatpush1.msra.mxu0 0.0
    %2555 = vmatprep.subr.mxu0 0.0
    %2556 = vmatpush1.msra.mxu0 0.0
    %2557 = vmatprep.subr.mxu0 0.0
    %2558 = vmatpush1.msra.mxu0 0.0
    %2559 = vmatprep.subr.mxu0 0.0
    %2560 = vmatpush1.msra.mxu0 0.0
    %2561 = vmatprep.subr.mxu0 0.0
    %2562 = vmatpush1.msra.mxu0 0.0
    %2563 = vmatprep.subr.mxu0 0.0
    %2564 = vmatpush1.msra.mxu0 0.0
    %2565 = vmatprep.subr.mxu0 0.0
    %2566 = vmatpush1.msra.mxu0 0.0
    %2567 = vmatprep.subr.mxu0 0.0
    %2568 = vmatpush1.msra.mxu0 0.0
    %2569 = vmatprep.subr.mxu0 0.0
    %2570 = vmatpush1.msra.mxu0 0.0
    %2571 = vmatprep.subr.mxu0 0.0
    %2572 = vmatpush1.msra.mxu0 0.0
    %2573 = vmatprep.subr.mxu0 0.0
    %2574 = vmatpush1.msra.mxu0 0.0
    %2575 = vmatprep.subr.mxu0 0.0
    %2576 = vmatpush1.msra.mxu0 0.0
    %2577 = vmatprep.subr.mxu0 0.0
    %2578 = vmatpush1.msra.mxu0 0.0
    %2579 = vmatprep.subr.mxu0 0.0
    %2580 = vmatpush1.msra.mxu0 0.0
    %2581 = vmatprep.mubr.f32.mxu0 0.0
    %2582 = vmatmul.mubr.f32.gmra.mrb[0].mxu0 %v2491
    %v2583 = vpop.f32.mrb[0].mxu0
    %v2584 = vadd.f32 %v2515, %v2583
    %v2585 = vpop.f32.mrb[0].mxu0
    %2586 = vdwg.mxu0
    %v2587 = vld [vmem:[%s17] sm:$0xff]
    %v2588 = vld [vmem:[%s17 + $0x8] sm:$0xff]
    %v2589 = vld [vmem:[%s17 + $0x10] sm:$0xff]
    %v2590 = vld [vmem:[%s17 + $0x18] sm:$0xff]
    %v2591 = vld [vmem:[%s17 + $0x20] sm:$0xff]
    %v2592 = vld [vmem:[%s17 + $0x28] sm:$0xff]
    %v2593 = vld [vmem:[%s17 + $0x30] sm:$0xff]
    %v2594 = vld [vmem:[%s17 + $0x38] sm:$0xff]
    %v2595 = vld [vmem:[%s18] sm:$0x1]
    %v2597 = vlaneseq
    %v2598 = vshrl.u32 %v2597, 7
    %v2599 = vsub.s32 0, %v2598
    %v2600 = vrot.slane %v2595, %v2599
    %vm2602 = vcmask 523264
    %v2604 = vsel %vm2602, %v2584, 0
    %2606 = vmatprep.subr.mxu0 0.0
    %2607 = vmatpush1.msra.mxu0 %v2587
    %2608 = vmatprep.subr.mxu0 0.0
    %2609 = vmatpush1.msra.mxu0 %v2588
    %2610 = vmatprep.subr.mxu0 0.0
    %2611 = vmatpush1.msra.mxu0 %v2589
    %2612 = vmatprep.subr.mxu0 0.0
    %2613 = vmatpush1.msra.mxu0 %v2590
    %2614 = vmatprep.subr.mxu0 0.0
    %2615 = vmatpush1.msra.mxu0 %v2591
    %2616 = vmatprep.subr.mxu0 0.0
    %2617 = vmatpush1.msra.mxu0 %v2592
    %2618 = vmatprep.subr.mxu0 0.0
    %2619 = vmatpush1.msra.mxu0 %v2593
    %2620 = vmatprep.subr.mxu0 0.0
    %2621 = vmatpush1.msra.mxu0 %v2594
    %2622 = vmatprep.subr.mxu0 0.0
    %2623 = vmatpush1.msra.mxu0 0.0
    %2624 = vmatprep.subr.mxu0 0.0
    %2625 = vmatpush1.msra.mxu0 0.0
    %2626 = vmatprep.subr.mxu0 0.0
    %2627 = vmatpush1.msra.mxu0 0.0
    %2628 = vmatprep.subr.mxu0 0.0
    %2629 = vmatpush1.msra.mxu0 0.0
    %2630 = vmatprep.subr.mxu0 0.0
    %2631 = vmatpush1.msra.mxu0 0.0
    %2632 = vmatprep.subr.mxu0 0.0
    %2633 = vmatpush1.msra.mxu0 0.0
    %2634 = vmatprep.subr.mxu0 0.0
    %2635 = vmatpush1.msra.mxu0 0.0
    %2636 = vmatprep.subr.mxu0 0.0
    %2637 = vmatpush1.msra.mxu0 0.0
    %2638 = vmatprep.subr.mxu0 0.0
    %2639 = vmatpush1.msra.mxu0 0.0
    %2640 = vmatprep.subr.mxu0 0.0
    %2641 = vmatpush1.msra.mxu0 0.0
    %2642 = vmatprep.subr.mxu0 0.0
    %2643 = vmatpush1.msra.mxu0 0.0
    %2644 = vmatprep.subr.mxu0 0.0
    %2645 = vmatpush1.msra.mxu0 0.0
    %2646 = vmatprep.subr.mxu0 0.0
    %2647 = vmatpush1.msra.mxu0 0.0
    %2648 = vmatprep.subr.mxu0 0.0
    %2649 = vmatpush1.msra.mxu0 0.0
    %2650 = vmatprep.subr.mxu0 0.0
    %2651 = vmatpush1.msra.mxu0 0.0
    %2652 = vmatprep.subr.mxu0 0.0
    %2653 = vmatpush1.msra.mxu0 0.0
    %2654 = vmatprep.subr.mxu0 0.0
    %2655 = vmatpush1.msra.mxu0 0.0
    %2656 = vmatprep.subr.mxu0 0.0
    %2657 = vmatpush1.msra.mxu0 0.0
    %2658 = vmatprep.subr.mxu0 0.0
    %2659 = vmatpush1.msra.mxu0 0.0
    %2660 = vmatprep.subr.mxu0 0.0
    %2661 = vmatpush1.msra.mxu0 0.0
    %2662 = vmatprep.subr.mxu0 0.0
    %2663 = vmatpush1.msra.mxu0 0.0
    %2664 = vmatprep.subr.mxu0 0.0
    %2665 = vmatpush1.msra.mxu0 0.0
    %2666 = vmatprep.subr.mxu0 0.0
    %2667 = vmatpush1.msra.mxu0 0.0
    %2668 = vmatprep.subr.mxu0 0.0
    %2669 = vmatpush1.msra.mxu0 0.0
    %2670 = vmatprep.mubr.f32.mxu0 0.0
    %2671 = vmatmul.mubr.f32.gmra.mrb[0].mxu0 %v2604
    %v2672 = vpop.f32.mrb[0].mxu0
    %v2673 = vadd.f32 %v2600, %v2672
    %v2674 = vpop.f32.mrb[0].mxu0
    %2675 = vdwg.mxu0
    %2676 = vst [vmem:[#allocation11] sm:$0xff] %v2673
    // Predicated region
    $region98: #{tpu_custom_call.1} parent=1 // pred_check
      _
    $region99: #{tpu_custom_call.1} parent=1 // pred_check_branch
      %2678 = sbr.rel (0) target = $region101
    $region100: #{tpu_custom_call.1} parent=1 // pred_region
      %s2680 = ssub.s32 128, 128
      %2681 = vsyncadd [#allocation4], %s2680
      %s2683 = sshll.u32 [#allocation11], 4
      %s2684 = int_to_ptr.vmem [resolvable:$true] %s2683
      %2686 = dma.vmem_to_hbm [thread:$0]  %s2684, 128, %s19, [#allocation4]
    $region101: #{tpu_custom_call.1} parent=1 // pred_fallthru
      _
    // Predicated region
    $region102: #{tpu_custom_call.1} parent=1 // pred_check
      _
    $region103: #{tpu_custom_call.1} parent=1 // pred_check_branch
      %2688 = sbr.rel (0) target = $region105
    $region104: #{tpu_custom_call.1} parent=1 // pred_region
      %2689 = dma.done [#allocation4], 128
    $region105: #{tpu_custom_call.1} parent=1 // pred_fallthru
      _
    %2690 = vsyncpa [#allocation3], 1
    %2691 = vsyncpa [#allocation6], 1
    %2692 = vsyncpa [#allocation9], 1
    %2693 = vsyncpa [#allocation4], 1

</llo_original>
